<compile_context>
chip_gen: v6e
topology: v6e:2x2x1
jax: 0.10.0
libtpu: 0.0.40
codegen_flags: <defaults>
</compile_context>

<pallas_src>
import math

import jax
import jax.numpy as jnp
from jax import lax
from jax.experimental import pallas as pl
from jax.experimental.pallas import tpu as pltpu

# ---------------- config (small synthetic DeBERTa-v2-ish backbone) ----------
VOCAB = 128
MAX_POS = 16
TYPE_VOCAB = 2
HIDDEN = 32
HEADS = 4
HEAD_DIM = HIDDEN // HEADS
INTERMEDIATE = 64
LAYERS = 2
NUM_LABELS = 3
NUM_BINS = 10          # stored on the module, unused in forward
LN_EPS = 1e-7          # DeBERTa-v2 LayerNorm eps


def _gelu(x):
    # tanh-approx gelu (kernel friendly; HF default is erf-gelu)
    c = math.sqrt(2.0 / math.pi)
    return 0.5 * x * (1.0 + jnp.tanh(c * (x + 0.044715 * x * x * x)))


def _ln_rows(x, g, b):
    mu = jnp.mean(x, axis=-1, keepdims=True)
    var = jnp.mean(jnp.square(x - mu), axis=-1, keepdims=True)
    return (x - mu) * lax.rsqrt(var + LN_EPS) * g + b


# ====================== single fused Pallas kernel ===========================
def _deberta_fused_kernel(
    emb_ref, mask_ref, bias_ref, eg_ref, eb_ref,
    qkv_w_ref, qkv_b_ref, o_w_ref, o_b_ref, ln1_g_ref, ln1_b_ref,
    i_w_ref, i_b_ref, f_w_ref, f_b_ref, ln2_g_ref, ln2_b_ref,
    pool_w_ref, pool_b_ref, cls_w_ref, cls_b_ref,
    logits_ref, sig_ref,
):
    # --- embeddings: LayerNorm + padding-mask zeroing ------------------------
    x = emb_ref[0].astype(jnp.float32)                       # (S, H)
    x = _ln_rows(x, eg_ref[...], eb_ref[...])
    x = x * mask_ref[0]                                       # (S, 1) keep-mask
    bias = bias_ref[0]                                        # (1, S) additive
    scale = 1.0 / math.sqrt(HEAD_DIM)

    # --- encoder layers (statically unrolled, weights VMEM-resident) ---------
    for l in range(LAYERS):
        qkv = jnp.dot(x, qkv_w_ref[l],
                      preferred_element_type=jnp.float32) + qkv_b_ref[l]  # (S, 3H)
        o_w_l = o_w_ref[l]                                     # (H, H)
        attn_out = jnp.zeros_like(x)                           # (S, H) f32
        for h in range(HEADS):
            lo = h * HEAD_DIM
            qh = qkv[:, lo:lo + HEAD_DIM]                      # (S, Dh)
            kh = qkv[:, HIDDEN + lo:HIDDEN + lo + HEAD_DIM]    # (S, Dh)
            vh = qkv[:, 2 * HIDDEN + lo:2 * HIDDEN + lo + HEAD_DIM]
            s = jnp.dot(qh, kh.T,
                        preferred_element_type=jnp.float32) * scale + bias
            s = s - jnp.max(s, axis=-1, keepdims=True)
            p = jnp.exp(s)
            p = p * pl.reciprocal(jnp.sum(p, axis=-1, keepdims=True), approx=True)
            ctx_h = jnp.dot(p, vh, preferred_element_type=jnp.float32)  # (S, Dh)
            # output projection fused into the head loop (o_w row-slice)
            attn_out = attn_out + jnp.dot(
                ctx_h, o_w_l[lo:lo + HEAD_DIM, :],
                preferred_element_type=jnp.float32)
        attn_out = attn_out + o_b_ref[l]

        x = _ln_rows(attn_out + x, ln1_g_ref[l], ln1_b_ref[l])

        inter = _gelu(jnp.dot(x, i_w_ref[l],
                              preferred_element_type=jnp.float32) + i_b_ref[l])
        ff = jnp.dot(inter, f_w_ref[l],
                     preferred_element_type=jnp.float32) + f_b_ref[l]
        x = _ln_rows(ff + x, ln2_g_ref[l], ln2_b_ref[l])

    # --- ContextPooler (first token -> dense -> gelu) + classifier + sigmoid -
    cls_tok = x[0:1, :]                                        # (1, H)
    pooled = _gelu(jnp.dot(cls_tok, pool_w_ref[...],
                           preferred_element_type=jnp.float32) + pool_b_ref[...])
    logits = jnp.dot(pooled, cls_w_ref[...],
                     preferred_element_type=jnp.float32) + cls_b_ref[...]  # (1, L)
    logits_ref[0] = logits.astype(logits_ref.dtype)
    sig_ref[0] = (1.0 / (1.0 + jnp.exp(-logits))).astype(sig_ref.dtype)


def deberta_backbone_pallas(params, emb, mask_keep, attn_bias):
    """One fused pallas_call for the whole backbone. Returns (logits, sigmoid)."""
    B, S, _ = emb.shape
    rep = lambda b: (0, 0)          # replicated 2-D weight block
    rep3 = lambda b: (0, 0, 0)      # replicated 3-D (layer-stacked) weight block
    per_b = lambda b: (b, 0, 0)     # per-batch activation block

    grid_spec = pltpu.PrefetchScalarGridSpec(
        num_scalar_prefetch=0,
        grid=(B,),
        in_specs=[
            pl.BlockSpec((1, S, HIDDEN), per_b),                       # emb
            pl.BlockSpec((1, S, 1), per_b),                            # keep mask
            pl.BlockSpec((1, 1, S), per_b),                            # attn bias
            pl.BlockSpec((1, HIDDEN), rep),                            # emb_ln_g
            pl.BlockSpec((1, HIDDEN), rep),                            # emb_ln_b
            pl.BlockSpec((LAYERS, HIDDEN, 3 * HIDDEN), rep3),          # qkv_w
            pl.BlockSpec((LAYERS, 1, 3 * HIDDEN), rep3),               # qkv_b
            pl.BlockSpec((LAYERS, HIDDEN, HIDDEN), rep3),              # o_w
            pl.BlockSpec((LAYERS, 1, HIDDEN), rep3),                   # o_b
            pl.BlockSpec((LAYERS, 1, HIDDEN), rep3),                   # ln1_g
            pl.BlockSpec((LAYERS, 1, HIDDEN), rep3),                   # ln1_b
            pl.BlockSpec((LAYERS, HIDDEN, INTERMEDIATE), rep3),        # i_w
            pl.BlockSpec((LAYERS, 1, INTERMEDIATE), rep3),             # i_b
            pl.BlockSpec((LAYERS, INTERMEDIATE, HIDDEN), rep3),        # f_w
            pl.BlockSpec((LAYERS, 1, HIDDEN), rep3),                   # f_b
            pl.BlockSpec((LAYERS, 1, HIDDEN), rep3),                   # ln2_g
            pl.BlockSpec((LAYERS, 1, HIDDEN), rep3),                   # ln2_b
            pl.BlockSpec((HIDDEN, HIDDEN), rep),                       # pool_w
            pl.BlockSpec((1, HIDDEN), rep),                            # pool_b
            pl.BlockSpec((HIDDEN, NUM_LABELS), rep),                   # cls_w
            pl.BlockSpec((1, NUM_LABELS), rep),                        # cls_b
        ],
        out_specs=(
            pl.BlockSpec((1, 1, NUM_LABELS), per_b),                   # logits
            pl.BlockSpec((1, 1, NUM_LABELS), per_b),                   # sigmoid
        ),
    )
    logits3, sig3 = pl.pallas_call(
        _deberta_fused_kernel,
        out_shape=(
            jax.ShapeDtypeStruct((B, 1, NUM_LABELS), jnp.float32),
            jax.ShapeDtypeStruct((B, 1, NUM_LABELS), jnp.float32),
        ),
        grid_spec=grid_spec,
        compiler_params=pltpu.CompilerParams(
            dimension_semantics=("parallel",)),
    )(
        emb, mask_keep, attn_bias,
        params["emb_ln_g"], params["emb_ln_b"],
        params["qkv_w"], params["qkv_b"], params["o_w"], params["o_b"],
        params["ln1_g"], params["ln1_b"],
        params["i_w"], params["i_b"], params["f_w"], params["f_b"],
        params["ln2_g"], params["ln2_b"],
        params["pool_w"], params["pool_b"], params["cls_w"], params["cls_b"],
    )
    return logits3[:, 0, :], sig3[:, 0, :]


# ============================= parameter init ================================
def init_params(key):
    keys = iter(jax.random.split(key, 16))

    def nrm(shape):
        return 0.02 * jax.random.normal(next(keys), shape, dtype=jnp.float32)

    return {
        "word_emb": nrm((VOCAB, HIDDEN)),
        "pos_emb": nrm((MAX_POS, HIDDEN)),
        "type_emb": nrm((TYPE_VOCAB, HIDDEN)),
        "emb_ln_g": jnp.ones((1, HIDDEN), jnp.float32),
        "emb_ln_b": jnp.zeros((1, HIDDEN), jnp.float32),
        # fused QKV + per-layer weights, stacked over layers for VMEM residency
        "qkv_w": nrm((LAYERS, HIDDEN, 3 * HIDDEN)),
        "qkv_b": jnp.zeros((LAYERS, 1, 3 * HIDDEN), jnp.float32),
        "o_w": nrm((LAYERS, HIDDEN, HIDDEN)),
        "o_b": jnp.zeros((LAYERS, 1, HIDDEN), jnp.float32),
        "ln1_g": jnp.ones((LAYERS, 1, HIDDEN), jnp.float32),
        "ln1_b": jnp.zeros((LAYERS, 1, HIDDEN), jnp.float32),
        "i_w": nrm((LAYERS, HIDDEN, INTERMEDIATE)),
        "i_b": jnp.zeros((LAYERS, 1, INTERMEDIATE), jnp.float32),
        "f_w": nrm((LAYERS, INTERMEDIATE, HIDDEN)),
        "f_b": jnp.zeros((LAYERS, 1, HIDDEN), jnp.float32),
        "ln2_g": jnp.ones((LAYERS, 1, HIDDEN), jnp.float32),
        "ln2_b": jnp.zeros((LAYERS, 1, HIDDEN), jnp.float32),
        "pool_w": nrm((HIDDEN, HIDDEN)),
        "pool_b": jnp.zeros((1, HIDDEN), jnp.float32),
        "cls_w": nrm((HIDDEN, NUM_LABELS)),
        "cls_b": jnp.zeros((1, NUM_LABELS), jnp.float32),
        # LogisticRegression(2, 1): declared in __init__, unused in forward().
        "logistic_w": nrm((2, 1)),
        "logistic_b": jnp.zeros((1,), jnp.float32),
    }


# ================================ forward ====================================
def forward(params, input_ids, attention_mask=None, token_type_ids=None,
            position_ids=None, labels=None):
    B, S = input_ids.shape
    if attention_mask is None:
        attention_mask = jnp.ones((B, S), jnp.float32)
    if token_type_ids is None:
        token_type_ids = jnp.zeros((B, S), jnp.int32)
    if position_ids is None:
        position_ids = jnp.broadcast_to(jnp.arange(S, dtype=jnp.int32), (B, S))
    mask_f = attention_mask.astype(jnp.float32)

    # --- embedding gathers (XLA glue; everything downstream is one kernel) ---
    emb = (jnp.take(params["word_emb"], input_ids, axis=0)
           + jnp.take(params["pos_emb"], position_ids, axis=0)
           + jnp.take(params["type_emb"], token_type_ids, axis=0))
    mask_keep = mask_f.reshape(B, S, 1)
    # additive attention bias hoisted out of the kernel (layer/head invariant)
    # TODO(synk): padded *query* rows still softmax over uniform -1e9 scores,
    #             matching the previous implementation; only the CLS token
    #             reaches the classifier so this is benign here.
    attn_bias = ((1.0 - mask_f) * (-1e9)).reshape(B, 1, S)

    logits, sigmoid_logits = deberta_backbone_pallas(
        params, emb, mask_keep, attn_bias)

    # --- loss: problem_type=None, num_labels>1, labels.dim()==1 path ---------
    # Rows with label < 0 are dropped; mean CE over the rest; 0.0 if none.
    # Left to XLA per perf review: a pallas_call on a (B, num_labels) array is
    # pure launch overhead.
    loss = None
    if labels is not None:
        lbl = labels.reshape(-1).astype(jnp.int32)
        valid = (lbl >= 0).astype(jnp.float32)
        safe = jnp.clip(lbl, 0, NUM_LABELS - 1)
        logp = jax.nn.log_softmax(logits.astype(jnp.float32), axis=-1)
        nll = -jnp.take_along_axis(logp, safe[:, None], axis=-1)[:, 0]
        cnt = jnp.sum(valid)
        loss = jnp.where(cnt > 0.0,
                         jnp.sum(nll * valid) / jnp.maximum(cnt, 1.0),
                         jnp.float32(0.0))

    return loss, logits, sigmoid_logits


# ================================= main ======================================
if __name__ == "__main__":
    key = jax.random.PRNGKey(0)
    pkey, ikey = jax.random.split(key)
    params = init_params(pkey)

    B, S = 2, 8
    input_ids = jax.random.randint(ikey, (B, S), 0, VOCAB, dtype=jnp.int32)
    attention_mask = jnp.ones((B, S), jnp.float32).at[1, 6:].set(0.0)
    token_type_ids = jnp.zeros((B, S), jnp.int32)
    labels = jnp.array([1, -1], dtype=jnp.int32)  # -1 row is dropped from CE

    fwd = jax.jit(forward)
    loss, logits, sigmoid_logits = fwd(
        params, input_ids, attention_mask, token_type_ids, labels=labels)
    jax.block_until_ready((loss, logits, sigmoid_logits))

    assert logits.shape == (B, NUM_LABELS)
    assert sigmoid_logits.shape == (B, NUM_LABELS)
    assert loss.shape == ()
    print("KERNEL_OK")
</pallas_src>

<mosaic_0001>
module attributes {stable_mosaic.version = 11 : i64} {
  func.func @_deberta_fused_kernel(%arg0: i32, %arg1: memref<1x8x32xf32, #tpu.memory_space<vmem>>, %arg2: memref<1x8x1xf32, #tpu.memory_space<vmem>>, %arg3: memref<1x1x8xf32, #tpu.memory_space<vmem>>, %arg4: memref<1x32xf32, #tpu.memory_space<vmem>>, %arg5: memref<1x32xf32, #tpu.memory_space<vmem>>, %arg6: memref<2x32x96xf32, #tpu.memory_space<vmem>>, %arg7: memref<2x1x96xf32, #tpu.memory_space<vmem>>, %arg8: memref<2x32x32xf32, #tpu.memory_space<vmem>>, %arg9: memref<2x1x32xf32, #tpu.memory_space<vmem>>, %arg10: memref<2x1x32xf32, #tpu.memory_space<vmem>>, %arg11: memref<2x1x32xf32, #tpu.memory_space<vmem>>, %arg12: memref<2x32x64xf32, #tpu.memory_space<vmem>>, %arg13: memref<2x1x64xf32, #tpu.memory_space<vmem>>, %arg14: memref<2x64x32xf32, #tpu.memory_space<vmem>>, %arg15: memref<2x1x32xf32, #tpu.memory_space<vmem>>, %arg16: memref<2x1x32xf32, #tpu.memory_space<vmem>>, %arg17: memref<2x1x32xf32, #tpu.memory_space<vmem>>, %arg18: memref<32x32xf32, #tpu.memory_space<vmem>>, %arg19: memref<1x32xf32, #tpu.memory_space<vmem>>, %arg20: memref<32x3xf32, #tpu.memory_space<vmem>>, %arg21: memref<1x3xf32, #tpu.memory_space<vmem>>, %arg22: memref<1x1x3xf32, #tpu.memory_space<vmem>>, %arg23: memref<1x1x3xf32, #tpu.memory_space<vmem>>) attributes {dimension_semantics = [#tpu.dimension_semantics<parallel>], iteration_bounds = array<i64: 2>, scalar_prefetch = 0 : i64, scratch_operands = 0 : i64, tpu.core_type = #tpu.core_type<tc>, window_params = [{transform_indices = @transform_0, window_bounds = array<i64: 1, 8, 32>}, {transform_indices = @transform_1, window_bounds = array<i64: 1, 8, 1>}, {transform_indices = @transform_2, window_bounds = array<i64: 1, 1, 8>}, {pipeline_mode = #tpu.pipeline_mode<synchronous>, transform_indices = @transform_3, window_bounds = array<i64: 1, 32>}, {pipeline_mode = #tpu.pipeline_mode<synchronous>, transform_indices = @transform_4, window_bounds = array<i64: 1, 32>}, {pipeline_mode = #tpu.pipeline_mode<synchronous>, transform_indices = @transform_5, window_bounds = array<i64: 2, 32, 96>}, {pipeline_mode = #tpu.pipeline_mode<synchronous>, transform_indices = @transform_6, window_bounds = array<i64: 2, 1, 96>}, {pipeline_mode = #tpu.pipeline_mode<synchronous>, transform_indices = @transform_7, window_bounds = array<i64: 2, 32, 32>}, {pipeline_mode = #tpu.pipeline_mode<synchronous>, transform_indices = @transform_8, window_bounds = array<i64: 2, 1, 32>}, {pipeline_mode = #tpu.pipeline_mode<synchronous>, transform_indices = @transform_9, window_bounds = array<i64: 2, 1, 32>}, {pipeline_mode = #tpu.pipeline_mode<synchronous>, transform_indices = @transform_10, window_bounds = array<i64: 2, 1, 32>}, {pipeline_mode = #tpu.pipeline_mode<synchronous>, transform_indices = @transform_11, window_bounds = array<i64: 2, 32, 64>}, {pipeline_mode = #tpu.pipeline_mode<synchronous>, transform_indices = @transform_12, window_bounds = array<i64: 2, 1, 64>}, {pipeline_mode = #tpu.pipeline_mode<synchronous>, transform_indices = @transform_13, window_bounds = array<i64: 2, 64, 32>}, {pipeline_mode = #tpu.pipeline_mode<synchronous>, transform_indices = @transform_14, window_bounds = array<i64: 2, 1, 32>}, {pipeline_mode = #tpu.pipeline_mode<synchronous>, transform_indices = @transform_15, window_bounds = array<i64: 2, 1, 32>}, {pipeline_mode = #tpu.pipeline_mode<synchronous>, transform_indices = @transform_16, window_bounds = array<i64: 2, 1, 32>}, {pipeline_mode = #tpu.pipeline_mode<synchronous>, transform_indices = @transform_17, window_bounds = array<i64: 32, 32>}, {pipeline_mode = #tpu.pipeline_mode<synchronous>, transform_indices = @transform_18, window_bounds = array<i64: 1, 32>}, {pipeline_mode = #tpu.pipeline_mode<synchronous>, transform_indices = @transform_19, window_bounds = array<i64: 32, 3>}, {pipeline_mode = #tpu.pipeline_mode<synchronous>, transform_indices = @transform_20, window_bounds = array<i64: 1, 3>}, {transform_indices = @transform_21, window_bounds = array<i64: 1, 1, 3>}, {transform_indices = @transform_22, window_bounds = array<i64: 1, 1, 3>}]} {
    %c0 = arith.constant 0 : index
    %c0_0 = arith.constant 0 : index
    %c0_1 = arith.constant 0 : index
    %0 = vector.load %arg1[%c0, %c0_0, %c0_1] : memref<1x8x32xf32, #tpu.memory_space<vmem>>, vector<1x8x32xf32>
    %1 = vector.shape_cast %0 : vector<1x8x32xf32> to vector<8x32xf32>
    %c0_2 = arith.constant 0 : index
    %c0_3 = arith.constant 0 : index
    %2 = vector.load %arg4[%c0_2, %c0_3] : memref<1x32xf32, #tpu.memory_space<vmem>>, vector<1x32xf32>
    %c0_4 = arith.constant 0 : index
    %c0_5 = arith.constant 0 : index
    %3 = vector.load %arg5[%c0_4, %c0_5] : memref<1x32xf32, #tpu.memory_space<vmem>>, vector<1x32xf32>
    %cst = arith.constant dense<0.000000e+00> : vector<8xf32>
    %4 = vector.multi_reduction <add>, %1, %cst [1] : vector<8x32xf32> to vector<8xf32>
    %5 = vector.shape_cast %4 : vector<8xf32> to vector<8x1xf32>
    %cst_6 = arith.constant 3.200000e+01 : f32
    %6 = vector.broadcast %cst_6 : f32 to vector<8x1xf32>
    %7 = arith.divf %5, %6 : vector<8x1xf32>
    %8 = vector.broadcast %7 : vector<8x1xf32> to vector<8x32xf32>
    %9 = arith.subf %1, %8 : vector<8x32xf32>
    %10 = arith.mulf %9, %9 : vector<8x32xf32>
    %cst_7 = arith.constant dense<0.000000e+00> : vector<8xf32>
    %11 = vector.multi_reduction <add>, %10, %cst_7 [1] : vector<8x32xf32> to vector<8xf32>
    %12 = vector.shape_cast %11 : vector<8xf32> to vector<8x1xf32>
    %cst_8 = arith.constant 3.200000e+01 : f32
    %13 = vector.broadcast %cst_8 : f32 to vector<8x1xf32>
    %14 = arith.divf %12, %13 : vector<8x1xf32>
    %15 = vector.broadcast %7 : vector<8x1xf32> to vector<8x32xf32>
    %16 = arith.subf %1, %15 : vector<8x32xf32>
    %cst_9 = arith.constant 1.000000e-07 : f32
    %17 = vector.broadcast %cst_9 : f32 to vector<8x1xf32>
    %18 = arith.addf %14, %17 : vector<8x1xf32>
    %19 = math.rsqrt %18 : vector<8x1xf32>
    %20 = vector.broadcast %19 : vector<8x1xf32> to vector<8x32xf32>
    %21 = arith.mulf %16, %20 : vector<8x32xf32>
    %22 = vector.broadcast %2 : vector<1x32xf32> to vector<8x32xf32>
    %23 = arith.mulf %21, %22 : vector<8x32xf32>
    %24 = vector.broadcast %3 : vector<1x32xf32> to vector<8x32xf32>
    %25 = arith.addf %23, %24 : vector<8x32xf32>
    %c0_10 = arith.constant 0 : index
    %c0_11 = arith.constant 0 : index
    %c0_12 = arith.constant 0 : index
    %26 = vector.load %arg2[%c0_10, %c0_11, %c0_12] : memref<1x8x1xf32, #tpu.memory_space<vmem>>, vector<1x8x1xf32>
    %27 = vector.shape_cast %26 : vector<1x8x1xf32> to vector<8x1xf32>
    %28 = vector.broadcast %27 : vector<8x1xf32> to vector<8x32xf32>
    %29 = arith.mulf %25, %28 : vector<8x32xf32>
    %c0_13 = arith.constant 0 : index
    %c0_14 = arith.constant 0 : index
    %c0_15 = arith.constant 0 : index
    %30 = vector.load %arg3[%c0_13, %c0_14, %c0_15] : memref<1x1x8xf32, #tpu.memory_space<vmem>>, vector<1x1x8xf32>
    %31 = vector.shape_cast %30 : vector<1x1x8xf32> to vector<1x8xf32>
    %c0_16 = arith.constant 0 : index
    %c0_17 = arith.constant 0 : index
    %c0_18 = arith.constant 0 : index
    %32 = vector.load %arg6[%c0_16, %c0_17, %c0_18] : memref<2x32x96xf32, #tpu.memory_space<vmem>>, vector<1x32x96xf32>
    %33 = vector.shape_cast %32 : vector<1x32x96xf32> to vector<32x96xf32>
    %cst_19 = arith.constant dense<0.000000e+00> : vector<8x96xf32>
    %34 = tpu.matmul %29, %33, %cst_19 {dimension_numbers = #tpu.dot_dimension_numbers<[1], [0], [0], [1], [0, 0, 1, 1], [], []>} : vector<8x32xf32>, vector<32x96xf32>, vector<8x96xf32> -> vector<8x96xf32>
    %c0_20 = arith.constant 0 : index
    %c0_21 = arith.constant 0 : index
    %c0_22 = arith.constant 0 : index
    %35 = vector.load %arg7[%c0_20, %c0_21, %c0_22] : memref<2x1x96xf32, #tpu.memory_space<vmem>>, vector<1x1x96xf32>
    %36 = vector.shape_cast %35 : vector<1x1x96xf32> to vector<1x96xf32>
    %37 = vector.broadcast %36 : vector<1x96xf32> to vector<8x96xf32>
    %38 = arith.addf %34, %37 : vector<8x96xf32>
    %c0_23 = arith.constant 0 : index
    %c0_24 = arith.constant 0 : index
    %c0_25 = arith.constant 0 : index
    %39 = vector.load %arg8[%c0_23, %c0_24, %c0_25] : memref<2x32x32xf32, #tpu.memory_space<vmem>>, vector<1x32x32xf32>
    %40 = vector.shape_cast %39 : vector<1x32x32xf32> to vector<32x32xf32>
    %cst_26 = arith.constant 0.000000e+00 : f32
    %41 = vector.broadcast %cst_26 : f32 to vector<8x32xf32>
    %42 = vector.extract_strided_slice %38 {offsets = [0, 0], sizes = [8, 8], strides = [1, 1]} : vector<8x96xf32> to vector<8x8xf32>
    %43 = vector.extract_strided_slice %38 {offsets = [0, 32], sizes = [8, 8], strides = [1, 1]} : vector<8x96xf32> to vector<8x8xf32>
    %44 = vector.extract_strided_slice %38 {offsets = [0, 64], sizes = [8, 8], strides = [1, 1]} : vector<8x96xf32> to vector<8x8xf32>
    %45 = tpu.transpose %43, [1, 0] : vector<8x8xf32> -> vector<8x8xf32>
    %cst_27 = arith.constant dense<0.000000e+00> : vector<8x8xf32>
    %46 = tpu.matmul %42, %45, %cst_27 {dimension_numbers = #tpu.dot_dimension_numbers<[1], [0], [0], [1], [0, 0, 1, 1], [], []>} : vector<8x8xf32>, vector<8x8xf32>, vector<8x8xf32> -> vector<8x8xf32>
    %cst_28 = arith.constant 0.353553385 : f32
    %47 = vector.broadcast %cst_28 : f32 to vector<8x8xf32>
    %48 = arith.mulf %46, %47 : vector<8x8xf32>
    %49 = vector.broadcast %31 : vector<1x8xf32> to vector<8x8xf32>
    %50 = arith.addf %48, %49 : vector<8x8xf32>
    %cst_29 = arith.constant dense<0xFF800000> : vector<8xf32>
    %51 = vector.multi_reduction <maximumf>, %50, %cst_29 [1] : vector<8x8xf32> to vector<8xf32>
    %52 = vector.shape_cast %51 : vector<8xf32> to vector<8x1xf32>
    %53 = vector.broadcast %52 : vector<8x1xf32> to vector<8x8xf32>
    %54 = arith.subf %50, %53 : vector<8x8xf32>
    %55 = math.exp %54 : vector<8x8xf32>
    %cst_30 = arith.constant dense<0.000000e+00> : vector<8xf32>
    %56 = vector.multi_reduction <add>, %55, %cst_30 [1] : vector<8x8xf32> to vector<8xf32>
    %57 = vector.shape_cast %56 : vector<8xf32> to vector<8x1xf32>
    %58 = tpu.reciprocal %57 {approx = true} : vector<8x1xf32> -> vector<8x1xf32>
    %59 = vector.broadcast %58 : vector<8x1xf32> to vector<8x8xf32>
    %60 = arith.mulf %55, %59 : vector<8x8xf32>
    %cst_31 = arith.constant dense<0.000000e+00> : vector<8x8xf32>
    %61 = tpu.matmul %60, %44, %cst_31 {dimension_numbers = #tpu.dot_dimension_numbers<[1], [0], [0], [1], [0, 0, 1, 1], [], []>} : vector<8x8xf32>, vector<8x8xf32>, vector<8x8xf32> -> vector<8x8xf32>
    %62 = vector.extract_strided_slice %40 {offsets = [0, 0], sizes = [8, 32], strides = [1, 1]} : vector<32x32xf32> to vector<8x32xf32>
    %cst_32 = arith.constant dense<0.000000e+00> : vector<8x32xf32>
    %63 = tpu.matmul %61, %62, %cst_32 {dimension_numbers = #tpu.dot_dimension_numbers<[1], [0], [0], [1], [0, 0, 1, 1], [], []>} : vector<8x8xf32>, vector<8x32xf32>, vector<8x32xf32> -> vector<8x32xf32>
    %64 = arith.addf %41, %63 : vector<8x32xf32>
    %65 = vector.extract_strided_slice %38 {offsets = [0, 8], sizes = [8, 8], strides = [1, 1]} : vector<8x96xf32> to vector<8x8xf32>
    %66 = vector.extract_strided_slice %38 {offsets = [0, 40], sizes = [8, 8], strides = [1, 1]} : vector<8x96xf32> to vector<8x8xf32>
    %67 = vector.extract_strided_slice %38 {offsets = [0, 72], sizes = [8, 8], strides = [1, 1]} : vector<8x96xf32> to vector<8x8xf32>
    %68 = tpu.transpose %66, [1, 0] : vector<8x8xf32> -> vector<8x8xf32>
    %cst_33 = arith.constant dense<0.000000e+00> : vector<8x8xf32>
    %69 = tpu.matmul %65, %68, %cst_33 {dimension_numbers = #tpu.dot_dimension_numbers<[1], [0], [0], [1], [0, 0, 1, 1], [], []>} : vector<8x8xf32>, vector<8x8xf32>, vector<8x8xf32> -> vector<8x8xf32>
    %cst_34 = arith.constant 0.353553385 : f32
    %70 = vector.broadcast %cst_34 : f32 to vector<8x8xf32>
    %71 = arith.mulf %69, %70 : vector<8x8xf32>
    %72 = vector.broadcast %31 : vector<1x8xf32> to vector<8x8xf32>
    %73 = arith.addf %71, %72 : vector<8x8xf32>
    %cst_35 = arith.constant dense<0xFF800000> : vector<8xf32>
    %74 = vector.multi_reduction <maximumf>, %73, %cst_35 [1] : vector<8x8xf32> to vector<8xf32>
    %75 = vector.shape_cast %74 : vector<8xf32> to vector<8x1xf32>
    %76 = vector.broadcast %75 : vector<8x1xf32> to vector<8x8xf32>
    %77 = arith.subf %73, %76 : vector<8x8xf32>
    %78 = math.exp %77 : vector<8x8xf32>
    %cst_36 = arith.constant dense<0.000000e+00> : vector<8xf32>
    %79 = vector.multi_reduction <add>, %78, %cst_36 [1] : vector<8x8xf32> to vector<8xf32>
    %80 = vector.shape_cast %79 : vector<8xf32> to vector<8x1xf32>
    %81 = tpu.reciprocal %80 {approx = true} : vector<8x1xf32> -> vector<8x1xf32>
    %82 = vector.broadcast %81 : vector<8x1xf32> to vector<8x8xf32>
    %83 = arith.mulf %78, %82 : vector<8x8xf32>
    %cst_37 = arith.constant dense<0.000000e+00> : vector<8x8xf32>
    %84 = tpu.matmul %83, %67, %cst_37 {dimension_numbers = #tpu.dot_dimension_numbers<[1], [0], [0], [1], [0, 0, 1, 1], [], []>} : vector<8x8xf32>, vector<8x8xf32>, vector<8x8xf32> -> vector<8x8xf32>
    %85 = vector.extract_strided_slice %40 {offsets = [8, 0], sizes = [8, 32], strides = [1, 1]} : vector<32x32xf32> to vector<8x32xf32>
    %cst_38 = arith.constant dense<0.000000e+00> : vector<8x32xf32>
    %86 = tpu.matmul %84, %85, %cst_38 {dimension_numbers = #tpu.dot_dimension_numbers<[1], [0], [0], [1], [0, 0, 1, 1], [], []>} : vector<8x8xf32>, vector<8x32xf32>, vector<8x32xf32> -> vector<8x32xf32>
    %87 = arith.addf %64, %86 : vector<8x32xf32>
    %88 = vector.extract_strided_slice %38 {offsets = [0, 16], sizes = [8, 8], strides = [1, 1]} : vector<8x96xf32> to vector<8x8xf32>
    %89 = vector.extract_strided_slice %38 {offsets = [0, 48], sizes = [8, 8], strides = [1, 1]} : vector<8x96xf32> to vector<8x8xf32>
    %90 = vector.extract_strided_slice %38 {offsets = [0, 80], sizes = [8, 8], strides = [1, 1]} : vector<8x96xf32> to vector<8x8xf32>
    %91 = tpu.transpose %89, [1, 0] : vector<8x8xf32> -> vector<8x8xf32>
    %cst_39 = arith.constant dense<0.000000e+00> : vector<8x8xf32>
    %92 = tpu.matmul %88, %91, %cst_39 {dimension_numbers = #tpu.dot_dimension_numbers<[1], [0], [0], [1], [0, 0, 1, 1], [], []>} : vector<8x8xf32>, vector<8x8xf32>, vector<8x8xf32> -> vector<8x8xf32>
    %cst_40 = arith.constant 0.353553385 : f32
    %93 = vector.broadcast %cst_40 : f32 to vector<8x8xf32>
    %94 = arith.mulf %92, %93 : vector<8x8xf32>
    %95 = vector.broadcast %31 : vector<1x8xf32> to vector<8x8xf32>
    %96 = arith.addf %94, %95 : vector<8x8xf32>
    %cst_41 = arith.constant dense<0xFF800000> : vector<8xf32>
    %97 = vector.multi_reduction <maximumf>, %96, %cst_41 [1] : vector<8x8xf32> to vector<8xf32>
    %98 = vector.shape_cast %97 : vector<8xf32> to vector<8x1xf32>
    %99 = vector.broadcast %98 : vector<8x1xf32> to vector<8x8xf32>
    %100 = arith.subf %96, %99 : vector<8x8xf32>
    %101 = math.exp %100 : vector<8x8xf32>
    %cst_42 = arith.constant dense<0.000000e+00> : vector<8xf32>
    %102 = vector.multi_reduction <add>, %101, %cst_42 [1] : vector<8x8xf32> to vector<8xf32>
    %103 = vector.shape_cast %102 : vector<8xf32> to vector<8x1xf32>
    %104 = tpu.reciprocal %103 {approx = true} : vector<8x1xf32> -> vector<8x1xf32>
    %105 = vector.broadcast %104 : vector<8x1xf32> to vector<8x8xf32>
    %106 = arith.mulf %101, %105 : vector<8x8xf32>
    %cst_43 = arith.constant dense<0.000000e+00> : vector<8x8xf32>
    %107 = tpu.matmul %106, %90, %cst_43 {dimension_numbers = #tpu.dot_dimension_numbers<[1], [0], [0], [1], [0, 0, 1, 1], [], []>} : vector<8x8xf32>, vector<8x8xf32>, vector<8x8xf32> -> vector<8x8xf32>
    %108 = vector.extract_strided_slice %40 {offsets = [16, 0], sizes = [8, 32], strides = [1, 1]} : vector<32x32xf32> to vector<8x32xf32>
    %cst_44 = arith.constant dense<0.000000e+00> : vector<8x32xf32>
    %109 = tpu.matmul %107, %108, %cst_44 {dimension_numbers = #tpu.dot_dimension_numbers<[1], [0], [0], [1], [0, 0, 1, 1], [], []>} : vector<8x8xf32>, vector<8x32xf32>, vector<8x32xf32> -> vector<8x32xf32>
    %110 = arith.addf %87, %109 : vector<8x32xf32>
    %111 = vector.extract_strided_slice %38 {offsets = [0, 24], sizes = [8, 8], strides = [1, 1]} : vector<8x96xf32> to vector<8x8xf32>
    %112 = vector.extract_strided_slice %38 {offsets = [0, 56], sizes = [8, 8], strides = [1, 1]} : vector<8x96xf32> to vector<8x8xf32>
    %113 = vector.extract_strided_slice %38 {offsets = [0, 88], sizes = [8, 8], strides = [1, 1]} : vector<8x96xf32> to vector<8x8xf32>
    %114 = tpu.transpose %112, [1, 0] : vector<8x8xf32> -> vector<8x8xf32>
    %cst_45 = arith.constant dense<0.000000e+00> : vector<8x8xf32>
    %115 = tpu.matmul %111, %114, %cst_45 {dimension_numbers = #tpu.dot_dimension_numbers<[1], [0], [0], [1], [0, 0, 1, 1], [], []>} : vector<8x8xf32>, vector<8x8xf32>, vector<8x8xf32> -> vector<8x8xf32>
    %cst_46 = arith.constant 0.353553385 : f32
    %116 = vector.broadcast %cst_46 : f32 to vector<8x8xf32>
    %117 = arith.mulf %115, %116 : vector<8x8xf32>
    %118 = vector.broadcast %31 : vector<1x8xf32> to vector<8x8xf32>
    %119 = arith.addf %117, %118 : vector<8x8xf32>
    %cst_47 = arith.constant dense<0xFF800000> : vector<8xf32>
    %120 = vector.multi_reduction <maximumf>, %119, %cst_47 [1] : vector<8x8xf32> to vector<8xf32>
    %121 = vector.shape_cast %120 : vector<8xf32> to vector<8x1xf32>
    %122 = vector.broadcast %121 : vector<8x1xf32> to vector<8x8xf32>
    %123 = arith.subf %119, %122 : vector<8x8xf32>
    %124 = math.exp %123 : vector<8x8xf32>
    %cst_48 = arith.constant dense<0.000000e+00> : vector<8xf32>
    %125 = vector.multi_reduction <add>, %124, %cst_48 [1] : vector<8x8xf32> to vector<8xf32>
    %126 = vector.shape_cast %125 : vector<8xf32> to vector<8x1xf32>
    %127 = tpu.reciprocal %126 {approx = true} : vector<8x1xf32> -> vector<8x1xf32>
    %128 = vector.broadcast %127 : vector<8x1xf32> to vector<8x8xf32>
    %129 = arith.mulf %124, %128 : vector<8x8xf32>
    %cst_49 = arith.constant dense<0.000000e+00> : vector<8x8xf32>
    %130 = tpu.matmul %129, %113, %cst_49 {dimension_numbers = #tpu.dot_dimension_numbers<[1], [0], [0], [1], [0, 0, 1, 1], [], []>} : vector<8x8xf32>, vector<8x8xf32>, vector<8x8xf32> -> vector<8x8xf32>
    %131 = vector.extract_strided_slice %40 {offsets = [24, 0], sizes = [8, 32], strides = [1, 1]} : vector<32x32xf32> to vector<8x32xf32>
    %cst_50 = arith.constant dense<0.000000e+00> : vector<8x32xf32>
    %132 = tpu.matmul %130, %131, %cst_50 {dimension_numbers = #tpu.dot_dimension_numbers<[1], [0], [0], [1], [0, 0, 1, 1], [], []>} : vector<8x8xf32>, vector<8x32xf32>, vector<8x32xf32> -> vector<8x32xf32>
    %133 = arith.addf %110, %132 : vector<8x32xf32>
    %c0_51 = arith.constant 0 : index
    %c0_52 = arith.constant 0 : index
    %c0_53 = arith.constant 0 : index
    %134 = vector.load %arg9[%c0_51, %c0_52, %c0_53] : memref<2x1x32xf32, #tpu.memory_space<vmem>>, vector<1x1x32xf32>
    %135 = vector.shape_cast %134 : vector<1x1x32xf32> to vector<1x32xf32>
    %136 = vector.broadcast %135 : vector<1x32xf32> to vector<8x32xf32>
    %137 = arith.addf %133, %136 : vector<8x32xf32>
    %138 = arith.addf %137, %29 : vector<8x32xf32>
    %c0_54 = arith.constant 0 : index
    %c0_55 = arith.constant 0 : index
    %c0_56 = arith.constant 0 : index
    %139 = vector.load %arg10[%c0_54, %c0_55, %c0_56] : memref<2x1x32xf32, #tpu.memory_space<vmem>>, vector<1x1x32xf32>
    %140 = vector.shape_cast %139 : vector<1x1x32xf32> to vector<1x32xf32>
    %c0_57 = arith.constant 0 : index
    %c0_58 = arith.constant 0 : index
    %c0_59 = arith.constant 0 : index
    %141 = vector.load %arg11[%c0_57, %c0_58, %c0_59] : memref<2x1x32xf32, #tpu.memory_space<vmem>>, vector<1x1x32xf32>
    %142 = vector.shape_cast %141 : vector<1x1x32xf32> to vector<1x32xf32>
    %cst_60 = arith.constant dense<0.000000e+00> : vector<8xf32>
    %143 = vector.multi_reduction <add>, %138, %cst_60 [1] : vector<8x32xf32> to vector<8xf32>
    %144 = vector.shape_cast %143 : vector<8xf32> to vector<8x1xf32>
    %cst_61 = arith.constant 3.200000e+01 : f32
    %145 = vector.broadcast %cst_61 : f32 to vector<8x1xf32>
    %146 = arith.divf %144, %145 : vector<8x1xf32>
    %147 = vector.broadcast %146 : vector<8x1xf32> to vector<8x32xf32>
    %148 = arith.subf %138, %147 : vector<8x32xf32>
    %149 = arith.mulf %148, %148 : vector<8x32xf32>
    %cst_62 = arith.constant dense<0.000000e+00> : vector<8xf32>
    %150 = vector.multi_reduction <add>, %149, %cst_62 [1] : vector<8x32xf32> to vector<8xf32>
    %151 = vector.shape_cast %150 : vector<8xf32> to vector<8x1xf32>
    %cst_63 = arith.constant 3.200000e+01 : f32
    %152 = vector.broadcast %cst_63 : f32 to vector<8x1xf32>
    %153 = arith.divf %151, %152 : vector<8x1xf32>
    %154 = vector.broadcast %146 : vector<8x1xf32> to vector<8x32xf32>
    %155 = arith.subf %138, %154 : vector<8x32xf32>
    %cst_64 = arith.constant 1.000000e-07 : f32
    %156 = vector.broadcast %cst_64 : f32 to vector<8x1xf32>
    %157 = arith.addf %153, %156 : vector<8x1xf32>
    %158 = math.rsqrt %157 : vector<8x1xf32>
    %159 = vector.broadcast %158 : vector<8x1xf32> to vector<8x32xf32>
    %160 = arith.mulf %155, %159 : vector<8x32xf32>
    %161 = vector.broadcast %140 : vector<1x32xf32> to vector<8x32xf32>
    %162 = arith.mulf %160, %161 : vector<8x32xf32>
    %163 = vector.broadcast %142 : vector<1x32xf32> to vector<8x32xf32>
    %164 = arith.addf %162, %163 : vector<8x32xf32>
    %c0_65 = arith.constant 0 : index
    %c0_66 = arith.constant 0 : index
    %c0_67 = arith.constant 0 : index
    %165 = vector.load %arg12[%c0_65, %c0_66, %c0_67] : memref<2x32x64xf32, #tpu.memory_space<vmem>>, vector<1x32x64xf32>
    %166 = vector.shape_cast %165 : vector<1x32x64xf32> to vector<32x64xf32>
    %cst_68 = arith.constant dense<0.000000e+00> : vector<8x64xf32>
    %167 = tpu.matmul %164, %166, %cst_68 {dimension_numbers = #tpu.dot_dimension_numbers<[1], [0], [0], [1], [0, 0, 1, 1], [], []>} : vector<8x32xf32>, vector<32x64xf32>, vector<8x64xf32> -> vector<8x64xf32>
    %c0_69 = arith.constant 0 : index
    %c0_70 = arith.constant 0 : index
    %c0_71 = arith.constant 0 : index
    %168 = vector.load %arg13[%c0_69, %c0_70, %c0_71] : memref<2x1x64xf32, #tpu.memory_space<vmem>>, vector<1x1x64xf32>
    %169 = vector.shape_cast %168 : vector<1x1x64xf32> to vector<1x64xf32>
    %170 = vector.broadcast %169 : vector<1x64xf32> to vector<8x64xf32>
    %171 = arith.addf %167, %170 : vector<8x64xf32>
    %cst_72 = arith.constant 5.000000e-01 : f32
    %172 = vector.broadcast %cst_72 : f32 to vector<8x64xf32>
    %173 = arith.mulf %172, %171 : vector<8x64xf32>
    %cst_73 = arith.constant 4.471500e-02 : f32
    %174 = vector.broadcast %cst_73 : f32 to vector<8x64xf32>
    %175 = arith.mulf %174, %171 : vector<8x64xf32>
    %176 = arith.mulf %175, %171 : vector<8x64xf32>
    %177 = arith.mulf %176, %171 : vector<8x64xf32>
    %178 = arith.addf %171, %177 : vector<8x64xf32>
    %cst_74 = arith.constant 0.797884583 : f32
    %179 = vector.broadcast %cst_74 : f32 to vector<8x64xf32>
    %180 = arith.mulf %179, %178 : vector<8x64xf32>
    %181 = math.tanh %180 : vector<8x64xf32>
    %cst_75 = arith.constant 1.000000e+00 : f32
    %182 = vector.broadcast %cst_75 : f32 to vector<8x64xf32>
    %183 = arith.addf %182, %181 : vector<8x64xf32>
    %184 = arith.mulf %173, %183 : vector<8x64xf32>
    %c0_76 = arith.constant 0 : index
    %c0_77 = arith.constant 0 : index
    %c0_78 = arith.constant 0 : index
    %185 = vector.load %arg14[%c0_76, %c0_77, %c0_78] : memref<2x64x32xf32, #tpu.memory_space<vmem>>, vector<1x64x32xf32>
    %186 = vector.shape_cast %185 : vector<1x64x32xf32> to vector<64x32xf32>
    %cst_79 = arith.constant dense<0.000000e+00> : vector<8x32xf32>
    %187 = tpu.matmul %184, %186, %cst_79 {dimension_numbers = #tpu.dot_dimension_numbers<[1], [0], [0], [1], [0, 0, 1, 1], [], []>} : vector<8x64xf32>, vector<64x32xf32>, vector<8x32xf32> -> vector<8x32xf32>
    %c0_80 = arith.constant 0 : index
    %c0_81 = arith.constant 0 : index
    %c0_82 = arith.constant 0 : index
    %188 = vector.load %arg15[%c0_80, %c0_81, %c0_82] : memref<2x1x32xf32, #tpu.memory_space<vmem>>, vector<1x1x32xf32>
    %189 = vector.shape_cast %188 : vector<1x1x32xf32> to vector<1x32xf32>
    %190 = vector.broadcast %189 : vector<1x32xf32> to vector<8x32xf32>
    %191 = arith.addf %187, %190 : vector<8x32xf32>
    %192 = arith.addf %191, %164 : vector<8x32xf32>
    %c0_83 = arith.constant 0 : index
    %c0_84 = arith.constant 0 : index
    %c0_85 = arith.constant 0 : index
    %193 = vector.load %arg16[%c0_83, %c0_84, %c0_85] : memref<2x1x32xf32, #tpu.memory_space<vmem>>, vector<1x1x32xf32>
    %194 = vector.shape_cast %193 : vector<1x1x32xf32> to vector<1x32xf32>
    %c0_86 = arith.constant 0 : index
    %c0_87 = arith.constant 0 : index
    %c0_88 = arith.constant 0 : index
    %195 = vector.load %arg17[%c0_86, %c0_87, %c0_88] : memref<2x1x32xf32, #tpu.memory_space<vmem>>, vector<1x1x32xf32>
    %196 = vector.shape_cast %195 : vector<1x1x32xf32> to vector<1x32xf32>
    %cst_89 = arith.constant dense<0.000000e+00> : vector<8xf32>
    %197 = vector.multi_reduction <add>, %192, %cst_89 [1] : vector<8x32xf32> to vector<8xf32>
    %198 = vector.shape_cast %197 : vector<8xf32> to vector<8x1xf32>
    %cst_90 = arith.constant 3.200000e+01 : f32
    %199 = vector.broadcast %cst_90 : f32 to vector<8x1xf32>
    %200 = arith.divf %198, %199 : vector<8x1xf32>
    %201 = vector.broadcast %200 : vector<8x1xf32> to vector<8x32xf32>
    %202 = arith.subf %192, %201 : vector<8x32xf32>
    %203 = arith.mulf %202, %202 : vector<8x32xf32>
    %cst_91 = arith.constant dense<0.000000e+00> : vector<8xf32>
    %204 = vector.multi_reduction <add>, %203, %cst_91 [1] : vector<8x32xf32> to vector<8xf32>
    %205 = vector.shape_cast %204 : vector<8xf32> to vector<8x1xf32>
    %cst_92 = arith.constant 3.200000e+01 : f32
    %206 = vector.broadcast %cst_92 : f32 to vector<8x1xf32>
    %207 = arith.divf %205, %206 : vector<8x1xf32>
    %208 = vector.broadcast %200 : vector<8x1xf32> to vector<8x32xf32>
    %209 = arith.subf %192, %208 : vector<8x32xf32>
    %cst_93 = arith.constant 1.000000e-07 : f32
    %210 = vector.broadcast %cst_93 : f32 to vector<8x1xf32>
    %211 = arith.addf %207, %210 : vector<8x1xf32>
    %212 = math.rsqrt %211 : vector<8x1xf32>
    %213 = vector.broadcast %212 : vector<8x1xf32> to vector<8x32xf32>
    %214 = arith.mulf %209, %213 : vector<8x32xf32>
    %215 = vector.broadcast %194 : vector<1x32xf32> to vector<8x32xf32>
    %216 = arith.mulf %214, %215 : vector<8x32xf32>
    %217 = vector.broadcast %196 : vector<1x32xf32> to vector<8x32xf32>
    %218 = arith.addf %216, %217 : vector<8x32xf32>
    %c1 = arith.constant 1 : index
    %c0_94 = arith.constant 0 : index
    %c0_95 = arith.constant 0 : index
    %219 = vector.load %arg6[%c1, %c0_94, %c0_95] : memref<2x32x96xf32, #tpu.memory_space<vmem>>, vector<1x32x96xf32>
    %220 = vector.shape_cast %219 : vector<1x32x96xf32> to vector<32x96xf32>
    %cst_96 = arith.constant dense<0.000000e+00> : vector<8x96xf32>
    %221 = tpu.matmul %218, %220, %cst_96 {dimension_numbers = #tpu.dot_dimension_numbers<[1], [0], [0], [1], [0, 0, 1, 1], [], []>} : vector<8x32xf32>, vector<32x96xf32>, vector<8x96xf32> -> vector<8x96xf32>
    %c1_97 = arith.constant 1 : index
    %c0_98 = arith.constant 0 : index
    %c0_99 = arith.constant 0 : index
    %222 = vector.load %arg7[%c1_97, %c0_98, %c0_99] : memref<2x1x96xf32, #tpu.memory_space<vmem>>, vector<1x1x96xf32>
    %223 = vector.shape_cast %222 : vector<1x1x96xf32> to vector<1x96xf32>
    %224 = vector.broadcast %223 : vector<1x96xf32> to vector<8x96xf32>
    %225 = arith.addf %221, %224 : vector<8x96xf32>
    %c1_100 = arith.constant 1 : index
    %c0_101 = arith.constant 0 : index
    %c0_102 = arith.constant 0 : index
    %226 = vector.load %arg8[%c1_100, %c0_101, %c0_102] : memref<2x32x32xf32, #tpu.memory_space<vmem>>, vector<1x32x32xf32>
    %227 = vector.shape_cast %226 : vector<1x32x32xf32> to vector<32x32xf32>
    %cst_103 = arith.constant 0.000000e+00 : f32
    %228 = vector.broadcast %cst_103 : f32 to vector<8x32xf32>
    %229 = vector.extract_strided_slice %225 {offsets = [0, 0], sizes = [8, 8], strides = [1, 1]} : vector<8x96xf32> to vector<8x8xf32>
    %230 = vector.extract_strided_slice %225 {offsets = [0, 32], sizes = [8, 8], strides = [1, 1]} : vector<8x96xf32> to vector<8x8xf32>
    %231 = vector.extract_strided_slice %225 {offsets = [0, 64], sizes = [8, 8], strides = [1, 1]} : vector<8x96xf32> to vector<8x8xf32>
    %232 = tpu.transpose %230, [1, 0] : vector<8x8xf32> -> vector<8x8xf32>
    %cst_104 = arith.constant dense<0.000000e+00> : vector<8x8xf32>
    %233 = tpu.matmul %229, %232, %cst_104 {dimension_numbers = #tpu.dot_dimension_numbers<[1], [0], [0], [1], [0, 0, 1, 1], [], []>} : vector<8x8xf32>, vector<8x8xf32>, vector<8x8xf32> -> vector<8x8xf32>
    %cst_105 = arith.constant 0.353553385 : f32
    %234 = vector.broadcast %cst_105 : f32 to vector<8x8xf32>
    %235 = arith.mulf %233, %234 : vector<8x8xf32>
    %236 = vector.broadcast %31 : vector<1x8xf32> to vector<8x8xf32>
    %237 = arith.addf %235, %236 : vector<8x8xf32>
    %cst_106 = arith.constant dense<0xFF800000> : vector<8xf32>
    %238 = vector.multi_reduction <maximumf>, %237, %cst_106 [1] : vector<8x8xf32> to vector<8xf32>
    %239 = vector.shape_cast %238 : vector<8xf32> to vector<8x1xf32>
    %240 = vector.broadcast %239 : vector<8x1xf32> to vector<8x8xf32>
    %241 = arith.subf %237, %240 : vector<8x8xf32>
    %242 = math.exp %241 : vector<8x8xf32>
    %cst_107 = arith.constant dense<0.000000e+00> : vector<8xf32>
    %243 = vector.multi_reduction <add>, %242, %cst_107 [1] : vector<8x8xf32> to vector<8xf32>
    %244 = vector.shape_cast %243 : vector<8xf32> to vector<8x1xf32>
    %245 = tpu.reciprocal %244 {approx = true} : vector<8x1xf32> -> vector<8x1xf32>
    %246 = vector.broadcast %245 : vector<8x1xf32> to vector<8x8xf32>
    %247 = arith.mulf %242, %246 : vector<8x8xf32>
    %cst_108 = arith.constant dense<0.000000e+00> : vector<8x8xf32>
    %248 = tpu.matmul %247, %231, %cst_108 {dimension_numbers = #tpu.dot_dimension_numbers<[1], [0], [0], [1], [0, 0, 1, 1], [], []>} : vector<8x8xf32>, vector<8x8xf32>, vector<8x8xf32> -> vector<8x8xf32>
    %249 = vector.extract_strided_slice %227 {offsets = [0, 0], sizes = [8, 32], strides = [1, 1]} : vector<32x32xf32> to vector<8x32xf32>
    %cst_109 = arith.constant dense<0.000000e+00> : vector<8x32xf32>
    %250 = tpu.matmul %248, %249, %cst_109 {dimension_numbers = #tpu.dot_dimension_numbers<[1], [0], [0], [1], [0, 0, 1, 1], [], []>} : vector<8x8xf32>, vector<8x32xf32>, vector<8x32xf32> -> vector<8x32xf32>
    %251 = arith.addf %228, %250 : vector<8x32xf32>
    %252 = vector.extract_strided_slice %225 {offsets = [0, 8], sizes = [8, 8], strides = [1, 1]} : vector<8x96xf32> to vector<8x8xf32>
    %253 = vector.extract_strided_slice %225 {offsets = [0, 40], sizes = [8, 8], strides = [1, 1]} : vector<8x96xf32> to vector<8x8xf32>
    %254 = vector.extract_strided_slice %225 {offsets = [0, 72], sizes = [8, 8], strides = [1, 1]} : vector<8x96xf32> to vector<8x8xf32>
    %255 = tpu.transpose %253, [1, 0] : vector<8x8xf32> -> vector<8x8xf32>
    %cst_110 = arith.constant dense<0.000000e+00> : vector<8x8xf32>
    %256 = tpu.matmul %252, %255, %cst_110 {dimension_numbers = #tpu.dot_dimension_numbers<[1], [0], [0], [1], [0, 0, 1, 1], [], []>} : vector<8x8xf32>, vector<8x8xf32>, vector<8x8xf32> -> vector<8x8xf32>
    %cst_111 = arith.constant 0.353553385 : f32
    %257 = vector.broadcast %cst_111 : f32 to vector<8x8xf32>
    %258 = arith.mulf %256, %257 : vector<8x8xf32>
    %259 = vector.broadcast %31 : vector<1x8xf32> to vector<8x8xf32>
    %260 = arith.addf %258, %259 : vector<8x8xf32>
    %cst_112 = arith.constant dense<0xFF800000> : vector<8xf32>
    %261 = vector.multi_reduction <maximumf>, %260, %cst_112 [1] : vector<8x8xf32> to vector<8xf32>
    %262 = vector.shape_cast %261 : vector<8xf32> to vector<8x1xf32>
    %263 = vector.broadcast %262 : vector<8x1xf32> to vector<8x8xf32>
    %264 = arith.subf %260, %263 : vector<8x8xf32>
    %265 = math.exp %264 : vector<8x8xf32>
    %cst_113 = arith.constant dense<0.000000e+00> : vector<8xf32>
    %266 = vector.multi_reduction <add>, %265, %cst_113 [1] : vector<8x8xf32> to vector<8xf32>
    %267 = vector.shape_cast %266 : vector<8xf32> to vector<8x1xf32>
    %268 = tpu.reciprocal %267 {approx = true} : vector<8x1xf32> -> vector<8x1xf32>
    %269 = vector.broadcast %268 : vector<8x1xf32> to vector<8x8xf32>
    %270 = arith.mulf %265, %269 : vector<8x8xf32>
    %cst_114 = arith.constant dense<0.000000e+00> : vector<8x8xf32>
    %271 = tpu.matmul %270, %254, %cst_114 {dimension_numbers = #tpu.dot_dimension_numbers<[1], [0], [0], [1], [0, 0, 1, 1], [], []>} : vector<8x8xf32>, vector<8x8xf32>, vector<8x8xf32> -> vector<8x8xf32>
    %272 = vector.extract_strided_slice %227 {offsets = [8, 0], sizes = [8, 32], strides = [1, 1]} : vector<32x32xf32> to vector<8x32xf32>
    %cst_115 = arith.constant dense<0.000000e+00> : vector<8x32xf32>
    %273 = tpu.matmul %271, %272, %cst_115 {dimension_numbers = #tpu.dot_dimension_numbers<[1], [0], [0], [1], [0, 0, 1, 1], [], []>} : vector<8x8xf32>, vector<8x32xf32>, vector<8x32xf32> -> vector<8x32xf32>
    %274 = arith.addf %251, %273 : vector<8x32xf32>
    %275 = vector.extract_strided_slice %225 {offsets = [0, 16], sizes = [8, 8], strides = [1, 1]} : vector<8x96xf32> to vector<8x8xf32>
    %276 = vector.extract_strided_slice %225 {offsets = [0, 48], sizes = [8, 8], strides = [1, 1]} : vector<8x96xf32> to vector<8x8xf32>
    %277 = vector.extract_strided_slice %225 {offsets = [0, 80], sizes = [8, 8], strides = [1, 1]} : vector<8x96xf32> to vector<8x8xf32>
    %278 = tpu.transpose %276, [1, 0] : vector<8x8xf32> -> vector<8x8xf32>
    %cst_116 = arith.constant dense<0.000000e+00> : vector<8x8xf32>
    %279 = tpu.matmul %275, %278, %cst_116 {dimension_numbers = #tpu.dot_dimension_numbers<[1], [0], [0], [1], [0, 0, 1, 1], [], []>} : vector<8x8xf32>, vector<8x8xf32>, vector<8x8xf32> -> vector<8x8xf32>
    %cst_117 = arith.constant 0.353553385 : f32
    %280 = vector.broadcast %cst_117 : f32 to vector<8x8xf32>
    %281 = arith.mulf %279, %280 : vector<8x8xf32>
    %282 = vector.broadcast %31 : vector<1x8xf32> to vector<8x8xf32>
    %283 = arith.addf %281, %282 : vector<8x8xf32>
    %cst_118 = arith.constant dense<0xFF800000> : vector<8xf32>
    %284 = vector.multi_reduction <maximumf>, %283, %cst_118 [1] : vector<8x8xf32> to vector<8xf32>
    %285 = vector.shape_cast %284 : vector<8xf32> to vector<8x1xf32>
    %286 = vector.broadcast %285 : vector<8x1xf32> to vector<8x8xf32>
    %287 = arith.subf %283, %286 : vector<8x8xf32>
    %288 = math.exp %287 : vector<8x8xf32>
    %cst_119 = arith.constant dense<0.000000e+00> : vector<8xf32>
    %289 = vector.multi_reduction <add>, %288, %cst_119 [1] : vector<8x8xf32> to vector<8xf32>
    %290 = vector.shape_cast %289 : vector<8xf32> to vector<8x1xf32>
    %291 = tpu.reciprocal %290 {approx = true} : vector<8x1xf32> -> vector<8x1xf32>
    %292 = vector.broadcast %291 : vector<8x1xf32> to vector<8x8xf32>
    %293 = arith.mulf %288, %292 : vector<8x8xf32>
    %cst_120 = arith.constant dense<0.000000e+00> : vector<8x8xf32>
    %294 = tpu.matmul %293, %277, %cst_120 {dimension_numbers = #tpu.dot_dimension_numbers<[1], [0], [0], [1], [0, 0, 1, 1], [], []>} : vector<8x8xf32>, vector<8x8xf32>, vector<8x8xf32> -> vector<8x8xf32>
    %295 = vector.extract_strided_slice %227 {offsets = [16, 0], sizes = [8, 32], strides = [1, 1]} : vector<32x32xf32> to vector<8x32xf32>
    %cst_121 = arith.constant dense<0.000000e+00> : vector<8x32xf32>
    %296 = tpu.matmul %294, %295, %cst_121 {dimension_numbers = #tpu.dot_dimension_numbers<[1], [0], [0], [1], [0, 0, 1, 1], [], []>} : vector<8x8xf32>, vector<8x32xf32>, vector<8x32xf32> -> vector<8x32xf32>
    %297 = arith.addf %274, %296 : vector<8x32xf32>
    %298 = vector.extract_strided_slice %225 {offsets = [0, 24], sizes = [8, 8], strides = [1, 1]} : vector<8x96xf32> to vector<8x8xf32>
    %299 = vector.extract_strided_slice %225 {offsets = [0, 56], sizes = [8, 8], strides = [1, 1]} : vector<8x96xf32> to vector<8x8xf32>
    %300 = vector.extract_strided_slice %225 {offsets = [0, 88], sizes = [8, 8], strides = [1, 1]} : vector<8x96xf32> to vector<8x8xf32>
    %301 = tpu.transpose %299, [1, 0] : vector<8x8xf32> -> vector<8x8xf32>
    %cst_122 = arith.constant dense<0.000000e+00> : vector<8x8xf32>
    %302 = tpu.matmul %298, %301, %cst_122 {dimension_numbers = #tpu.dot_dimension_numbers<[1], [0], [0], [1], [0, 0, 1, 1], [], []>} : vector<8x8xf32>, vector<8x8xf32>, vector<8x8xf32> -> vector<8x8xf32>
    %cst_123 = arith.constant 0.353553385 : f32
    %303 = vector.broadcast %cst_123 : f32 to vector<8x8xf32>
    %304 = arith.mulf %302, %303 : vector<8x8xf32>
    %305 = vector.broadcast %31 : vector<1x8xf32> to vector<8x8xf32>
    %306 = arith.addf %304, %305 : vector<8x8xf32>
    %cst_124 = arith.constant dense<0xFF800000> : vector<8xf32>
    %307 = vector.multi_reduction <maximumf>, %306, %cst_124 [1] : vector<8x8xf32> to vector<8xf32>
    %308 = vector.shape_cast %307 : vector<8xf32> to vector<8x1xf32>
    %309 = vector.broadcast %308 : vector<8x1xf32> to vector<8x8xf32>
    %310 = arith.subf %306, %309 : vector<8x8xf32>
    %311 = math.exp %310 : vector<8x8xf32>
    %cst_125 = arith.constant dense<0.000000e+00> : vector<8xf32>
    %312 = vector.multi_reduction <add>, %311, %cst_125 [1] : vector<8x8xf32> to vector<8xf32>
    %313 = vector.shape_cast %312 : vector<8xf32> to vector<8x1xf32>
    %314 = tpu.reciprocal %313 {approx = true} : vector<8x1xf32> -> vector<8x1xf32>
    %315 = vector.broadcast %314 : vector<8x1xf32> to vector<8x8xf32>
    %316 = arith.mulf %311, %315 : vector<8x8xf32>
    %cst_126 = arith.constant dense<0.000000e+00> : vector<8x8xf32>
    %317 = tpu.matmul %316, %300, %cst_126 {dimension_numbers = #tpu.dot_dimension_numbers<[1], [0], [0], [1], [0, 0, 1, 1], [], []>} : vector<8x8xf32>, vector<8x8xf32>, vector<8x8xf32> -> vector<8x8xf32>
    %318 = vector.extract_strided_slice %227 {offsets = [24, 0], sizes = [8, 32], strides = [1, 1]} : vector<32x32xf32> to vector<8x32xf32>
    %cst_127 = arith.constant dense<0.000000e+00> : vector<8x32xf32>
    %319 = tpu.matmul %317, %318, %cst_127 {dimension_numbers = #tpu.dot_dimension_numbers<[1], [0], [0], [1], [0, 0, 1, 1], [], []>} : vector<8x8xf32>, vector<8x32xf32>, vector<8x32xf32> -> vector<8x32xf32>
    %320 = arith.addf %297, %319 : vector<8x32xf32>
    %c1_128 = arith.constant 1 : index
    %c0_129 = arith.constant 0 : index
    %c0_130 = arith.constant 0 : index
    %321 = vector.load %arg9[%c1_128, %c0_129, %c0_130] : memref<2x1x32xf32, #tpu.memory_space<vmem>>, vector<1x1x32xf32>
    %322 = vector.shape_cast %321 : vector<1x1x32xf32> to vector<1x32xf32>
    %323 = vector.broadcast %322 : vector<1x32xf32> to vector<8x32xf32>
    %324 = arith.addf %320, %323 : vector<8x32xf32>
    %325 = arith.addf %324, %218 : vector<8x32xf32>
    %c1_131 = arith.constant 1 : index
    %c0_132 = arith.constant 0 : index
    %c0_133 = arith.constant 0 : index
    %326 = vector.load %arg10[%c1_131, %c0_132, %c0_133] : memref<2x1x32xf32, #tpu.memory_space<vmem>>, vector<1x1x32xf32>
    %327 = vector.shape_cast %326 : vector<1x1x32xf32> to vector<1x32xf32>
    %c1_134 = arith.constant 1 : index
    %c0_135 = arith.constant 0 : index
    %c0_136 = arith.constant 0 : index
    %328 = vector.load %arg11[%c1_134, %c0_135, %c0_136] : memref<2x1x32xf32, #tpu.memory_space<vmem>>, vector<1x1x32xf32>
    %329 = vector.shape_cast %328 : vector<1x1x32xf32> to vector<1x32xf32>
    %cst_137 = arith.constant dense<0.000000e+00> : vector<8xf32>
    %330 = vector.multi_reduction <add>, %325, %cst_137 [1] : vector<8x32xf32> to vector<8xf32>
    %331 = vector.shape_cast %330 : vector<8xf32> to vector<8x1xf32>
    %cst_138 = arith.constant 3.200000e+01 : f32
    %332 = vector.broadcast %cst_138 : f32 to vector<8x1xf32>
    %333 = arith.divf %331, %332 : vector<8x1xf32>
    %334 = vector.broadcast %333 : vector<8x1xf32> to vector<8x32xf32>
    %335 = arith.subf %325, %334 : vector<8x32xf32>
    %336 = arith.mulf %335, %335 : vector<8x32xf32>
    %cst_139 = arith.constant dense<0.000000e+00> : vector<8xf32>
    %337 = vector.multi_reduction <add>, %336, %cst_139 [1] : vector<8x32xf32> to vector<8xf32>
    %338 = vector.shape_cast %337 : vector<8xf32> to vector<8x1xf32>
    %cst_140 = arith.constant 3.200000e+01 : f32
    %339 = vector.broadcast %cst_140 : f32 to vector<8x1xf32>
    %340 = arith.divf %338, %339 : vector<8x1xf32>
    %341 = vector.broadcast %333 : vector<8x1xf32> to vector<8x32xf32>
    %342 = arith.subf %325, %341 : vector<8x32xf32>
    %cst_141 = arith.constant 1.000000e-07 : f32
    %343 = vector.broadcast %cst_141 : f32 to vector<8x1xf32>
    %344 = arith.addf %340, %343 : vector<8x1xf32>
    %345 = math.rsqrt %344 : vector<8x1xf32>
    %346 = vector.broadcast %345 : vector<8x1xf32> to vector<8x32xf32>
    %347 = arith.mulf %342, %346 : vector<8x32xf32>
    %348 = vector.broadcast %327 : vector<1x32xf32> to vector<8x32xf32>
    %349 = arith.mulf %347, %348 : vector<8x32xf32>
    %350 = vector.broadcast %329 : vector<1x32xf32> to vector<8x32xf32>
    %351 = arith.addf %349, %350 : vector<8x32xf32>
    %c1_142 = arith.constant 1 : index
    %c0_143 = arith.constant 0 : index
    %c0_144 = arith.constant 0 : index
    %352 = vector.load %arg12[%c1_142, %c0_143, %c0_144] : memref<2x32x64xf32, #tpu.memory_space<vmem>>, vector<1x32x64xf32>
    %353 = vector.shape_cast %352 : vector<1x32x64xf32> to vector<32x64xf32>
    %cst_145 = arith.constant dense<0.000000e+00> : vector<8x64xf32>
    %354 = tpu.matmul %351, %353, %cst_145 {dimension_numbers = #tpu.dot_dimension_numbers<[1], [0], [0], [1], [0, 0, 1, 1], [], []>} : vector<8x32xf32>, vector<32x64xf32>, vector<8x64xf32> -> vector<8x64xf32>
    %c1_146 = arith.constant 1 : index
    %c0_147 = arith.constant 0 : index
    %c0_148 = arith.constant 0 : index
    %355 = vector.load %arg13[%c1_146, %c0_147, %c0_148] : memref<2x1x64xf32, #tpu.memory_space<vmem>>, vector<1x1x64xf32>
    %356 = vector.shape_cast %355 : vector<1x1x64xf32> to vector<1x64xf32>
    %357 = vector.broadcast %356 : vector<1x64xf32> to vector<8x64xf32>
    %358 = arith.addf %354, %357 : vector<8x64xf32>
    %cst_149 = arith.constant 5.000000e-01 : f32
    %359 = vector.broadcast %cst_149 : f32 to vector<8x64xf32>
    %360 = arith.mulf %359, %358 : vector<8x64xf32>
    %cst_150 = arith.constant 4.471500e-02 : f32
    %361 = vector.broadcast %cst_150 : f32 to vector<8x64xf32>
    %362 = arith.mulf %361, %358 : vector<8x64xf32>
    %363 = arith.mulf %362, %358 : vector<8x64xf32>
    %364 = arith.mulf %363, %358 : vector<8x64xf32>
    %365 = arith.addf %358, %364 : vector<8x64xf32>
    %cst_151 = arith.constant 0.797884583 : f32
    %366 = vector.broadcast %cst_151 : f32 to vector<8x64xf32>
    %367 = arith.mulf %366, %365 : vector<8x64xf32>
    %368 = math.tanh %367 : vector<8x64xf32>
    %cst_152 = arith.constant 1.000000e+00 : f32
    %369 = vector.broadcast %cst_152 : f32 to vector<8x64xf32>
    %370 = arith.addf %369, %368 : vector<8x64xf32>
    %371 = arith.mulf %360, %370 : vector<8x64xf32>
    %c1_153 = arith.constant 1 : index
    %c0_154 = arith.constant 0 : index
    %c0_155 = arith.constant 0 : index
    %372 = vector.load %arg14[%c1_153, %c0_154, %c0_155] : memref<2x64x32xf32, #tpu.memory_space<vmem>>, vector<1x64x32xf32>
    %373 = vector.shape_cast %372 : vector<1x64x32xf32> to vector<64x32xf32>
    %cst_156 = arith.constant dense<0.000000e+00> : vector<8x32xf32>
    %374 = tpu.matmul %371, %373, %cst_156 {dimension_numbers = #tpu.dot_dimension_numbers<[1], [0], [0], [1], [0, 0, 1, 1], [], []>} : vector<8x64xf32>, vector<64x32xf32>, vector<8x32xf32> -> vector<8x32xf32>
    %c1_157 = arith.constant 1 : index
    %c0_158 = arith.constant 0 : index
    %c0_159 = arith.constant 0 : index
    %375 = vector.load %arg15[%c1_157, %c0_158, %c0_159] : memref<2x1x32xf32, #tpu.memory_space<vmem>>, vector<1x1x32xf32>
    %376 = vector.shape_cast %375 : vector<1x1x32xf32> to vector<1x32xf32>
    %377 = vector.broadcast %376 : vector<1x32xf32> to vector<8x32xf32>
    %378 = arith.addf %374, %377 : vector<8x32xf32>
    %379 = arith.addf %378, %351 : vector<8x32xf32>
    %c1_160 = arith.constant 1 : index
    %c0_161 = arith.constant 0 : index
    %c0_162 = arith.constant 0 : index
    %380 = vector.load %arg16[%c1_160, %c0_161, %c0_162] : memref<2x1x32xf32, #tpu.memory_space<vmem>>, vector<1x1x32xf32>
    %381 = vector.shape_cast %380 : vector<1x1x32xf32> to vector<1x32xf32>
    %c1_163 = arith.constant 1 : index
    %c0_164 = arith.constant 0 : index
    %c0_165 = arith.constant 0 : index
    %382 = vector.load %arg17[%c1_163, %c0_164, %c0_165] : memref<2x1x32xf32, #tpu.memory_space<vmem>>, vector<1x1x32xf32>
    %383 = vector.shape_cast %382 : vector<1x1x32xf32> to vector<1x32xf32>
    %cst_166 = arith.constant dense<0.000000e+00> : vector<8xf32>
    %384 = vector.multi_reduction <add>, %379, %cst_166 [1] : vector<8x32xf32> to vector<8xf32>
    %385 = vector.shape_cast %384 : vector<8xf32> to vector<8x1xf32>
    %cst_167 = arith.constant 3.200000e+01 : f32
    %386 = vector.broadcast %cst_167 : f32 to vector<8x1xf32>
    %387 = arith.divf %385, %386 : vector<8x1xf32>
    %388 = vector.broadcast %387 : vector<8x1xf32> to vector<8x32xf32>
    %389 = arith.subf %379, %388 : vector<8x32xf32>
    %390 = arith.mulf %389, %389 : vector<8x32xf32>
    %cst_168 = arith.constant dense<0.000000e+00> : vector<8xf32>
    %391 = vector.multi_reduction <add>, %390, %cst_168 [1] : vector<8x32xf32> to vector<8xf32>
    %392 = vector.shape_cast %391 : vector<8xf32> to vector<8x1xf32>
    %cst_169 = arith.constant 3.200000e+01 : f32
    %393 = vector.broadcast %cst_169 : f32 to vector<8x1xf32>
    %394 = arith.divf %392, %393 : vector<8x1xf32>
    %395 = vector.broadcast %387 : vector<8x1xf32> to vector<8x32xf32>
    %396 = arith.subf %379, %395 : vector<8x32xf32>
    %cst_170 = arith.constant 1.000000e-07 : f32
    %397 = vector.broadcast %cst_170 : f32 to vector<8x1xf32>
    %398 = arith.addf %394, %397 : vector<8x1xf32>
    %399 = math.rsqrt %398 : vector<8x1xf32>
    %400 = vector.broadcast %399 : vector<8x1xf32> to vector<8x32xf32>
    %401 = arith.mulf %396, %400 : vector<8x32xf32>
    %402 = vector.broadcast %381 : vector<1x32xf32> to vector<8x32xf32>
    %403 = arith.mulf %401, %402 : vector<8x32xf32>
    %404 = vector.broadcast %383 : vector<1x32xf32> to vector<8x32xf32>
    %405 = arith.addf %403, %404 : vector<8x32xf32>
    %406 = vector.extract_strided_slice %405 {offsets = [0, 0], sizes = [1, 32], strides = [1, 1]} : vector<8x32xf32> to vector<1x32xf32>
    %c0_171 = arith.constant 0 : index
    %c0_172 = arith.constant 0 : index
    %407 = vector.load %arg18[%c0_171, %c0_172] : memref<32x32xf32, #tpu.memory_space<vmem>>, vector<32x32xf32>
    %cst_173 = arith.constant dense<0.000000e+00> : vector<1x32xf32>
    %408 = tpu.matmul %406, %407, %cst_173 {dimension_numbers = #tpu.dot_dimension_numbers<[1], [0], [0], [1], [0, 0, 1, 1], [], []>} : vector<1x32xf32>, vector<32x32xf32>, vector<1x32xf32> -> vector<1x32xf32>
    %c0_174 = arith.constant 0 : index
    %c0_175 = arith.constant 0 : index
    %409 = vector.load %arg19[%c0_174, %c0_175] : memref<1x32xf32, #tpu.memory_space<vmem>>, vector<1x32xf32>
    %410 = arith.addf %408, %409 : vector<1x32xf32>
    %cst_176 = arith.constant 5.000000e-01 : f32
    %411 = vector.broadcast %cst_176 : f32 to vector<1x32xf32>
    %412 = arith.mulf %411, %410 : vector<1x32xf32>
    %cst_177 = arith.constant 4.471500e-02 : f32
    %413 = vector.broadcast %cst_177 : f32 to vector<1x32xf32>
    %414 = arith.mulf %413, %410 : vector<1x32xf32>
    %415 = arith.mulf %414, %410 : vector<1x32xf32>
    %416 = arith.mulf %415, %410 : vector<1x32xf32>
    %417 = arith.addf %410, %416 : vector<1x32xf32>
    %cst_178 = arith.constant 0.797884583 : f32
    %418 = vector.broadcast %cst_178 : f32 to vector<1x32xf32>
    %419 = arith.mulf %418, %417 : vector<1x32xf32>
    %420 = math.tanh %419 : vector<1x32xf32>
    %cst_179 = arith.constant 1.000000e+00 : f32
    %421 = vector.broadcast %cst_179 : f32 to vector<1x32xf32>
    %422 = arith.addf %421, %420 : vector<1x32xf32>
    %423 = arith.mulf %412, %422 : vector<1x32xf32>
    %c0_180 = arith.constant 0 : index
    %c0_181 = arith.constant 0 : index
    %424 = vector.load %arg20[%c0_180, %c0_181] : memref<32x3xf32, #tpu.memory_space<vmem>>, vector<32x3xf32>
    %cst_182 = arith.constant dense<0.000000e+00> : vector<1x3xf32>
    %425 = tpu.matmul %423, %424, %cst_182 {dimension_numbers = #tpu.dot_dimension_numbers<[1], [0], [0], [1], [0, 0, 1, 1], [], []>} : vector<1x32xf32>, vector<32x3xf32>, vector<1x3xf32> -> vector<1x3xf32>
    %c0_183 = arith.constant 0 : index
    %c0_184 = arith.constant 0 : index
    %426 = vector.load %arg21[%c0_183, %c0_184] : memref<1x3xf32, #tpu.memory_space<vmem>>, vector<1x3xf32>
    %427 = arith.addf %425, %426 : vector<1x3xf32>
    %c0_185 = arith.constant 0 : index
    %c0_186 = arith.constant 0 : index
    %c0_187 = arith.constant 0 : index
    %428 = vector.load %arg22[%c0_185, %c0_186, %c0_187] : memref<1x1x3xf32, #tpu.memory_space<vmem>>, vector<1x1x3xf32>
    %429 = vector.shape_cast %428 : vector<1x1x3xf32> to vector<1x3xf32>
    %430 = vector.shape_cast %427 : vector<1x3xf32> to vector<1x1x3xf32>
    tpu.vector_store %arg22[%c0_185, %c0_186, %c0_187], %430 {strides = array<i32>} : memref<1x1x3xf32, #tpu.memory_space<vmem>>, vector<1x1x3xf32>,
    %cst_188 = arith.constant 0.000000e+00 : f32
    %431 = vector.broadcast %cst_188 : f32 to vector<1x3xf32>
    %432 = arith.subf %431, %427 : vector<1x3xf32>
    %433 = math.exp %432 : vector<1x3xf32>
    %cst_189 = arith.constant 1.000000e+00 : f32
    %434 = vector.broadcast %cst_189 : f32 to vector<1x3xf32>
    %435 = arith.addf %434, %433 : vector<1x3xf32>
    %cst_190 = arith.constant 1.000000e+00 : f32
    %436 = vector.broadcast %cst_190 : f32 to vector<1x3xf32>
    %437 = arith.divf %436, %435 : vector<1x3xf32>
    %c0_191 = arith.constant 0 : index
    %c0_192 = arith.constant 0 : index
    %c0_193 = arith.constant 0 : index
    %438 = vector.load %arg23[%c0_191, %c0_192, %c0_193] : memref<1x1x3xf32, #tpu.memory_space<vmem>>, vector<1x1x3xf32>
    %439 = vector.shape_cast %438 : vector<1x1x3xf32> to vector<1x3xf32>
    %440 = vector.shape_cast %437 : vector<1x3xf32> to vector<1x1x3xf32>
    tpu.vector_store %arg23[%c0_191, %c0_192, %c0_193], %440 {strides = array<i32>} : memref<1x1x3xf32, #tpu.memory_space<vmem>>, vector<1x1x3xf32>,
    return
  }
  func.func @transform_0(%arg0: i32) -> (i32, i32, i32) {
    %c0_i32 = arith.constant 0 : i32
    %c0_i32_0 = arith.constant 0 : i32
    %c0_i32_1 = arith.constant 0 : i32
    return %arg0, %c0_i32, %c0_i32_0 : i32, i32, i32
  }
  func.func @transform_1(%arg0: i32) -> (i32, i32, i32) {
    %c0_i32 = arith.constant 0 : i32
    %c0_i32_0 = arith.constant 0 : i32
    %c0_i32_1 = arith.constant 0 : i32
    return %arg0, %c0_i32, %c0_i32_0 : i32, i32, i32
  }
  func.func @transform_2(%arg0: i32) -> (i32, i32, i32) {
    %c0_i32 = arith.constant 0 : i32
    %c0_i32_0 = arith.constant 0 : i32
    %c0_i32_1 = arith.constant 0 : i32
    return %arg0, %c0_i32, %c0_i32_0 : i32, i32, i32
  }
  func.func @transform_3(%arg0: i32) -> (i32, i32) {
    %c0_i32 = arith.constant 0 : i32
    %c0_i32_0 = arith.constant 0 : i32
    %c0_i32_1 = arith.constant 0 : i32
    return %c0_i32, %c0_i32_0 : i32, i32
  }
  func.func @transform_4(%arg0: i32) -> (i32, i32) {
    %c0_i32 = arith.constant 0 : i32
    %c0_i32_0 = arith.constant 0 : i32
    %c0_i32_1 = arith.constant 0 : i32
    return %c0_i32, %c0_i32_0 : i32, i32
  }
  func.func @transform_5(%arg0: i32) -> (i32, i32, i32) {
    %c0_i32 = arith.constant 0 : i32
    %c0_i32_0 = arith.constant 0 : i32
    %c0_i32_1 = arith.constant 0 : i32
    %c0_i32_2 = arith.constant 0 : i32
    return %c0_i32, %c0_i32_0, %c0_i32_1 : i32, i32, i32
  }
  func.func @transform_6(%arg0: i32) -> (i32, i32, i32) {
    %c0_i32 = arith.constant 0 : i32
    %c0_i32_0 = arith.constant 0 : i32
    %c0_i32_1 = arith.constant 0 : i32
    %c0_i32_2 = arith.constant 0 : i32
    return %c0_i32, %c0_i32_0, %c0_i32_1 : i32, i32, i32
  }
  func.func @transform_7(%arg0: i32) -> (i32, i32, i32) {
    %c0_i32 = arith.constant 0 : i32
    %c0_i32_0 = arith.constant 0 : i32
    %c0_i32_1 = arith.constant 0 : i32
    %c0_i32_2 = arith.constant 0 : i32
    return %c0_i32, %c0_i32_0, %c0_i32_1 : i32, i32, i32
  }
  func.func @transform_8(%arg0: i32) -> (i32, i32, i32) {
    %c0_i32 = arith.constant 0 : i32
    %c0_i32_0 = arith.constant 0 : i32
    %c0_i32_1 = arith.constant 0 : i32
    %c0_i32_2 = arith.constant 0 : i32
    return %c0_i32, %c0_i32_0, %c0_i32_1 : i32, i32, i32
  }
  func.func @transform_9(%arg0: i32) -> (i32, i32, i32) {
    %c0_i32 = arith.constant 0 : i32
    %c0_i32_0 = arith.constant 0 : i32
    %c0_i32_1 = arith.constant 0 : i32
    %c0_i32_2 = arith.constant 0 : i32
    return %c0_i32, %c0_i32_0, %c0_i32_1 : i32, i32, i32
  }
  func.func @transform_10(%arg0: i32) -> (i32, i32, i32) {
    %c0_i32 = arith.constant 0 : i32
    %c0_i32_0 = arith.constant 0 : i32
    %c0_i32_1 = arith.constant 0 : i32
    %c0_i32_2 = arith.constant 0 : i32
    return %c0_i32, %c0_i32_0, %c0_i32_1 : i32, i32, i32
  }
  func.func @transform_11(%arg0: i32) -> (i32, i32, i32) {
    %c0_i32 = arith.constant 0 : i32
    %c0_i32_0 = arith.constant 0 : i32
    %c0_i32_1 = arith.constant 0 : i32
    %c0_i32_2 = arith.constant 0 : i32
    return %c0_i32, %c0_i32_0, %c0_i32_1 : i32, i32, i32
  }
  func.func @transform_12(%arg0: i32) -> (i32, i32, i32) {
    %c0_i32 = arith.constant 0 : i32
    %c0_i32_0 = arith.constant 0 : i32
    %c0_i32_1 = arith.constant 0 : i32
    %c0_i32_2 = arith.constant 0 : i32
    return %c0_i32, %c0_i32_0, %c0_i32_1 : i32, i32, i32
  }
  func.func @transform_13(%arg0: i32) -> (i32, i32, i32) {
    %c0_i32 = arith.constant 0 : i32
    %c0_i32_0 = arith.constant 0 : i32
    %c0_i32_1 = arith.constant 0 : i32
    %c0_i32_2 = arith.constant 0 : i32
    return %c0_i32, %c0_i32_0, %c0_i32_1 : i32, i32, i32
  }
  func.func @transform_14(%arg0: i32) -> (i32, i32, i32) {
    %c0_i32 = arith.constant 0 : i32
    %c0_i32_0 = arith.constant 0 : i32
    %c0_i32_1 = arith.constant 0 : i32
    %c0_i32_2 = arith.constant 0 : i32
    return %c0_i32, %c0_i32_0, %c0_i32_1 : i32, i32, i32
  }
  func.func @transform_15(%arg0: i32) -> (i32, i32, i32) {
    %c0_i32 = arith.constant 0 : i32
    %c0_i32_0 = arith.constant 0 : i32
    %c0_i32_1 = arith.constant 0 : i32
    %c0_i32_2 = arith.constant 0 : i32
    return %c0_i32, %c0_i32_0, %c0_i32_1 : i32, i32, i32
  }
  func.func @transform_16(%arg0: i32) -> (i32, i32, i32) {
    %c0_i32 = arith.constant 0 : i32
    %c0_i32_0 = arith.constant 0 : i32
    %c0_i32_1 = arith.constant 0 : i32
    %c0_i32_2 = arith.constant 0 : i32
    return %c0_i32, %c0_i32_0, %c0_i32_1 : i32, i32, i32
  }
  func.func @transform_17(%arg0: i32) -> (i32, i32) {
    %c0_i32 = arith.constant 0 : i32
    %c0_i32_0 = arith.constant 0 : i32
    %c0_i32_1 = arith.constant 0 : i32
    return %c0_i32, %c0_i32_0 : i32, i32
  }
  func.func @transform_18(%arg0: i32) -> (i32, i32) {
    %c0_i32 = arith.constant 0 : i32
    %c0_i32_0 = arith.constant 0 : i32
    %c0_i32_1 = arith.constant 0 : i32
    return %c0_i32, %c0_i32_0 : i32, i32
  }
  func.func @transform_19(%arg0: i32) -> (i32, i32) {
    %c0_i32 = arith.constant 0 : i32
    %c0_i32_0 = arith.constant 0 : i32
    %c0_i32_1 = arith.constant 0 : i32
    return %c0_i32, %c0_i32_0 : i32, i32
  }
  func.func @transform_20(%arg0: i32) -> (i32, i32) {
    %c0_i32 = arith.constant 0 : i32
    %c0_i32_0 = arith.constant 0 : i32
    %c0_i32_1 = arith.constant 0 : i32
    return %c0_i32, %c0_i32_0 : i32, i32
  }
  func.func @transform_21(%arg0: i32) -> (i32, i32, i32) {
    %c0_i32 = arith.constant 0 : i32
    %c0_i32_0 = arith.constant 0 : i32
    %c0_i32_1 = arith.constant 0 : i32
    return %arg0, %c0_i32, %c0_i32_0 : i32, i32, i32
  }
  func.func @transform_22(%arg0: i32) -> (i32, i32, i32) {
    %c0_i32 = arith.constant 0 : i32
    %c0_i32_0 = arith.constant 0 : i32
    %c0_i32_1 = arith.constant 0 : i32
    return %arg0, %c0_i32, %c0_i32_0 : i32, i32, i32
  }
}

</mosaic_0001>

<llo_original>
// kernel: forward.1
$region0: #{forward.1}
  #allocation0 [shape = 'u32[]', space=smem, size = 0x4, offset = 0x4, fixed_abs, tag = 'smem constant byte address 0x4 - core index']
  #allocation1 [shape = 'u32[144,128]{1,0:T(1,128)}', space=vmem, size = 0x12000, scoped, tag = 'internal scratch']
  %s0 = inlined_call_operand.vmem [shape: f32[2,8,32], index: 0, kind: input, shape index: {}]
  %s1 = inlined_call_operand.vmem [shape: f32[2,8,1], index: 1, kind: input, shape index: {}]
  %s2 = inlined_call_operand.vmem [shape: f32[2,1,8], index: 2, kind: input, shape index: {}]
  %s3 = inlined_call_operand.vmem [shape: f32[1,32], index: 3, kind: input, shape index: {}]
  %s4 = inlined_call_operand.vmem [shape: f32[1,32], index: 4, kind: input, shape index: {}]
  %s5 = inlined_call_operand.vmem [shape: f32[2,32,96], index: 5, kind: input, shape index: {}]
  %s6 = inlined_call_operand.vmem [shape: f32[2,1,96], index: 6, kind: input, shape index: {}]
  %s7 = inlined_call_operand.vmem [shape: f32[2,32,32], index: 7, kind: input, shape index: {}]
  %s8 = inlined_call_operand.vmem [shape: f32[2,1,32], index: 8, kind: input, shape index: {}]
  %s9 = inlined_call_operand.vmem [shape: f32[2,1,32], index: 9, kind: input, shape index: {}]
  %s10 = inlined_call_operand.vmem [shape: f32[2,1,32], index: 10, kind: input, shape index: {}]
  %s11 = inlined_call_operand.vmem [shape: f32[2,32,64], index: 11, kind: input, shape index: {}]
  %s12 = inlined_call_operand.vmem [shape: f32[2,1,64], index: 12, kind: input, shape index: {}]
  %s13 = inlined_call_operand.vmem [shape: f32[2,64,32], index: 13, kind: input, shape index: {}]
  %s14 = inlined_call_operand.vmem [shape: f32[2,1,32], index: 14, kind: input, shape index: {}]
  %s15 = inlined_call_operand.vmem [shape: f32[2,1,32], index: 15, kind: input, shape index: {}]
  %s16 = inlined_call_operand.vmem [shape: f32[2,1,32], index: 16, kind: input, shape index: {}]
  %s17 = inlined_call_operand.vmem [shape: f32[32,32], index: 17, kind: input, shape index: {}]
  %s18 = inlined_call_operand.vmem [shape: f32[1,32], index: 18, kind: input, shape index: {}]
  %s19 = inlined_call_operand.vmem [shape: f32[32,3], index: 19, kind: input, shape index: {}]
  %s20 = inlined_call_operand.vmem [shape: f32[1,3], index: 20, kind: input, shape index: {}]
  %s21 = inlined_call_operand.vmem [shape: f32[2,1,3], index: 21, kind: output, shape index: {0}]
  %s22 = inlined_call_operand.hbm [shape: f32[2,1,3], index: 22, kind: output, shape index: {1}]
  %23 = xla_tuple %s21, %s22
  %s24 = sld [smem:[#allocation0]]
  $region125: #{forward.1} parent=0
    _
  %s26 = ssub.s32 1, %s24
  %s27 = scalar_select 0, %s26, %s24
  $region1: #{forward.1} parent=0
    #allocation2 [shape = 'u8[1024]{0}', space=vmem, size = 0x400, scoped, tag = 'output window, operand 1']
    #allocation3 [shape = 's32[2]{0}', space=sflag, size = 0x8, scoped, tag = 'scoped memory for forward.1']
    %28 = vsyncpa [#allocation3], 0
    %s29 = scalar_lea.sflag [#allocation3], 1
    %30 = vsyncpa %s29, 0
    loop: start=0, step=1, limit=4
    $region2: #{forward.1} parent=1 // loop_pre_header
      _
    $region3: #{forward.1} parent=1 // loop_header
      %s32 = sphi 0, %s36
      %p33 = scmp.ge.s32.totalorder %s32, 4
      %s42 = sphi 0, %s44
      %s45 = sphi 0, %s42
      %s46 = sphi 0, %s45
      %s62 = sphi 0, %s46
      %s68 = sphi 0, %s70
      %s71 = sphi 0, %s68
      %s72 = sphi 0, %s71
      %s88 = sphi 0, %s72
      %s94 = sphi 0, %s96
      %s97 = sphi 0, %s94
      %s98 = sphi 0, %s97
      %s114 = sphi 0, %s98
      %s118 = sphi 0, %s118
      %s120 = sphi 0, %s118
      %s121 = sphi 0, %s120
      %s135 = sphi 0, %s121
      %s139 = sphi 0, %s139
      %s141 = sphi 0, %s139
      %s142 = sphi 0, %s141
      %s156 = sphi 0, %s142
      %s160 = sphi 0, %s160
      %s162 = sphi 0, %s160
      %s163 = sphi 0, %s162
      %s177 = sphi 0, %s163
      %s181 = sphi 0, %s181
      %s183 = sphi 0, %s181
      %s184 = sphi 0, %s183
      %s198 = sphi 0, %s184
      %s202 = sphi 0, %s202
      %s204 = sphi 0, %s202
      %s205 = sphi 0, %s204
      %s219 = sphi 0, %s205
      %s223 = sphi 0, %s223
      %s225 = sphi 0, %s223
      %s226 = sphi 0, %s225
      %s240 = sphi 0, %s226
      %s244 = sphi 0, %s244
      %s246 = sphi 0, %s244
      %s247 = sphi 0, %s246
      %s261 = sphi 0, %s247
      %s265 = sphi 0, %s265
      %s267 = sphi 0, %s265
      %s268 = sphi 0, %s267
      %s282 = sphi 0, %s268
      %s286 = sphi 0, %s286
      %s288 = sphi 0, %s286
      %s289 = sphi 0, %s288
      %s303 = sphi 0, %s289
      %s307 = sphi 0, %s307
      %s309 = sphi 0, %s307
      %s310 = sphi 0, %s309
      %s324 = sphi 0, %s310
      %s328 = sphi 0, %s328
      %s330 = sphi 0, %s328
      %s331 = sphi 0, %s330
      %s345 = sphi 0, %s331
      %s349 = sphi 0, %s349
      %s351 = sphi 0, %s349
      %s352 = sphi 0, %s351
      %s366 = sphi 0, %s352
      %s370 = sphi 0, %s370
      %s372 = sphi 0, %s370
      %s373 = sphi 0, %s372
      %s387 = sphi 0, %s373
      %s391 = sphi 0, %s391
      %s393 = sphi 0, %s391
      %s394 = sphi 0, %s393
      %s408 = sphi 0, %s394
      %s412 = sphi 0, %s412
      %s414 = sphi 0, %s412
      %s415 = sphi 0, %s414
      %s429 = sphi 0, %s415
      %s433 = sphi 0, %s433
      %s435 = sphi 0, %s433
      %s436 = sphi 0, %s435
      %s450 = sphi 0, %s436
      %s454 = sphi 0, %s454
      %s456 = sphi 0, %s454
      %s457 = sphi 0, %s456
      %s471 = sphi 0, %s457
      %s475 = sphi 0, %s475
      %s477 = sphi 0, %s475
      %s478 = sphi 0, %s477
      %s492 = sphi 0, %s478
      %s498 = sphi 0, %s500
      %s501 = sphi 0, %s498
      %s502 = sphi 0, %s501
      %s518 = sphi 0, %s502
      %s524 = sphi 0, %s526
      %s527 = sphi 0, %s524
      %s528 = sphi 0, %s527
      %s544 = sphi 0, %s528
    $region4: #{forward.1} parent=1 // loop_header_branch
      %35 = sbr.rel (%p33) target = $region8
    $region5: #{forward.1} parent=1 // loop_body
      %s37 = ssub.s32 %s32, 1
      %s38 = ssub.s32 %s32, 2
      %s39 = sadd.s32 %s32, 1
      %s40 = ssub.s32 %s32, %s39
      %p41 = scmp.eq.s32.totalorder %s40, 0
      %s43 = sadd.s32 %s42, 1
      %s44 = scalar_select %p41, %s42, %s43
      %p47 = pneg %p41
      %p48 = scmp.eq.s32.totalorder %s32, 1
      %p49 = por %p47, %p48
      %p50 = scmp.ne.s32.totalorder %s42, %s45
      %p51 = scmp.eq.s32.totalorder %s32, 0
      %p52 = por %p50, %p51
      %p53 = scmp.ne.s32.totalorder %s42, %s45
      %p54 = scmp.eq.s32.totalorder %s37, 1
      %p55 = por %p53, %p54
      %p56 = scmp.ne.s32.totalorder %s45, %s46
      %p57 = scmp.eq.s32.totalorder %s37, 0
      %p58 = por %p56, %p57
      %p59 = scmp.ne.s32.totalorder %s45, %s46
      %p60 = scmp.eq.s32.totalorder %s38, 1
      %p61 = por %p59, %p60
      %p63 = scmp.ne.s32.totalorder %s46, %s62
      %p64 = scmp.eq.s32.totalorder %s38, 0
      %p65 = por %p63, %p64
      %s66 = ssub.s32 %s32, %s39
      %p67 = scmp.eq.s32.totalorder %s66, 0
      %s69 = sadd.s32 %s68, 1
      %s70 = scalar_select %p67, %s68, %s69
      %p73 = pneg %p67
      %p74 = scmp.eq.s32.totalorder %s32, 1
      %p75 = por %p73, %p74
      %p76 = scmp.ne.s32.totalorder %s68, %s71
      %p77 = scmp.eq.s32.totalorder %s32, 0
      %p78 = por %p76, %p77
      %p79 = scmp.ne.s32.totalorder %s68, %s71
      %p80 = scmp.eq.s32.totalorder %s37, 1
      %p81 = por %p79, %p80
      %p82 = scmp.ne.s32.totalorder %s71, %s72
      %p83 = scmp.eq.s32.totalorder %s37, 0
      %p84 = por %p82, %p83
      %p85 = scmp.ne.s32.totalorder %s71, %s72
      %p86 = scmp.eq.s32.totalorder %s38, 1
      %p87 = por %p85, %p86
      %p89 = scmp.ne.s32.totalorder %s72, %s88
      %p90 = scmp.eq.s32.totalorder %s38, 0
      %p91 = por %p89, %p90
      %s92 = ssub.s32 %s32, %s39
      %p93 = scmp.eq.s32.totalorder %s92, 0
      %s95 = sadd.s32 %s94, 1
      %s96 = scalar_select %p93, %s94, %s95
      %p99 = pneg %p93
      %p100 = scmp.eq.s32.totalorder %s32, 1
      %p101 = por %p99, %p100
      %p102 = scmp.ne.s32.totalorder %s94, %s97
      %p103 = scmp.eq.s32.totalorder %s32, 0
      %p104 = por %p102, %p103
      %p105 = scmp.ne.s32.totalorder %s94, %s97
      %p106 = scmp.eq.s32.totalorder %s37, 1
      %p107 = por %p105, %p106
      %p108 = scmp.ne.s32.totalorder %s97, %s98
      %p109 = scmp.eq.s32.totalorder %s37, 0
      %p110 = por %p108, %p109
      %p111 = scmp.ne.s32.totalorder %s97, %s98
      %p112 = scmp.eq.s32.totalorder %s38, 1
      %p113 = por %p111, %p112
      %p115 = scmp.ne.s32.totalorder %s98, %s114
      %p116 = scmp.eq.s32.totalorder %s38, 0
      %p117 = por %p115, %p116
      %s119 = sadd.s32 %s118, 1
      %p122 = scmp.eq.s32.totalorder %s32, 1
      %p123 = scmp.ne.s32.totalorder %s118, %s120
      %p124 = scmp.eq.s32.totalorder %s32, 0
      %p125 = por %p123, %p124
      %p126 = scmp.ne.s32.totalorder %s118, %s120
      %p127 = scmp.eq.s32.totalorder %s37, 1
      %p128 = por %p126, %p127
      %p129 = scmp.ne.s32.totalorder %s120, %s121
      %p130 = scmp.eq.s32.totalorder %s37, 0
      %p131 = por %p129, %p130
      %p132 = scmp.ne.s32.totalorder %s120, %s121
      %p133 = scmp.eq.s32.totalorder %s38, 1
      %p134 = por %p132, %p133
      %p136 = scmp.ne.s32.totalorder %s121, %s135
      %p137 = scmp.eq.s32.totalorder %s38, 0
      %p138 = por %p136, %p137
      %s140 = sadd.s32 %s139, 1
      %p143 = scmp.eq.s32.totalorder %s32, 1
      %p144 = scmp.ne.s32.totalorder %s139, %s141
      %p145 = scmp.eq.s32.totalorder %s32, 0
      %p146 = por %p144, %p145
      %p147 = scmp.ne.s32.totalorder %s139, %s141
      %p148 = scmp.eq.s32.totalorder %s37, 1
      %p149 = por %p147, %p148
      %p150 = scmp.ne.s32.totalorder %s141, %s142
      %p151 = scmp.eq.s32.totalorder %s37, 0
      %p152 = por %p150, %p151
      %p153 = scmp.ne.s32.totalorder %s141, %s142
      %p154 = scmp.eq.s32.totalorder %s38, 1
      %p155 = por %p153, %p154
      %p157 = scmp.ne.s32.totalorder %s142, %s156
      %p158 = scmp.eq.s32.totalorder %s38, 0
      %p159 = por %p157, %p158
      %s161 = sadd.s32 %s160, 1
      %p164 = scmp.eq.s32.totalorder %s32, 1
      %p165 = scmp.ne.s32.totalorder %s160, %s162
      %p166 = scmp.eq.s32.totalorder %s32, 0
      %p167 = por %p165, %p166
      %p168 = scmp.ne.s32.totalorder %s160, %s162
      %p169 = scmp.eq.s32.totalorder %s37, 1
      %p170 = por %p168, %p169
      %p171 = scmp.ne.s32.totalorder %s162, %s163
      %p172 = scmp.eq.s32.totalorder %s37, 0
      %p173 = por %p171, %p172
      %p174 = scmp.ne.s32.totalorder %s162, %s163
      %p175 = scmp.eq.s32.totalorder %s38, 1
      %p176 = por %p174, %p175
      %p178 = scmp.ne.s32.totalorder %s163, %s177
      %p179 = scmp.eq.s32.totalorder %s38, 0
      %p180 = por %p178, %p179
      %s182 = sadd.s32 %s181, 1
      %p185 = scmp.eq.s32.totalorder %s32, 1
      %p186 = scmp.ne.s32.totalorder %s181, %s183
      %p187 = scmp.eq.s32.totalorder %s32, 0
      %p188 = por %p186, %p187
      %p189 = scmp.ne.s32.totalorder %s181, %s183
      %p190 = scmp.eq.s32.totalorder %s37, 1
      %p191 = por %p189, %p190
      %p192 = scmp.ne.s32.totalorder %s183, %s184
      %p193 = scmp.eq.s32.totalorder %s37, 0
      %p194 = por %p192, %p193
      %p195 = scmp.ne.s32.totalorder %s183, %s184
      %p196 = scmp.eq.s32.totalorder %s38, 1
      %p197 = por %p195, %p196
      %p199 = scmp.ne.s32.totalorder %s184, %s198
      %p200 = scmp.eq.s32.totalorder %s38, 0
      %p201 = por %p199, %p200
      %s203 = sadd.s32 %s202, 1
      %p206 = scmp.eq.s32.totalorder %s32, 1
      %p207 = scmp.ne.s32.totalorder %s202, %s204
      %p208 = scmp.eq.s32.totalorder %s32, 0
      %p209 = por %p207, %p208
      %p210 = scmp.ne.s32.totalorder %s202, %s204
      %p211 = scmp.eq.s32.totalorder %s37, 1
      %p212 = por %p210, %p211
      %p213 = scmp.ne.s32.totalorder %s204, %s205
      %p214 = scmp.eq.s32.totalorder %s37, 0
      %p215 = por %p213, %p214
      %p216 = scmp.ne.s32.totalorder %s204, %s205
      %p217 = scmp.eq.s32.totalorder %s38, 1
      %p218 = por %p216, %p217
      %p220 = scmp.ne.s32.totalorder %s205, %s219
      %p221 = scmp.eq.s32.totalorder %s38, 0
      %p222 = por %p220, %p221
      %s224 = sadd.s32 %s223, 1
      %p227 = scmp.eq.s32.totalorder %s32, 1
      %p228 = scmp.ne.s32.totalorder %s223, %s225
      %p229 = scmp.eq.s32.totalorder %s32, 0
      %p230 = por %p228, %p229
      %p231 = scmp.ne.s32.totalorder %s223, %s225
      %p232 = scmp.eq.s32.totalorder %s37, 1
      %p233 = por %p231, %p232
      %p234 = scmp.ne.s32.totalorder %s225, %s226
      %p235 = scmp.eq.s32.totalorder %s37, 0
      %p236 = por %p234, %p235
      %p237 = scmp.ne.s32.totalorder %s225, %s226
      %p238 = scmp.eq.s32.totalorder %s38, 1
      %p239 = por %p237, %p238
      %p241 = scmp.ne.s32.totalorder %s226, %s240
      %p242 = scmp.eq.s32.totalorder %s38, 0
      %p243 = por %p241, %p242
      %s245 = sadd.s32 %s244, 1
      %p248 = scmp.eq.s32.totalorder %s32, 1
      %p249 = scmp.ne.s32.totalorder %s244, %s246
      %p250 = scmp.eq.s32.totalorder %s32, 0
      %p251 = por %p249, %p250
      %p252 = scmp.ne.s32.totalorder %s244, %s246
      %p253 = scmp.eq.s32.totalorder %s37, 1
      %p254 = por %p252, %p253
      %p255 = scmp.ne.s32.totalorder %s246, %s247
      %p256 = scmp.eq.s32.totalorder %s37, 0
      %p257 = por %p255, %p256
      %p258 = scmp.ne.s32.totalorder %s246, %s247
      %p259 = scmp.eq.s32.totalorder %s38, 1
      %p260 = por %p258, %p259
      %p262 = scmp.ne.s32.totalorder %s247, %s261
      %p263 = scmp.eq.s32.totalorder %s38, 0
      %p264 = por %p262, %p263
      %s266 = sadd.s32 %s265, 1
      %p269 = scmp.eq.s32.totalorder %s32, 1
      %p270 = scmp.ne.s32.totalorder %s265, %s267
      %p271 = scmp.eq.s32.totalorder %s32, 0
      %p272 = por %p270, %p271
      %p273 = scmp.ne.s32.totalorder %s265, %s267
      %p274 = scmp.eq.s32.totalorder %s37, 1
      %p275 = por %p273, %p274
      %p276 = scmp.ne.s32.totalorder %s267, %s268
      %p277 = scmp.eq.s32.totalorder %s37, 0
      %p278 = por %p276, %p277
      %p279 = scmp.ne.s32.totalorder %s267, %s268
      %p280 = scmp.eq.s32.totalorder %s38, 1
      %p281 = por %p279, %p280
      %p283 = scmp.ne.s32.totalorder %s268, %s282
      %p284 = scmp.eq.s32.totalorder %s38, 0
      %p285 = por %p283, %p284
      %s287 = sadd.s32 %s286, 1
      %p290 = scmp.eq.s32.totalorder %s32, 1
      %p291 = scmp.ne.s32.totalorder %s286, %s288
      %p292 = scmp.eq.s32.totalorder %s32, 0
      %p293 = por %p291, %p292
      %p294 = scmp.ne.s32.totalorder %s286, %s288
      %p295 = scmp.eq.s32.totalorder %s37, 1
      %p296 = por %p294, %p295
      %p297 = scmp.ne.s32.totalorder %s288, %s289
      %p298 = scmp.eq.s32.totalorder %s37, 0
      %p299 = por %p297, %p298
      %p300 = scmp.ne.s32.totalorder %s288, %s289
      %p301 = scmp.eq.s32.totalorder %s38, 1
      %p302 = por %p300, %p301
      %p304 = scmp.ne.s32.totalorder %s289, %s303
      %p305 = scmp.eq.s32.totalorder %s38, 0
      %p306 = por %p304, %p305
      %s308 = sadd.s32 %s307, 1
      %p311 = scmp.eq.s32.totalorder %s32, 1
      %p312 = scmp.ne.s32.totalorder %s307, %s309
      %p313 = scmp.eq.s32.totalorder %s32, 0
      %p314 = por %p312, %p313
      %p315 = scmp.ne.s32.totalorder %s307, %s309
      %p316 = scmp.eq.s32.totalorder %s37, 1
      %p317 = por %p315, %p316
      %p318 = scmp.ne.s32.totalorder %s309, %s310
      %p319 = scmp.eq.s32.totalorder %s37, 0
      %p320 = por %p318, %p319
      %p321 = scmp.ne.s32.totalorder %s309, %s310
      %p322 = scmp.eq.s32.totalorder %s38, 1
      %p323 = por %p321, %p322
      %p325 = scmp.ne.s32.totalorder %s310, %s324
      %p326 = scmp.eq.s32.totalorder %s38, 0
      %p327 = por %p325, %p326
      %s329 = sadd.s32 %s328, 1
      %p332 = scmp.eq.s32.totalorder %s32, 1
      %p333 = scmp.ne.s32.totalorder %s328, %s330
      %p334 = scmp.eq.s32.totalorder %s32, 0
      %p335 = por %p333, %p334
      %p336 = scmp.ne.s32.totalorder %s328, %s330
      %p337 = scmp.eq.s32.totalorder %s37, 1
      %p338 = por %p336, %p337
      %p339 = scmp.ne.s32.totalorder %s330, %s331
      %p340 = scmp.eq.s32.totalorder %s37, 0
      %p341 = por %p339, %p340
      %p342 = scmp.ne.s32.totalorder %s330, %s331
      %p343 = scmp.eq.s32.totalorder %s38, 1
      %p344 = por %p342, %p343
      %p346 = scmp.ne.s32.totalorder %s331, %s345
      %p347 = scmp.eq.s32.totalorder %s38, 0
      %p348 = por %p346, %p347
      %s350 = sadd.s32 %s349, 1
      %p353 = scmp.eq.s32.totalorder %s32, 1
      %p354 = scmp.ne.s32.totalorder %s349, %s351
      %p355 = scmp.eq.s32.totalorder %s32, 0
      %p356 = por %p354, %p355
      %p357 = scmp.ne.s32.totalorder %s349, %s351
      %p358 = scmp.eq.s32.totalorder %s37, 1
      %p359 = por %p357, %p358
      %p360 = scmp.ne.s32.totalorder %s351, %s352
      %p361 = scmp.eq.s32.totalorder %s37, 0
      %p362 = por %p360, %p361
      %p363 = scmp.ne.s32.totalorder %s351, %s352
      %p364 = scmp.eq.s32.totalorder %s38, 1
      %p365 = por %p363, %p364
      %p367 = scmp.ne.s32.totalorder %s352, %s366
      %p368 = scmp.eq.s32.totalorder %s38, 0
      %p369 = por %p367, %p368
      %s371 = sadd.s32 %s370, 1
      %p374 = scmp.eq.s32.totalorder %s32, 1
      %p375 = scmp.ne.s32.totalorder %s370, %s372
      %p376 = scmp.eq.s32.totalorder %s32, 0
      %p377 = por %p375, %p376
      %p378 = scmp.ne.s32.totalorder %s370, %s372
      %p379 = scmp.eq.s32.totalorder %s37, 1
      %p380 = por %p378, %p379
      %p381 = scmp.ne.s32.totalorder %s372, %s373
      %p382 = scmp.eq.s32.totalorder %s37, 0
      %p383 = por %p381, %p382
      %p384 = scmp.ne.s32.totalorder %s372, %s373
      %p385 = scmp.eq.s32.totalorder %s38, 1
      %p386 = por %p384, %p385
      %p388 = scmp.ne.s32.totalorder %s373, %s387
      %p389 = scmp.eq.s32.totalorder %s38, 0
      %p390 = por %p388, %p389
      %s392 = sadd.s32 %s391, 1
      %p395 = scmp.eq.s32.totalorder %s32, 1
      %p396 = scmp.ne.s32.totalorder %s391, %s393
      %p397 = scmp.eq.s32.totalorder %s32, 0
      %p398 = por %p396, %p397
      %p399 = scmp.ne.s32.totalorder %s391, %s393
      %p400 = scmp.eq.s32.totalorder %s37, 1
      %p401 = por %p399, %p400
      %p402 = scmp.ne.s32.totalorder %s393, %s394
      %p403 = scmp.eq.s32.totalorder %s37, 0
      %p404 = por %p402, %p403
      %p405 = scmp.ne.s32.totalorder %s393, %s394
      %p406 = scmp.eq.s32.totalorder %s38, 1
      %p407 = por %p405, %p406
      %p409 = scmp.ne.s32.totalorder %s394, %s408
      %p410 = scmp.eq.s32.totalorder %s38, 0
      %p411 = por %p409, %p410
      %s413 = sadd.s32 %s412, 1
      %p416 = scmp.eq.s32.totalorder %s32, 1
      %p417 = scmp.ne.s32.totalorder %s412, %s414
      %p418 = scmp.eq.s32.totalorder %s32, 0
      %p419 = por %p417, %p418
      %p420 = scmp.ne.s32.totalorder %s412, %s414
      %p421 = scmp.eq.s32.totalorder %s37, 1
      %p422 = por %p420, %p421
      %p423 = scmp.ne.s32.totalorder %s414, %s415
      %p424 = scmp.eq.s32.totalorder %s37, 0
      %p425 = por %p423, %p424
      %p426 = scmp.ne.s32.totalorder %s414, %s415
      %p427 = scmp.eq.s32.totalorder %s38, 1
      %p428 = por %p426, %p427
      %p430 = scmp.ne.s32.totalorder %s415, %s429
      %p431 = scmp.eq.s32.totalorder %s38, 0
      %p432 = por %p430, %p431
      %s434 = sadd.s32 %s433, 1
      %p437 = scmp.eq.s32.totalorder %s32, 1
      %p438 = scmp.ne.s32.totalorder %s433, %s435
      %p439 = scmp.eq.s32.totalorder %s32, 0
      %p440 = por %p438, %p439
      %p441 = scmp.ne.s32.totalorder %s433, %s435
      %p442 = scmp.eq.s32.totalorder %s37, 1
      %p443 = por %p441, %p442
      %p444 = scmp.ne.s32.totalorder %s435, %s436
      %p445 = scmp.eq.s32.totalorder %s37, 0
      %p446 = por %p444, %p445
      %p447 = scmp.ne.s32.totalorder %s435, %s436
      %p448 = scmp.eq.s32.totalorder %s38, 1
      %p449 = por %p447, %p448
      %p451 = scmp.ne.s32.totalorder %s436, %s450
      %p452 = scmp.eq.s32.totalorder %s38, 0
      %p453 = por %p451, %p452
      %s455 = sadd.s32 %s454, 1
      %p458 = scmp.eq.s32.totalorder %s32, 1
      %p459 = scmp.ne.s32.totalorder %s454, %s456
      %p460 = scmp.eq.s32.totalorder %s32, 0
      %p461 = por %p459, %p460
      %p462 = scmp.ne.s32.totalorder %s454, %s456
      %p463 = scmp.eq.s32.totalorder %s37, 1
      %p464 = por %p462, %p463
      %p465 = scmp.ne.s32.totalorder %s456, %s457
      %p466 = scmp.eq.s32.totalorder %s37, 0
      %p467 = por %p465, %p466
      %p468 = scmp.ne.s32.totalorder %s456, %s457
      %p469 = scmp.eq.s32.totalorder %s38, 1
      %p470 = por %p468, %p469
      %p472 = scmp.ne.s32.totalorder %s457, %s471
      %p473 = scmp.eq.s32.totalorder %s38, 0
      %p474 = por %p472, %p473
      %s476 = sadd.s32 %s475, 1
      %p479 = scmp.eq.s32.totalorder %s32, 1
      %p480 = scmp.ne.s32.totalorder %s475, %s477
      %p481 = scmp.eq.s32.totalorder %s32, 0
      %p482 = por %p480, %p481
      %p483 = scmp.ne.s32.totalorder %s475, %s477
      %p484 = scmp.eq.s32.totalorder %s37, 1
      %p485 = por %p483, %p484
      %p486 = scmp.ne.s32.totalorder %s477, %s478
      %p487 = scmp.eq.s32.totalorder %s37, 0
      %p488 = por %p486, %p487
      %p489 = scmp.ne.s32.totalorder %s477, %s478
      %p490 = scmp.eq.s32.totalorder %s38, 1
      %p491 = por %p489, %p490
      %p493 = scmp.ne.s32.totalorder %s478, %s492
      %p494 = scmp.eq.s32.totalorder %s38, 0
      %p495 = por %p493, %p494
      %s496 = ssub.s32 %s32, %s39
      %p497 = scmp.eq.s32.totalorder %s496, 0
      %s499 = sadd.s32 %s498, 1
      %s500 = scalar_select %p497, %s498, %s499
      %p503 = pneg %p497
      %p504 = scmp.eq.s32.totalorder %s32, 1
      %p505 = por %p503, %p504
      %p506 = scmp.ne.s32.totalorder %s498, %s501
      %p507 = scmp.eq.s32.totalorder %s32, 0
      %p508 = por %p506, %p507
      %p509 = scmp.ne.s32.totalorder %s498, %s501
      %p510 = scmp.eq.s32.totalorder %s37, 1
      %p511 = por %p509, %p510
      %p512 = scmp.ne.s32.totalorder %s501, %s502
      %p513 = scmp.eq.s32.totalorder %s37, 0
      %p514 = por %p512, %p513
      %p515 = scmp.ne.s32.totalorder %s501, %s502
      %p516 = scmp.eq.s32.totalorder %s38, 1
      %p517 = por %p515, %p516
      %p519 = scmp.ne.s32.totalorder %s502, %s518
      %p520 = scmp.eq.s32.totalorder %s38, 0
      %p521 = por %p519, %p520
      %s522 = ssub.s32 %s32, %s39
      %p523 = scmp.eq.s32.totalorder %s522, 0
      %s525 = sadd.s32 %s524, 1
      %s526 = scalar_select %p523, %s524, %s525
      %p529 = pneg %p523
      %p530 = scmp.eq.s32.totalorder %s32, 1
      %p531 = por %p529, %p530
      %p532 = scmp.ne.s32.totalorder %s524, %s527
      %p533 = scmp.eq.s32.totalorder %s32, 0
      %p534 = por %p532, %p533
      %p535 = scmp.ne.s32.totalorder %s524, %s527
      %p536 = scmp.eq.s32.totalorder %s37, 1
      %p537 = por %p535, %p536
      %p538 = scmp.ne.s32.totalorder %s527, %s528
      %p539 = scmp.eq.s32.totalorder %s37, 0
      %p540 = por %p538, %p539
      %p541 = scmp.ne.s32.totalorder %s527, %s528
      %p542 = scmp.eq.s32.totalorder %s38, 1
      %p543 = por %p541, %p542
      %p545 = scmp.ne.s32.totalorder %s528, %s544
      %p546 = scmp.eq.s32.totalorder %s38, 0
      %p547 = por %p545, %p546
      %p548 = scmp.le.s32.totalorder 1, %s32
      %p549 = scmp.lt.s32.totalorder %s32, 3
      %p550 = pnand %p548, %p549
      %p551 = pneg %p550
      // Predicated region
      $region9: #{forward.1} parent=5 // pred_check
        _
      $region10: #{forward.1} parent=5 // pred_check_branch
        %553 = sbr.rel (%p550) target = $region12
      $region11: #{forward.1} parent=5 // pred_region
        %s554 = ssub.s32 %s32, 1
        // Predicated region
        $region13: #{forward.1} parent=11 // pred_check
          %p555 = pneg %p131
        $region14: #{forward.1} parent=11 // pred_check_branch
          %557 = sbr.rel (%p555) target = $region16
        $region15: #{forward.1} parent=11 // pred_region
          _
        $region16: #{forward.1} parent=11 // pred_fallthru
          _
        // Predicated region
        $region17: #{forward.1} parent=11 // pred_check
          %p558 = pneg %p152
        $region18: #{forward.1} parent=11 // pred_check_branch
          %560 = sbr.rel (%p558) target = $region20
        $region19: #{forward.1} parent=11 // pred_region
          _
        $region20: #{forward.1} parent=11 // pred_fallthru
          _
        // Predicated region
        $region21: #{forward.1} parent=11 // pred_check
          %p561 = pneg %p173
        $region22: #{forward.1} parent=11 // pred_check_branch
          %563 = sbr.rel (%p561) target = $region24
        $region23: #{forward.1} parent=11 // pred_region
          _
        $region24: #{forward.1} parent=11 // pred_fallthru
          _
        // Predicated region
        $region25: #{forward.1} parent=11 // pred_check
          %p564 = pneg %p194
        $region26: #{forward.1} parent=11 // pred_check_branch
          %566 = sbr.rel (%p564) target = $region28
        $region27: #{forward.1} parent=11 // pred_region
          _
        $region28: #{forward.1} parent=11 // pred_fallthru
          _
        // Predicated region
        $region29: #{forward.1} parent=11 // pred_check
          %p567 = pneg %p215
        $region30: #{forward.1} parent=11 // pred_check_branch
          %569 = sbr.rel (%p567) target = $region32
        $region31: #{forward.1} parent=11 // pred_region
          _
        $region32: #{forward.1} parent=11 // pred_fallthru
          _
        // Predicated region
        $region33: #{forward.1} parent=11 // pred_check
          %p570 = pneg %p236
        $region34: #{forward.1} parent=11 // pred_check_branch
          %572 = sbr.rel (%p570) target = $region36
        $region35: #{forward.1} parent=11 // pred_region
          _
        $region36: #{forward.1} parent=11 // pred_fallthru
          _
        // Predicated region
        $region37: #{forward.1} parent=11 // pred_check
          %p573 = pneg %p257
        $region38: #{forward.1} parent=11 // pred_check_branch
          %575 = sbr.rel (%p573) target = $region40
        $region39: #{forward.1} parent=11 // pred_region
          _
        $region40: #{forward.1} parent=11 // pred_fallthru
          _
        // Predicated region
        $region41: #{forward.1} parent=11 // pred_check
          %p576 = pneg %p278
        $region42: #{forward.1} parent=11 // pred_check_branch
          %578 = sbr.rel (%p576) target = $region44
        $region43: #{forward.1} parent=11 // pred_region
          _
        $region44: #{forward.1} parent=11 // pred_fallthru
          _
        // Predicated region
        $region45: #{forward.1} parent=11 // pred_check
          %p579 = pneg %p299
        $region46: #{forward.1} parent=11 // pred_check_branch
          %581 = sbr.rel (%p579) target = $region48
        $region47: #{forward.1} parent=11 // pred_region
          _
        $region48: #{forward.1} parent=11 // pred_fallthru
          _
        // Predicated region
        $region49: #{forward.1} parent=11 // pred_check
          %p582 = pneg %p320
        $region50: #{forward.1} parent=11 // pred_check_branch
          %584 = sbr.rel (%p582) target = $region52
        $region51: #{forward.1} parent=11 // pred_region
          _
        $region52: #{forward.1} parent=11 // pred_fallthru
          _
        // Predicated region
        $region53: #{forward.1} parent=11 // pred_check
          %p585 = pneg %p341
        $region54: #{forward.1} parent=11 // pred_check_branch
          %587 = sbr.rel (%p585) target = $region56
        $region55: #{forward.1} parent=11 // pred_region
          _
        $region56: #{forward.1} parent=11 // pred_fallthru
          _
        // Predicated region
        $region57: #{forward.1} parent=11 // pred_check
          %p588 = pneg %p362
        $region58: #{forward.1} parent=11 // pred_check_branch
          %590 = sbr.rel (%p588) target = $region60
        $region59: #{forward.1} parent=11 // pred_region
          _
        $region60: #{forward.1} parent=11 // pred_fallthru
          _
        // Predicated region
        $region61: #{forward.1} parent=11 // pred_check
          %p591 = pneg %p383
        $region62: #{forward.1} parent=11 // pred_check_branch
          %593 = sbr.rel (%p591) target = $region64
        $region63: #{forward.1} parent=11 // pred_region
          _
        $region64: #{forward.1} parent=11 // pred_fallthru
          _
        // Predicated region
        $region65: #{forward.1} parent=11 // pred_check
          %p594 = pneg %p404
        $region66: #{forward.1} parent=11 // pred_check_branch
          %596 = sbr.rel (%p594) target = $region68
        $region67: #{forward.1} parent=11 // pred_region
          _
        $region68: #{forward.1} parent=11 // pred_fallthru
          _
        // Predicated region
        $region69: #{forward.1} parent=11 // pred_check
          %p597 = pneg %p425
        $region70: #{forward.1} parent=11 // pred_check_branch
          %599 = sbr.rel (%p597) target = $region72
        $region71: #{forward.1} parent=11 // pred_region
          _
        $region72: #{forward.1} parent=11 // pred_fallthru
          _
        // Predicated region
        $region73: #{forward.1} parent=11 // pred_check
          %p600 = pneg %p446
        $region74: #{forward.1} parent=11 // pred_check_branch
          %602 = sbr.rel (%p600) target = $region76
        $region75: #{forward.1} parent=11 // pred_region
          _
        $region76: #{forward.1} parent=11 // pred_fallthru
          _
        // Predicated region
        $region77: #{forward.1} parent=11 // pred_check
          %p603 = pneg %p467
        $region78: #{forward.1} parent=11 // pred_check_branch
          %605 = sbr.rel (%p603) target = $region80
        $region79: #{forward.1} parent=11 // pred_region
          _
        $region80: #{forward.1} parent=11 // pred_fallthru
          _
        // Predicated region
        $region81: #{forward.1} parent=11 // pred_check
          %p606 = pneg %p488
        $region82: #{forward.1} parent=11 // pred_check_branch
          %608 = sbr.rel (%p606) target = $region84
        $region83: #{forward.1} parent=11 // pred_region
          _
        $region84: #{forward.1} parent=11 // pred_fallthru
          _
      $region12: #{forward.1} parent=5 // pred_fallthru
        _
      %p609 = scmp.lt.s32.totalorder %s32, 2
      // Predicated region
      $region85: #{forward.1} parent=5 // pred_check
        %p610 = pneg %p609
      $region86: #{forward.1} parent=5 // pred_check_branch
        %612 = sbr.rel (%p610) target = $region88
      $region87: #{forward.1} parent=5 // pred_region
        // Predicated region
        $region89: #{forward.1} parent=87 // pred_check
          %p613 = pneg %p52
        $region90: #{forward.1} parent=87 // pred_check_branch
          %615 = sbr.rel (%p613) target = $region92
        $region91: #{forward.1} parent=87 // pred_region
          %p616 = scmp.lt.s32.totalorder %s32, 1
          %s617 = scalar_select %p616, %s32, 1
          %s618 = smul.addr %s617, 8
          %s619 = scalar_lea.vmem %s0, %s618
        $region92: #{forward.1} parent=87 // pred_fallthru
          _
        // Predicated region
        $region93: #{forward.1} parent=87 // pred_check
          %p620 = pneg %p78
        $region94: #{forward.1} parent=87 // pred_check_branch
          %622 = sbr.rel (%p620) target = $region96
        $region95: #{forward.1} parent=87 // pred_region
          %p623 = scmp.lt.s32.totalorder %s32, 1
          %s624 = scalar_select %p623, %s32, 1
          %s625 = smul.addr %s624, 8
          %s626 = scalar_lea.vmem %s1, %s625
        $region96: #{forward.1} parent=87 // pred_fallthru
          _
        // Predicated region
        $region97: #{forward.1} parent=87 // pred_check
          %p627 = pneg %p104
        $region98: #{forward.1} parent=87 // pred_check_branch
          %629 = sbr.rel (%p627) target = $region100
        $region99: #{forward.1} parent=87 // pred_region
          %p630 = scmp.lt.s32.totalorder %s32, 1
          %s631 = scalar_select %p630, %s32, 1
          %s632 = scalar_lea.vmem %s2, %s631
        $region100: #{forward.1} parent=87 // pred_fallthru
          _
      $region88: #{forward.1} parent=5 // pred_fallthru
        _
      %p633 = scmp.le.s32.totalorder 1, %s32
      %p634 = scmp.lt.s32.totalorder %s32, 3
      %p635 = pnand %p633, %p634
      %p636 = pneg %p635
      // Predicated region
      $region101: #{forward.1} parent=5 // pred_check
        _
      $region102: #{forward.1} parent=5 // pred_check_branch
        %638 = sbr.rel (%p635) target = $region104
      $region103: #{forward.1} parent=5 // pred_region
        %s639 = ssub.s32 %s32, 1
        %p640 = scmp.lt.s32.totalorder %s37, 1
        %s641 = scalar_select %p640, %s37, 1
        %s642 = smul.addr %s641, 8
        %s643 = scalar_lea.vmem %s0, %s642
        %p644 = pneg %p58
        %p645 = pneg %p55
        %p646 = scmp.lt.s32.totalorder %s37, 1
        %s647 = scalar_select %p646, %s37, 1
        %s648 = smul.addr %s647, 8
        %s649 = scalar_lea.vmem %s1, %s648
        %p650 = pneg %p84
        %p651 = pneg %p81
        %p652 = scmp.lt.s32.totalorder %s37, 1
        %s653 = scalar_select %p652, %s37, 1
        %s654 = scalar_lea.vmem %s2, %s653
        %p655 = pneg %p110
        %p656 = pneg %p107
        %p657 = pneg %p131
        %p658 = pneg %p128
        %p659 = pneg %p152
        %p660 = pneg %p149
        %p661 = pneg %p173
        %p662 = pneg %p170
        %p663 = pneg %p194
        %p664 = pneg %p191
        %p665 = pneg %p215
        %p666 = pneg %p212
        %p667 = pneg %p236
        %p668 = pneg %p233
        %p669 = pneg %p257
        %p670 = pneg %p254
        %p671 = pneg %p278
        %p672 = pneg %p275
        %p673 = pneg %p299
        %p674 = pneg %p296
        %p675 = pneg %p320
        %p676 = pneg %p317
        %p677 = pneg %p341
        %p678 = pneg %p338
        %p679 = pneg %p362
        %p680 = pneg %p359
        %p681 = pneg %p383
        %p682 = pneg %p380
        %p683 = pneg %p404
        %p684 = pneg %p401
        %p685 = pneg %p425
        %p686 = pneg %p422
        %p687 = pneg %p446
        %p688 = pneg %p443
        %p689 = pneg %p467
        %p690 = pneg %p464
        %p691 = pneg %p488
        %p692 = pneg %p485
        %p693 = pneg %p514
        %p694 = pneg %p511
        %p695 = scmp.lt.s32.totalorder %s37, 1
        %s696 = scalar_select %p695, %s37, 1
        %s697 = scalar_lea.vmem %s21, %s696
        %p698 = pneg %p540
        %p699 = pneg %p537
        %s700 = sand.u32 %s527, 1
        %s701 = scalar_lea.sflag [#allocation3], %s700
        %s702 = sand.u32 %s527, 1
        %s703 = scalar_lea.vmem [#allocation2], %s702
        %p704 = scmp.lt.s32.totalorder %s37, 1
        %s705 = scalar_select %p704, %s37, 1
        %s706 = smul.addr %s705, 8
        %s707 = scalar_lea.vmem %s0, %s706
        %p708 = scmp.lt.s32.totalorder %s37, 1
        %s709 = scalar_select %p708, %s37, 1
        %s710 = smul.addr %s709, 8
        %s711 = scalar_lea.vmem %s1, %s710
        %p712 = scmp.lt.s32.totalorder %s37, 1
        %s713 = scalar_select %p712, %s37, 1
        %s714 = scalar_lea.vmem %s2, %s713
        %p715 = scmp.lt.s32.totalorder %s37, 1
        %s716 = scalar_select %p715, %s37, 1
        %s717 = scalar_lea.vmem %s21, %s716
        %v718 = vld [vmem:[%s707] sm:$0xff]
        %v719 = vld [vmem:[%s3] sm:$0x1]
        %v720 = vld [vmem:[%s4] sm:$0x1]
        %vm721 = vcmask 261120
        %v722 = vsel %vm721, %v718, 0.0
        %723 = vadd.xlane.f32.xlu0 %v722
        %v724 = vpop.xlane.xlu0 %723
        %v725 = vrcp.pop 32.0
        %v726 = vmul.f32 %v724, %v725
        %v727 = vsub.f32 %v718, %v726
        %v728 = vmul.f32 %v727, %v727
        %v729 = vsel %vm721, %v728, 0.0
        %730 = vadd.xlane.f32.xlu0 %v729
        %v731 = vpop.xlane.xlu0 %730
        %v732 = vmul.f32 %v731, %v725
        %v733 = vadd.f32 %v732, 1e-07
        %v734 = vrsqrt.pop %v733
        %v735 = vmul.f32 %v727, %v734
        %v737 = vlaneseq
        %v738 = vshrl.u32 %v737, 7
        %v739 = vsub.s32 0, %v738
        %v740 = vrot.slane %v719, %v739
        %v742 = vmul.f32 %v735, %v740
        %v744 = vlaneseq
        %v745 = vshrl.u32 %v744, 7
        %v746 = vsub.s32 0, %v745
        %v747 = vrot.slane %v720, %v746
        %v749 = vadd.f32 %v742, %v747
        %v750 = vld [vmem:[%s711] sm:$0xff]
        %752 = vset.pattern.permute.xlu0 0
        %753 = vperm.xlu0 %752, %v750
        %v754 = vpop.permute.xlu0 %753
        %v756 = vmul.f32 %v749, %v754
        %v757 = vld [vmem:[%s714] sm:$0x1]
        %v758 = vld [vmem:[%s5] sm:$0xff]
        %v759 = vld [vmem:[%s5 + $0x8] sm:$0xff]
        %v760 = vld [vmem:[%s5 + $0x10] sm:$0xff]
        %v761 = vld [vmem:[%s5 + $0x18] sm:$0xff]
        %v762 = vld [vmem:[%s6] sm:$0x1]
        %v764 = vlaneseq
        %v765 = vshrl.u32 %v764, 7
        %v766 = vsub.s32 0, %v765
        %v767 = vrot.slane %v762, %v766
        %v770 = vsel %vm721, %v756, 0
        %772 = vmatprep.subr.mxu0 0.0
        %773 = vmatpush1.msra.mxu0 0.0
        %774 = vmatprep.subr.mxu0 0.0
        %775 = vmatpush1.msra.mxu0 0.0
        %776 = vmatprep.subr.mxu0 0.0
        %777 = vmatpush1.msra.mxu0 0.0
        %778 = vmatprep.subr.mxu0 0.0
        %779 = vmatpush1.msra.mxu0 0.0
        %780 = vmatprep.subr.mxu0 0.0
        %781 = vmatpush1.msra.mxu0 0.0
        %782 = vmatprep.subr.mxu0 0.0
        %783 = vmatpush1.msra.mxu0 0.0
        %784 = vmatprep.subr.mxu0 0.0
        %785 = vmatpush1.msra.mxu0 0.0
        %786 = vmatprep.subr.mxu0 0.0
        %787 = vmatpush1.msra.mxu0 0.0
        %788 = vmatprep.subr.mxu0 0.0
        %789 = vmatpush1.msra.mxu0 0.0
        %790 = vmatprep.subr.mxu0 0.0
        %791 = vmatpush1.msra.mxu0 0.0
        %792 = vmatprep.subr.mxu0 0.0
        %793 = vmatpush1.msra.mxu0 0.0
        %794 = vmatprep.subr.mxu0 0.0
        %795 = vmatpush1.msra.mxu0 0.0
        %796 = vmatprep.subr.mxu0 0.0
        %797 = vmatpush1.msra.mxu0 %v761
        %798 = vmatprep.subr.mxu0 0.0
        %799 = vmatpush1.msra.mxu0 %v760
        %800 = vmatprep.subr.mxu0 0.0
        %801 = vmatpush1.msra.mxu0 %v759
        %802 = vmatprep.subr.mxu0 0.0
        %803 = vmatpush1.msra.mxu0 %v758
        %804 = vmatprep.subr.mxu0 0.0
        %805 = vmatpush2.msra.mxu0 0.0
        %806 = vmatprep.subr.mxu0 0.0
        %807 = vmatpush2.msra.mxu0 0.0
        %808 = vmatprep.subr.mxu0 0.0
        %809 = vmatpush2.msra.mxu0 0.0
        %810 = vmatprep.subr.mxu0 0.0
        %811 = vmatpush2.msra.mxu0 0.0
        %812 = vmatprep.subr.mxu0 0.0
        %813 = vmatpush2.msra.mxu0 0.0
        %814 = vmatprep.subr.mxu0 0.0
        %815 = vmatpush2.msra.mxu0 0.0
        %816 = vmatprep.subr.mxu0 0.0
        %817 = vmatpush2.msra.mxu0 0.0
        %818 = vmatprep.subr.mxu0 0.0
        %819 = vmatpush2.msra.mxu0 0.0
        %820 = vmatprep.subr.mxu0 0.0
        %821 = vmatpush2.msra.mxu0 0.0
        %822 = vmatprep.subr.mxu0 0.0
        %823 = vmatpush2.msra.mxu0 0.0
        %824 = vmatprep.subr.mxu0 0.0
        %825 = vmatpush2.msra.mxu0 0.0
        %826 = vmatprep.subr.mxu0 0.0
        %827 = vmatpush2.msra.mxu0 0.0
        %828 = vmatprep.subr.mxu0 0.0
        %829 = vmatpush2.msra.mxu0 0.0
        %830 = vmatprep.subr.mxu0 0.0
        %831 = vmatpush2.msra.mxu0 0.0
        %832 = vmatprep.subr.mxu0 0.0
        %833 = vmatpush2.msra.mxu0 0.0
        %834 = vmatprep.subr.mxu0 0.0
        %835 = vmatpush2.msra.mxu0 0.0
        %836 = vmatprep.mubr.f32.mxu0 0.0
        %837 = vmatmul.mubr.f32.gmra.mxu0 %v770
        %v838 = vpop.f32.mrf.mxu0
        %v839 = vadd.f32 %v767, %v838
        %v840 = vpop.f32.mrf.mxu0
        %841 = vdwg.mxu0
        %v842 = vld [vmem:[%s7] sm:$0xff]
        %v843 = vld [vmem:[%s7 + $0x8] sm:$0xff]
        %v844 = vld [vmem:[%s7 + $0x10] sm:$0xff]
        %v845 = vld [vmem:[%s7 + $0x18] sm:$0xff]
        %847 = vrot.lane.b32.xlu0 %v839, 96
        %v848 = vpop.permute.xlu0 %847
        %vm849 = vcmask 64512
        %v850 = vsel %vm849, %v839, 0
        %v852 = vsel %vm849, %v848, 0
        %854 = vmatprep.subr.mxu0 0.0
        %855 = vmatpush1.xpose.msra.mxu0 0.0
        %856 = vmatprep.subr.mxu0 0.0
        %857 = vmatpush1.xpose.msra.mxu0 0.0
        %858 = vmatprep.subr.mxu0 0.0
        %859 = vmatpush1.xpose.msra.mxu0 0.0
        %860 = vmatprep.subr.mxu0 0.0
        %861 = vmatpush1.xpose.msra.mxu0 0.0
        %862 = vmatprep.subr.mxu0 0.0
        %863 = vmatpush1.xpose.msra.mxu0 0.0
        %864 = vmatprep.subr.mxu0 0.0
        %865 = vmatpush1.xpose.msra.mxu0 0.0
        %866 = vmatprep.subr.mxu0 0.0
        %867 = vmatpush1.xpose.msra.mxu0 0.0
        %868 = vmatprep.subr.mxu0 0.0
        %869 = vmatpush1.xpose.msra.mxu0 0.0
        %870 = vmatprep.subr.mxu0 0.0
        %871 = vmatpush1.xpose.msra.mxu0 0.0
        %872 = vmatprep.subr.mxu0 0.0
        %873 = vmatpush1.xpose.msra.mxu0 0.0
        %874 = vmatprep.subr.mxu0 0.0
        %875 = vmatpush1.xpose.msra.mxu0 0.0
        %876 = vmatprep.subr.mxu0 0.0
        %877 = vmatpush1.xpose.msra.mxu0 0.0
        %878 = vmatprep.subr.mxu0 0.0
        %879 = vmatpush1.xpose.msra.mxu0 0.0
        %880 = vmatprep.subr.mxu0 0.0
        %881 = vmatpush1.xpose.msra.mxu0 0.0
        %882 = vmatprep.subr.mxu0 0.0
        %883 = vmatpush1.xpose.msra.mxu0 0.0
        %884 = vmatprep.subr.mxu0 0.0
        %885 = vmatpush1.xpose.msra.mxu0 %v852
        %886 = vmatprep.subr.mxu0 0.0
        %887 = vmatpush2.xpose.msra.mxu0 0.0
        %888 = vmatprep.subr.mxu0 0.0
        %889 = vmatpush2.xpose.msra.mxu0 0.0
        %890 = vmatprep.subr.mxu0 0.0
        %891 = vmatpush2.xpose.msra.mxu0 0.0
        %892 = vmatprep.subr.mxu0 0.0
        %893 = vmatpush2.xpose.msra.mxu0 0.0
        %894 = vmatprep.subr.mxu0 0.0
        %895 = vmatpush2.xpose.msra.mxu0 0.0
        %896 = vmatprep.subr.mxu0 0.0
        %897 = vmatpush2.xpose.msra.mxu0 0.0
        %898 = vmatprep.subr.mxu0 0.0
        %899 = vmatpush2.xpose.msra.mxu0 0.0
        %900 = vmatprep.subr.mxu0 0.0
        %901 = vmatpush2.xpose.msra.mxu0 0.0
        %902 = vmatprep.subr.mxu0 0.0
        %903 = vmatpush2.xpose.msra.mxu0 0.0
        %904 = vmatprep.subr.mxu0 0.0
        %905 = vmatpush2.xpose.msra.mxu0 0.0
        %906 = vmatprep.subr.mxu0 0.0
        %907 = vmatpush2.xpose.msra.mxu0 0.0
        %908 = vmatprep.subr.mxu0 0.0
        %909 = vmatpush2.xpose.msra.mxu0 0.0
        %910 = vmatprep.subr.mxu0 0.0
        %911 = vmatpush2.xpose.msra.mxu0 0.0
        %912 = vmatprep.subr.mxu0 0.0
        %913 = vmatpush2.xpose.msra.mxu0 0.0
        %914 = vmatprep.subr.mxu0 0.0
        %915 = vmatpush2.xpose.msra.mxu0 0.0
        %916 = vmatprep.subr.mxu0 0.0
        %917 = vmatpush2.xpose.msra.mxu0 0.0
        %918 = vmatprep.mubr.f32.mxu0 0.0
        %919 = vmatmul.mubr.f32.gmra.mxu0 %v850
        %v920 = vpop.f32.mrf.mxu0
        %v921 = vadd.f32 0.0, %v920
        %v922 = vpop.f32.mrf.mxu0
        %923 = vdwg.mxu0
        %v924 = vmul.f32 %v921, 0.35355338
        %v926 = vlaneseq
        %v927 = vshrl.u32 %v926, 7
        %v928 = vsub.s32 0, %v927
        %v929 = vrot.slane %v757, %v928
        %v931 = vadd.f32 %v924, %v929
        %v932 = vsel %vm849, %v931, -inf
        %933 = vmax.xlane.f32.xlu0 %v932
        %v934 = vpop.xlane.xlu0 %933
        %v935 = vsub.f32 %v931, %v934
        %v936 = vmul.f32 %v935, 1.442695
        %v937 = vpow.pop %v936
        %v938 = vsel %vm849, %v937, 0.0
        %939 = vadd.xlane.f32.xlu0 %v938
        %v940 = vpop.xlane.xlu0 %939
        %v941 = vrcp.pop %v940
        %v942 = vmul.f32 %v937, %v941
        %943 = vrot.lane.b32.xlu0 %v839, 64
        %v944 = vpop.permute.xlu0 %943
        %v947 = vsel %vm849, %v942, 0
        %949 = vmatprep.subr.mxu0 0.0
        %950 = vmatpush1.msra.mxu0 0.0
        %951 = vmatprep.subr.mxu0 0.0
        %952 = vmatpush1.msra.mxu0 0.0
        %953 = vmatprep.subr.mxu0 0.0
        %954 = vmatpush1.msra.mxu0 0.0
        %955 = vmatprep.subr.mxu0 0.0
        %956 = vmatpush1.msra.mxu0 0.0
        %957 = vmatprep.subr.mxu0 0.0
        %958 = vmatpush1.msra.mxu0 0.0
        %959 = vmatprep.subr.mxu0 0.0
        %960 = vmatpush1.msra.mxu0 0.0
        %961 = vmatprep.subr.mxu0 0.0
        %962 = vmatpush1.msra.mxu0 0.0
        %963 = vmatprep.subr.mxu0 0.0
        %964 = vmatpush1.msra.mxu0 0.0
        %965 = vmatprep.subr.mxu0 0.0
        %966 = vmatpush1.msra.mxu0 0.0
        %967 = vmatprep.subr.mxu0 0.0
        %968 = vmatpush1.msra.mxu0 0.0
        %969 = vmatprep.subr.mxu0 0.0
        %970 = vmatpush1.msra.mxu0 0.0
        %971 = vmatprep.subr.mxu0 0.0
        %972 = vmatpush1.msra.mxu0 0.0
        %973 = vmatprep.subr.mxu0 0.0
        %974 = vmatpush1.msra.mxu0 0.0
        %975 = vmatprep.subr.mxu0 0.0
        %976 = vmatpush1.msra.mxu0 0.0
        %977 = vmatprep.subr.mxu0 0.0
        %978 = vmatpush1.msra.mxu0 0.0
        %979 = vmatprep.subr.mxu0 0.0
        %980 = vmatpush1.msra.mxu0 %v944
        %981 = vmatprep.subr.mxu0 0.0
        %982 = vmatpush2.msra.mxu0 0.0
        %983 = vmatprep.subr.mxu0 0.0
        %984 = vmatpush2.msra.mxu0 0.0
        %985 = vmatprep.subr.mxu0 0.0
        %986 = vmatpush2.msra.mxu0 0.0
        %987 = vmatprep.subr.mxu0 0.0
        %988 = vmatpush2.msra.mxu0 0.0
        %989 = vmatprep.subr.mxu0 0.0
        %990 = vmatpush2.msra.mxu0 0.0
        %991 = vmatprep.subr.mxu0 0.0
        %992 = vmatpush2.msra.mxu0 0.0
        %993 = vmatprep.subr.mxu0 0.0
        %994 = vmatpush2.msra.mxu0 0.0
        %995 = vmatprep.subr.mxu0 0.0
        %996 = vmatpush2.msra.mxu0 0.0
        %997 = vmatprep.subr.mxu0 0.0
        %998 = vmatpush2.msra.mxu0 0.0
        %999 = vmatprep.subr.mxu0 0.0
        %1000 = vmatpush2.msra.mxu0 0.0
        %1001 = vmatprep.subr.mxu0 0.0
        %1002 = vmatpush2.msra.mxu0 0.0
        %1003 = vmatprep.subr.mxu0 0.0
        %1004 = vmatpush2.msra.mxu0 0.0
        %1005 = vmatprep.subr.mxu0 0.0
        %1006 = vmatpush2.msra.mxu0 0.0
        %1007 = vmatprep.subr.mxu0 0.0
        %1008 = vmatpush2.msra.mxu0 0.0
        %1009 = vmatprep.subr.mxu0 0.0
        %1010 = vmatpush2.msra.mxu0 0.0
        %1011 = vmatprep.subr.mxu0 0.0
        %1012 = vmatpush2.msra.mxu0 0.0
        %1013 = vmatprep.mubr.f32.mxu0 0.0
        %1014 = vmatmul.mubr.f32.gmra.mxu0 %v947
        %v1015 = vpop.f32.mrf.mxu0
        %v1016 = vadd.f32 0.0, %v1015
        %v1017 = vpop.f32.mrf.mxu0
        %1018 = vdwg.mxu0
        %1019 = vrot.lane.b32.xlu0 %v839, 120
        %v1020 = vpop.permute.xlu0 %1019
        %1021 = vrot.lane.b32.xlu0 %v839, 88
        %v1022 = vpop.permute.xlu0 %1021
        %v1023 = vsel %vm849, %v1020, 0
        %v1025 = vsel %vm849, %v1022, 0
        %1027 = vmatprep.subr.mxu0 0.0
        %1028 = vmatpush1.xpose.msra.mxu0 0.0
        %1029 = vmatprep.subr.mxu0 0.0
        %1030 = vmatpush1.xpose.msra.mxu0 0.0
        %1031 = vmatprep.subr.mxu0 0.0
        %1032 = vmatpush1.xpose.msra.mxu0 0.0
        %1033 = vmatprep.subr.mxu0 0.0
        %1034 = vmatpush1.xpose.msra.mxu0 0.0
        %1035 = vmatprep.subr.mxu0 0.0
        %1036 = vmatpush1.xpose.msra.mxu0 0.0
        %1037 = vmatprep.subr.mxu0 0.0
        %1038 = vmatpush1.xpose.msra.mxu0 0.0
        %1039 = vmatprep.subr.mxu0 0.0
        %1040 = vmatpush1.xpose.msra.mxu0 0.0
        %1041 = vmatprep.subr.mxu0 0.0
        %1042 = vmatpush1.xpose.msra.mxu0 0.0
        %1043 = vmatprep.subr.mxu0 0.0
        %1044 = vmatpush1.xpose.msra.mxu0 0.0
        %1045 = vmatprep.subr.mxu0 0.0
        %1046 = vmatpush1.xpose.msra.mxu0 0.0
        %1047 = vmatprep.subr.mxu0 0.0
        %1048 = vmatpush1.xpose.msra.mxu0 0.0
        %1049 = vmatprep.subr.mxu0 0.0
        %1050 = vmatpush1.xpose.msra.mxu0 0.0
        %1051 = vmatprep.subr.mxu0 0.0
        %1052 = vmatpush1.xpose.msra.mxu0 0.0
        %1053 = vmatprep.subr.mxu0 0.0
        %1054 = vmatpush1.xpose.msra.mxu0 0.0
        %1055 = vmatprep.subr.mxu0 0.0
        %1056 = vmatpush1.xpose.msra.mxu0 0.0
        %1057 = vmatprep.subr.mxu0 0.0
        %1058 = vmatpush1.xpose.msra.mxu0 %v1025
        %1059 = vmatprep.subr.mxu0 0.0
        %1060 = vmatpush2.xpose.msra.mxu0 0.0
        %1061 = vmatprep.subr.mxu0 0.0
        %1062 = vmatpush2.xpose.msra.mxu0 0.0
        %1063 = vmatprep.subr.mxu0 0.0
        %1064 = vmatpush2.xpose.msra.mxu0 0.0
        %1065 = vmatprep.subr.mxu0 0.0
        %1066 = vmatpush2.xpose.msra.mxu0 0.0
        %1067 = vmatprep.subr.mxu0 0.0
        %1068 = vmatpush2.xpose.msra.mxu0 0.0
        %1069 = vmatprep.subr.mxu0 0.0
        %1070 = vmatpush2.xpose.msra.mxu0 0.0
        %1071 = vmatprep.subr.mxu0 0.0
        %1072 = vmatpush2.xpose.msra.mxu0 0.0
        %1073 = vmatprep.subr.mxu0 0.0
        %1074 = vmatpush2.xpose.msra.mxu0 0.0
        %1075 = vmatprep.subr.mxu0 0.0
        %1076 = vmatpush2.xpose.msra.mxu0 0.0
        %1077 = vmatprep.subr.mxu0 0.0
        %1078 = vmatpush2.xpose.msra.mxu0 0.0
        %1079 = vmatprep.subr.mxu0 0.0
        %1080 = vmatpush2.xpose.msra.mxu0 0.0
        %1081 = vmatprep.subr.mxu0 0.0
        %1082 = vmatpush2.xpose.msra.mxu0 0.0
        %1083 = vmatprep.subr.mxu0 0.0
        %1084 = vmatpush2.xpose.msra.mxu0 0.0
        %1085 = vmatprep.subr.mxu0 0.0
        %1086 = vmatpush2.xpose.msra.mxu0 0.0
        %1087 = vmatprep.subr.mxu0 0.0
        %1088 = vmatpush2.xpose.msra.mxu0 0.0
        %1089 = vmatprep.subr.mxu0 0.0
        %1090 = vmatpush2.xpose.msra.mxu0 0.0
        %1091 = vmatprep.mubr.f32.mxu0 0.0
        %1092 = vmatmul.mubr.f32.gmra.mxu0 %v1023
        %v1093 = vpop.f32.mrf.mxu0
        %v1094 = vadd.f32 0.0, %v1093
        %v1095 = vpop.f32.mrf.mxu0
        %1096 = vdwg.mxu0
        %v1097 = vmul.f32 %v1094, 0.35355338
        %v1098 = vadd.f32 %v1097, %v929
        %v1099 = vsel %vm849, %v1098, -inf
        %1100 = vmax.xlane.f32.xlu0 %v1099
        %v1101 = vpop.xlane.xlu0 %1100
        %v1102 = vsub.f32 %v1098, %v1101
        %v1103 = vmul.f32 %v1102, 1.442695
        %v1104 = vpow.pop %v1103
        %v1105 = vsel %vm849, %v1104, 0.0
        %1106 = vadd.xlane.f32.xlu0 %v1105
        %v1107 = vpop.xlane.xlu0 %1106
        %v1108 = vrcp.pop %v1107
        %v1109 = vmul.f32 %v1104, %v1108
        %1110 = vrot.lane.b32.xlu0 %v839, 56
        %v1111 = vpop.permute.xlu0 %1110
        %v1114 = vsel %vm849, %v1109, 0
        %1116 = vmatprep.subr.mxu0 0.0
        %1117 = vmatpush1.msra.mxu0 0.0
        %1118 = vmatprep.subr.mxu0 0.0
        %1119 = vmatpush1.msra.mxu0 0.0
        %1120 = vmatprep.subr.mxu0 0.0
        %1121 = vmatpush1.msra.mxu0 0.0
        %1122 = vmatprep.subr.mxu0 0.0
        %1123 = vmatpush1.msra.mxu0 0.0
        %1124 = vmatprep.subr.mxu0 0.0
        %1125 = vmatpush1.msra.mxu0 0.0
        %1126 = vmatprep.subr.mxu0 0.0
        %1127 = vmatpush1.msra.mxu0 0.0
        %1128 = vmatprep.subr.mxu0 0.0
        %1129 = vmatpush1.msra.mxu0 0.0
        %1130 = vmatprep.subr.mxu0 0.0
        %1131 = vmatpush1.msra.mxu0 0.0
        %1132 = vmatprep.subr.mxu0 0.0
        %1133 = vmatpush1.msra.mxu0 0.0
        %1134 = vmatprep.subr.mxu0 0.0
        %1135 = vmatpush1.msra.mxu0 0.0
        %1136 = vmatprep.subr.mxu0 0.0
        %1137 = vmatpush1.msra.mxu0 0.0
        %1138 = vmatprep.subr.mxu0 0.0
        %1139 = vmatpush1.msra.mxu0 0.0
        %1140 = vmatprep.subr.mxu0 0.0
        %1141 = vmatpush1.msra.mxu0 0.0
        %1142 = vmatprep.subr.mxu0 0.0
        %1143 = vmatpush1.msra.mxu0 0.0
        %1144 = vmatprep.subr.mxu0 0.0
        %1145 = vmatpush1.msra.mxu0 0.0
        %1146 = vmatprep.subr.mxu0 0.0
        %1147 = vmatpush1.msra.mxu0 %v1111
        %1148 = vmatprep.subr.mxu0 0.0
        %1149 = vmatpush2.msra.mxu0 0.0
        %1150 = vmatprep.subr.mxu0 0.0
        %1151 = vmatpush2.msra.mxu0 0.0
        %1152 = vmatprep.subr.mxu0 0.0
        %1153 = vmatpush2.msra.mxu0 0.0
        %1154 = vmatprep.subr.mxu0 0.0
        %1155 = vmatpush2.msra.mxu0 0.0
        %1156 = vmatprep.subr.mxu0 0.0
        %1157 = vmatpush2.msra.mxu0 0.0
        %1158 = vmatprep.subr.mxu0 0.0
        %1159 = vmatpush2.msra.mxu0 0.0
        %1160 = vmatprep.subr.mxu0 0.0
        %1161 = vmatpush2.msra.mxu0 0.0
        %1162 = vmatprep.subr.mxu0 0.0
        %1163 = vmatpush2.msra.mxu0 0.0
        %1164 = vmatprep.subr.mxu0 0.0
        %1165 = vmatpush2.msra.mxu0 0.0
        %1166 = vmatprep.subr.mxu0 0.0
        %1167 = vmatpush2.msra.mxu0 0.0
        %1168 = vmatprep.subr.mxu0 0.0
        %1169 = vmatpush2.msra.mxu0 0.0
        %1170 = vmatprep.subr.mxu0 0.0
        %1171 = vmatpush2.msra.mxu0 0.0
        %1172 = vmatprep.subr.mxu0 0.0
        %1173 = vmatpush2.msra.mxu0 0.0
        %1174 = vmatprep.subr.mxu0 0.0
        %1175 = vmatpush2.msra.mxu0 0.0
        %1176 = vmatprep.subr.mxu0 0.0
        %1177 = vmatpush2.msra.mxu0 0.0
        %1178 = vmatprep.subr.mxu0 0.0
        %1179 = vmatpush2.msra.mxu0 0.0
        %1180 = vmatprep.mubr.f32.mxu0 0.0
        %1181 = vmatmul.mubr.f32.gmra.mxu0 %v1114
        %v1182 = vpop.f32.mrf.mxu0
        %v1183 = vadd.f32 0.0, %v1182
        %v1184 = vpop.f32.mrf.mxu0
        %1185 = vdwg.mxu0
        %v1187 = vsel %vm849, %v1183, 0
        %1189 = vmatprep.subr.mxu0 0.0
        %1190 = vmatpush1.msra.mxu0 0.0
        %1191 = vmatprep.subr.mxu0 0.0
        %1192 = vmatpush1.msra.mxu0 0.0
        %1193 = vmatprep.subr.mxu0 0.0
        %1194 = vmatpush1.msra.mxu0 0.0
        %1195 = vmatprep.subr.mxu0 0.0
        %1196 = vmatpush1.msra.mxu0 0.0
        %1197 = vmatprep.subr.mxu0 0.0
        %1198 = vmatpush1.msra.mxu0 0.0
        %1199 = vmatprep.subr.mxu0 0.0
        %1200 = vmatpush1.msra.mxu0 0.0
        %1201 = vmatprep.subr.mxu0 0.0
        %1202 = vmatpush1.msra.mxu0 0.0
        %1203 = vmatprep.subr.mxu0 0.0
        %1204 = vmatpush1.msra.mxu0 0.0
        %1205 = vmatprep.subr.mxu0 0.0
        %1206 = vmatpush1.msra.mxu0 0.0
        %1207 = vmatprep.subr.mxu0 0.0
        %1208 = vmatpush1.msra.mxu0 0.0
        %1209 = vmatprep.subr.mxu0 0.0
        %1210 = vmatpush1.msra.mxu0 0.0
        %1211 = vmatprep.subr.mxu0 0.0
        %1212 = vmatpush1.msra.mxu0 0.0
        %1213 = vmatprep.subr.mxu0 0.0
        %1214 = vmatpush1.msra.mxu0 0.0
        %1215 = vmatprep.subr.mxu0 0.0
        %1216 = vmatpush1.msra.mxu0 0.0
        %1217 = vmatprep.subr.mxu0 0.0
        %1218 = vmatpush1.msra.mxu0 0.0
        %1219 = vmatprep.subr.mxu0 0.0
        %1220 = vmatpush1.msra.mxu0 %v843
        %1221 = vmatprep.subr.mxu0 0.0
        %1222 = vmatpush2.msra.mxu0 0.0
        %1223 = vmatprep.subr.mxu0 0.0
        %1224 = vmatpush2.msra.mxu0 0.0
        %1225 = vmatprep.subr.mxu0 0.0
        %1226 = vmatpush2.msra.mxu0 0.0
        %1227 = vmatprep.subr.mxu0 0.0
        %1228 = vmatpush2.msra.mxu0 0.0
        %1229 = vmatprep.subr.mxu0 0.0
        %1230 = vmatpush2.msra.mxu0 0.0
        %1231 = vmatprep.subr.mxu0 0.0
        %1232 = vmatpush2.msra.mxu0 0.0
        %1233 = vmatprep.subr.mxu0 0.0
        %1234 = vmatpush2.msra.mxu0 0.0
        %1235 = vmatprep.subr.mxu0 0.0
        %1236 = vmatpush2.msra.mxu0 0.0
        %1237 = vmatprep.subr.mxu0 0.0
        %1238 = vmatpush2.msra.mxu0 0.0
        %1239 = vmatprep.subr.mxu0 0.0
        %1240 = vmatpush2.msra.mxu0 0.0
        %1241 = vmatprep.subr.mxu0 0.0
        %1242 = vmatpush2.msra.mxu0 0.0
        %1243 = vmatprep.subr.mxu0 0.0
        %1244 = vmatpush2.msra.mxu0 0.0
        %1245 = vmatprep.subr.mxu0 0.0
        %1246 = vmatpush2.msra.mxu0 0.0
        %1247 = vmatprep.subr.mxu0 0.0
        %1248 = vmatpush2.msra.mxu0 0.0
        %1249 = vmatprep.subr.mxu0 0.0
        %1250 = vmatpush2.msra.mxu0 0.0
        %1251 = vmatprep.subr.mxu0 0.0
        %1252 = vmatpush2.msra.mxu0 0.0
        %1253 = vmatprep.mubr.f32.mxu0 0.0
        %1254 = vmatmul.mubr.f32.gmra.mxu0 %v1187
        %v1255 = vpop.f32.mrf.mxu0
        %v1256 = vadd.f32 0.0, %v1255
        %v1257 = vpop.f32.mrf.mxu0
        %1258 = vdwg.mxu0
        %v1260 = vsel %vm849, %v1016, 0
        %1262 = vmatprep.subr.mxu0 0.0
        %1263 = vmatpush1.msra.mxu0 0.0
        %1264 = vmatprep.subr.mxu0 0.0
        %1265 = vmatpush1.msra.mxu0 0.0
        %1266 = vmatprep.subr.mxu0 0.0
        %1267 = vmatpush1.msra.mxu0 0.0
        %1268 = vmatprep.subr.mxu0 0.0
        %1269 = vmatpush1.msra.mxu0 0.0
        %1270 = vmatprep.subr.mxu0 0.0
        %1271 = vmatpush1.msra.mxu0 0.0
        %1272 = vmatprep.subr.mxu0 0.0
        %1273 = vmatpush1.msra.mxu0 0.0
        %1274 = vmatprep.subr.mxu0 0.0
        %1275 = vmatpush1.msra.mxu0 0.0
        %1276 = vmatprep.subr.mxu0 0.0
        %1277 = vmatpush1.msra.mxu0 0.0
        %1278 = vmatprep.subr.mxu0 0.0
        %1279 = vmatpush1.msra.mxu0 0.0
        %1280 = vmatprep.subr.mxu0 0.0
        %1281 = vmatpush1.msra.mxu0 0.0
        %1282 = vmatprep.subr.mxu0 0.0
        %1283 = vmatpush1.msra.mxu0 0.0
        %1284 = vmatprep.subr.mxu0 0.0
        %1285 = vmatpush1.msra.mxu0 0.0
        %1286 = vmatprep.subr.mxu0 0.0
        %1287 = vmatpush1.msra.mxu0 0.0
        %1288 = vmatprep.subr.mxu0 0.0
        %1289 = vmatpush1.msra.mxu0 0.0
        %1290 = vmatprep.subr.mxu0 0.0
        %1291 = vmatpush1.msra.mxu0 0.0
        %1292 = vmatprep.subr.mxu0 0.0
        %1293 = vmatpush1.msra.mxu0 %v842
        %1294 = vmatprep.subr.mxu0 0.0
        %1295 = vmatpush2.msra.mxu0 0.0
        %1296 = vmatprep.subr.mxu0 0.0
        %1297 = vmatpush2.msra.mxu0 0.0
        %1298 = vmatprep.subr.mxu0 0.0
        %1299 = vmatpush2.msra.mxu0 0.0
        %1300 = vmatprep.subr.mxu0 0.0
        %1301 = vmatpush2.msra.mxu0 0.0
        %1302 = vmatprep.subr.mxu0 0.0
        %1303 = vmatpush2.msra.mxu0 0.0
        %1304 = vmatprep.subr.mxu0 0.0
        %1305 = vmatpush2.msra.mxu0 0.0
        %1306 = vmatprep.subr.mxu0 0.0
        %1307 = vmatpush2.msra.mxu0 0.0
        %1308 = vmatprep.subr.mxu0 0.0
        %1309 = vmatpush2.msra.mxu0 0.0
        %1310 = vmatprep.subr.mxu0 0.0
        %1311 = vmatpush2.msra.mxu0 0.0
        %1312 = vmatprep.subr.mxu0 0.0
        %1313 = vmatpush2.msra.mxu0 0.0
        %1314 = vmatprep.subr.mxu0 0.0
        %1315 = vmatpush2.msra.mxu0 0.0
        %1316 = vmatprep.subr.mxu0 0.0
        %1317 = vmatpush2.msra.mxu0 0.0
        %1318 = vmatprep.subr.mxu0 0.0
        %1319 = vmatpush2.msra.mxu0 0.0
        %1320 = vmatprep.subr.mxu0 0.0
        %1321 = vmatpush2.msra.mxu0 0.0
        %1322 = vmatprep.subr.mxu0 0.0
        %1323 = vmatpush2.msra.mxu0 0.0
        %1324 = vmatprep.subr.mxu0 0.0
        %1325 = vmatpush2.msra.mxu0 0.0
        %1326 = vmatprep.mubr.f32.mxu0 0.0
        %1327 = vmatmul.mubr.f32.gmra.mxu0 %v1260
        %v1328 = vpop.f32.mrf.mxu0
        %v1329 = vadd.f32 %v1256, %v1328
        %v1330 = vpop.f32.mrf.mxu0
        %1331 = vdwg.mxu0
        %1332 = vrot.lane.b32.xlu0 %v839, 112
        %v1333 = vpop.permute.xlu0 %1332
        %1334 = vrot.lane.b32.xlu0 %v839, 80
        %v1335 = vpop.permute.xlu0 %1334
        %v1336 = vsel %vm849, %v1333, 0
        %v1338 = vsel %vm849, %v1335, 0
        %1340 = vmatprep.subr.mxu0 0.0
        %1341 = vmatpush1.xpose.msra.mxu0 0.0
        %1342 = vmatprep.subr.mxu0 0.0
        %1343 = vmatpush1.xpose.msra.mxu0 0.0
        %1344 = vmatprep.subr.mxu0 0.0
        %1345 = vmatpush1.xpose.msra.mxu0 0.0
        %1346 = vmatprep.subr.mxu0 0.0
        %1347 = vmatpush1.xpose.msra.mxu0 0.0
        %1348 = vmatprep.subr.mxu0 0.0
        %1349 = vmatpush1.xpose.msra.mxu0 0.0
        %1350 = vmatprep.subr.mxu0 0.0
        %1351 = vmatpush1.xpose.msra.mxu0 0.0
        %1352 = vmatprep.subr.mxu0 0.0
        %1353 = vmatpush1.xpose.msra.mxu0 0.0
        %1354 = vmatprep.subr.mxu0 0.0
        %1355 = vmatpush1.xpose.msra.mxu0 0.0
        %1356 = vmatprep.subr.mxu0 0.0
        %1357 = vmatpush1.xpose.msra.mxu0 0.0
        %1358 = vmatprep.subr.mxu0 0.0
        %1359 = vmatpush1.xpose.msra.mxu0 0.0
        %1360 = vmatprep.subr.mxu0 0.0
        %1361 = vmatpush1.xpose.msra.mxu0 0.0
        %1362 = vmatprep.subr.mxu0 0.0
        %1363 = vmatpush1.xpose.msra.mxu0 0.0
        %1364 = vmatprep.subr.mxu0 0.0
        %1365 = vmatpush1.xpose.msra.mxu0 0.0
        %1366 = vmatprep.subr.mxu0 0.0
        %1367 = vmatpush1.xpose.msra.mxu0 0.0
        %1368 = vmatprep.subr.mxu0 0.0
        %1369 = vmatpush1.xpose.msra.mxu0 0.0
        %1370 = vmatprep.subr.mxu0 0.0
        %1371 = vmatpush1.xpose.msra.mxu0 %v1338
        %1372 = vmatprep.subr.mxu0 0.0
        %1373 = vmatpush2.xpose.msra.mxu0 0.0
        %1374 = vmatprep.subr.mxu0 0.0
        %1375 = vmatpush2.xpose.msra.mxu0 0.0
        %1376 = vmatprep.subr.mxu0 0.0
        %1377 = vmatpush2.xpose.msra.mxu0 0.0
        %1378 = vmatprep.subr.mxu0 0.0
        %1379 = vmatpush2.xpose.msra.mxu0 0.0
        %1380 = vmatprep.subr.mxu0 0.0
        %1381 = vmatpush2.xpose.msra.mxu0 0.0
        %1382 = vmatprep.subr.mxu0 0.0
        %1383 = vmatpush2.xpose.msra.mxu0 0.0
        %1384 = vmatprep.subr.mxu0 0.0
        %1385 = vmatpush2.xpose.msra.mxu0 0.0
        %1386 = vmatprep.subr.mxu0 0.0
        %1387 = vmatpush2.xpose.msra.mxu0 0.0
        %1388 = vmatprep.subr.mxu0 0.0
        %1389 = vmatpush2.xpose.msra.mxu0 0.0
        %1390 = vmatprep.subr.mxu0 0.0
        %1391 = vmatpush2.xpose.msra.mxu0 0.0
        %1392 = vmatprep.subr.mxu0 0.0
        %1393 = vmatpush2.xpose.msra.mxu0 0.0
        %1394 = vmatprep.subr.mxu0 0.0
        %1395 = vmatpush2.xpose.msra.mxu0 0.0
        %1396 = vmatprep.subr.mxu0 0.0
        %1397 = vmatpush2.xpose.msra.mxu0 0.0
        %1398 = vmatprep.subr.mxu0 0.0
        %1399 = vmatpush2.xpose.msra.mxu0 0.0
        %1400 = vmatprep.subr.mxu0 0.0
        %1401 = vmatpush2.xpose.msra.mxu0 0.0
        %1402 = vmatprep.subr.mxu0 0.0
        %1403 = vmatpush2.xpose.msra.mxu0 0.0
        %1404 = vmatprep.mubr.f32.mxu0 0.0
        %1405 = vmatmul.mubr.f32.gmra.mxu0 %v1336
        %v1406 = vpop.f32.mrf.mxu0
        %v1407 = vadd.f32 0.0, %v1406
        %v1408 = vpop.f32.mrf.mxu0
        %1409 = vdwg.mxu0
        %v1410 = vmul.f32 %v1407, 0.35355338
        %v1411 = vadd.f32 %v1410, %v929
        %v1412 = vsel %vm849, %v1411, -inf
        %1413 = vmax.xlane.f32.xlu0 %v1412
        %v1414 = vpop.xlane.xlu0 %1413
        %v1415 = vsub.f32 %v1411, %v1414
        %v1416 = vmul.f32 %v1415, 1.442695
        %v1417 = vpow.pop %v1416
        %v1418 = vsel %vm849, %v1417, 0.0
        %1419 = vadd.xlane.f32.xlu0 %v1418
        %v1420 = vpop.xlane.xlu0 %1419
        %v1421 = vrcp.pop %v1420
        %v1422 = vmul.f32 %v1417, %v1421
        %1423 = vrot.lane.b32.xlu0 %v839, 48
        %v1424 = vpop.permute.xlu0 %1423
        %v1427 = vsel %vm849, %v1422, 0
        %1429 = vmatprep.subr.mxu0 0.0
        %1430 = vmatpush1.msra.mxu0 0.0
        %1431 = vmatprep.subr.mxu0 0.0
        %1432 = vmatpush1.msra.mxu0 0.0
        %1433 = vmatprep.subr.mxu0 0.0
        %1434 = vmatpush1.msra.mxu0 0.0
        %1435 = vmatprep.subr.mxu0 0.0
        %1436 = vmatpush1.msra.mxu0 0.0
        %1437 = vmatprep.subr.mxu0 0.0
        %1438 = vmatpush1.msra.mxu0 0.0
        %1439 = vmatprep.subr.mxu0 0.0
        %1440 = vmatpush1.msra.mxu0 0.0
        %1441 = vmatprep.subr.mxu0 0.0
        %1442 = vmatpush1.msra.mxu0 0.0
        %1443 = vmatprep.subr.mxu0 0.0
        %1444 = vmatpush1.msra.mxu0 0.0
        %1445 = vmatprep.subr.mxu0 0.0
        %1446 = vmatpush1.msra.mxu0 0.0
        %1447 = vmatprep.subr.mxu0 0.0
        %1448 = vmatpush1.msra.mxu0 0.0
        %1449 = vmatprep.subr.mxu0 0.0
        %1450 = vmatpush1.msra.mxu0 0.0
        %1451 = vmatprep.subr.mxu0 0.0
        %1452 = vmatpush1.msra.mxu0 0.0
        %1453 = vmatprep.subr.mxu0 0.0
        %1454 = vmatpush1.msra.mxu0 0.0
        %1455 = vmatprep.subr.mxu0 0.0
        %1456 = vmatpush1.msra.mxu0 0.0
        %1457 = vmatprep.subr.mxu0 0.0
        %1458 = vmatpush1.msra.mxu0 0.0
        %1459 = vmatprep.subr.mxu0 0.0
        %1460 = vmatpush1.msra.mxu0 %v1424
        %1461 = vmatprep.subr.mxu0 0.0
        %1462 = vmatpush2.msra.mxu0 0.0
        %1463 = vmatprep.subr.mxu0 0.0
        %1464 = vmatpush2.msra.mxu0 0.0
        %1465 = vmatprep.subr.mxu0 0.0
        %1466 = vmatpush2.msra.mxu0 0.0
        %1467 = vmatprep.subr.mxu0 0.0
        %1468 = vmatpush2.msra.mxu0 0.0
        %1469 = vmatprep.subr.mxu0 0.0
        %1470 = vmatpush2.msra.mxu0 0.0
        %1471 = vmatprep.subr.mxu0 0.0
        %1472 = vmatpush2.msra.mxu0 0.0
        %1473 = vmatprep.subr.mxu0 0.0
        %1474 = vmatpush2.msra.mxu0 0.0
        %1475 = vmatprep.subr.mxu0 0.0
        %1476 = vmatpush2.msra.mxu0 0.0
        %1477 = vmatprep.subr.mxu0 0.0
        %1478 = vmatpush2.msra.mxu0 0.0
        %1479 = vmatprep.subr.mxu0 0.0
        %1480 = vmatpush2.msra.mxu0 0.0
        %1481 = vmatprep.subr.mxu0 0.0
        %1482 = vmatpush2.msra.mxu0 0.0
        %1483 = vmatprep.subr.mxu0 0.0
        %1484 = vmatpush2.msra.mxu0 0.0
        %1485 = vmatprep.subr.mxu0 0.0
        %1486 = vmatpush2.msra.mxu0 0.0
        %1487 = vmatprep.subr.mxu0 0.0
        %1488 = vmatpush2.msra.mxu0 0.0
        %1489 = vmatprep.subr.mxu0 0.0
        %1490 = vmatpush2.msra.mxu0 0.0
        %1491 = vmatprep.subr.mxu0 0.0
        %1492 = vmatpush2.msra.mxu0 0.0
        %1493 = vmatprep.mubr.f32.mxu0 0.0
        %1494 = vmatmul.mubr.f32.gmra.mxu0 %v1427
        %v1495 = vpop.f32.mrf.mxu0
        %v1496 = vadd.f32 0.0, %v1495
        %v1497 = vpop.f32.mrf.mxu0
        %1498 = vdwg.mxu0
        %v1500 = vsel %vm849, %v1496, 0
        %1502 = vmatprep.subr.mxu0 0.0
        %1503 = vmatpush1.msra.mxu0 0.0
        %1504 = vmatprep.subr.mxu0 0.0
        %1505 = vmatpush1.msra.mxu0 0.0
        %1506 = vmatprep.subr.mxu0 0.0
        %1507 = vmatpush1.msra.mxu0 0.0
        %1508 = vmatprep.subr.mxu0 0.0
        %1509 = vmatpush1.msra.mxu0 0.0
        %1510 = vmatprep.subr.mxu0 0.0
        %1511 = vmatpush1.msra.mxu0 0.0
        %1512 = vmatprep.subr.mxu0 0.0
        %1513 = vmatpush1.msra.mxu0 0.0
        %1514 = vmatprep.subr.mxu0 0.0
        %1515 = vmatpush1.msra.mxu0 0.0
        %1516 = vmatprep.subr.mxu0 0.0
        %1517 = vmatpush1.msra.mxu0 0.0
        %1518 = vmatprep.subr.mxu0 0.0
        %1519 = vmatpush1.msra.mxu0 0.0
        %1520 = vmatprep.subr.mxu0 0.0
        %1521 = vmatpush1.msra.mxu0 0.0
        %1522 = vmatprep.subr.mxu0 0.0
        %1523 = vmatpush1.msra.mxu0 0.0
        %1524 = vmatprep.subr.mxu0 0.0
        %1525 = vmatpush1.msra.mxu0 0.0
        %1526 = vmatprep.subr.mxu0 0.0
        %1527 = vmatpush1.msra.mxu0 0.0
        %1528 = vmatprep.subr.mxu0 0.0
        %1529 = vmatpush1.msra.mxu0 0.0
        %1530 = vmatprep.subr.mxu0 0.0
        %1531 = vmatpush1.msra.mxu0 0.0
        %1532 = vmatprep.subr.mxu0 0.0
        %1533 = vmatpush1.msra.mxu0 %v844
        %1534 = vmatprep.subr.mxu0 0.0
        %1535 = vmatpush2.msra.mxu0 0.0
        %1536 = vmatprep.subr.mxu0 0.0
        %1537 = vmatpush2.msra.mxu0 0.0
        %1538 = vmatprep.subr.mxu0 0.0
        %1539 = vmatpush2.msra.mxu0 0.0
        %1540 = vmatprep.subr.mxu0 0.0
        %1541 = vmatpush2.msra.mxu0 0.0
        %1542 = vmatprep.subr.mxu0 0.0
        %1543 = vmatpush2.msra.mxu0 0.0
        %1544 = vmatprep.subr.mxu0 0.0
        %1545 = vmatpush2.msra.mxu0 0.0
        %1546 = vmatprep.subr.mxu0 0.0
        %1547 = vmatpush2.msra.mxu0 0.0
        %1548 = vmatprep.subr.mxu0 0.0
        %1549 = vmatpush2.msra.mxu0 0.0
        %1550 = vmatprep.subr.mxu0 0.0
        %1551 = vmatpush2.msra.mxu0 0.0
        %1552 = vmatprep.subr.mxu0 0.0
        %1553 = vmatpush2.msra.mxu0 0.0
        %1554 = vmatprep.subr.mxu0 0.0
        %1555 = vmatpush2.msra.mxu0 0.0
        %1556 = vmatprep.subr.mxu0 0.0
        %1557 = vmatpush2.msra.mxu0 0.0
        %1558 = vmatprep.subr.mxu0 0.0
        %1559 = vmatpush2.msra.mxu0 0.0
        %1560 = vmatprep.subr.mxu0 0.0
        %1561 = vmatpush2.msra.mxu0 0.0
        %1562 = vmatprep.subr.mxu0 0.0
        %1563 = vmatpush2.msra.mxu0 0.0
        %1564 = vmatprep.subr.mxu0 0.0
        %1565 = vmatpush2.msra.mxu0 0.0
        %1566 = vmatprep.mubr.f32.mxu0 0.0
        %1567 = vmatmul.mubr.f32.gmra.mxu0 %v1500
        %v1568 = vpop.f32.mrf.mxu0
        %v1569 = vadd.f32 0.0, %v1568
        %v1570 = vpop.f32.mrf.mxu0
        %1571 = vdwg.mxu0
        %v1572 = vadd.f32 %v1329, %v1569
        %1573 = vrot.lane.b32.xlu0 %v839, 104
        %v1574 = vpop.permute.xlu0 %1573
        %1575 = vrot.lane.b32.xlu0 %v839, 72
        %v1576 = vpop.permute.xlu0 %1575
        %v1577 = vsel %vm849, %v1574, 0
        %v1579 = vsel %vm849, %v1576, 0
        %1581 = vmatprep.subr.mxu0 0.0
        %1582 = vmatpush1.xpose.msra.mxu0 0.0
        %1583 = vmatprep.subr.mxu0 0.0
        %1584 = vmatpush1.xpose.msra.mxu0 0.0
        %1585 = vmatprep.subr.mxu0 0.0
        %1586 = vmatpush1.xpose.msra.mxu0 0.0
        %1587 = vmatprep.subr.mxu0 0.0
        %1588 = vmatpush1.xpose.msra.mxu0 0.0
        %1589 = vmatprep.subr.mxu0 0.0
        %1590 = vmatpush1.xpose.msra.mxu0 0.0
        %1591 = vmatprep.subr.mxu0 0.0
        %1592 = vmatpush1.xpose.msra.mxu0 0.0
        %1593 = vmatprep.subr.mxu0 0.0
        %1594 = vmatpush1.xpose.msra.mxu0 0.0
        %1595 = vmatprep.subr.mxu0 0.0
        %1596 = vmatpush1.xpose.msra.mxu0 0.0
        %1597 = vmatprep.subr.mxu0 0.0
        %1598 = vmatpush1.xpose.msra.mxu0 0.0
        %1599 = vmatprep.subr.mxu0 0.0
        %1600 = vmatpush1.xpose.msra.mxu0 0.0
        %1601 = vmatprep.subr.mxu0 0.0
        %1602 = vmatpush1.xpose.msra.mxu0 0.0
        %1603 = vmatprep.subr.mxu0 0.0
        %1604 = vmatpush1.xpose.msra.mxu0 0.0
        %1605 = vmatprep.subr.mxu0 0.0
        %1606 = vmatpush1.xpose.msra.mxu0 0.0
        %1607 = vmatprep.subr.mxu0 0.0
        %1608 = vmatpush1.xpose.msra.mxu0 0.0
        %1609 = vmatprep.subr.mxu0 0.0
        %1610 = vmatpush1.xpose.msra.mxu0 0.0
        %1611 = vmatprep.subr.mxu0 0.0
        %1612 = vmatpush1.xpose.msra.mxu0 %v1579
        %1613 = vmatprep.subr.mxu0 0.0
        %1614 = vmatpush2.xpose.msra.mxu0 0.0
        %1615 = vmatprep.subr.mxu0 0.0
        %1616 = vmatpush2.xpose.msra.mxu0 0.0
        %1617 = vmatprep.subr.mxu0 0.0
        %1618 = vmatpush2.xpose.msra.mxu0 0.0
        %1619 = vmatprep.subr.mxu0 0.0
        %1620 = vmatpush2.xpose.msra.mxu0 0.0
        %1621 = vmatprep.subr.mxu0 0.0
        %1622 = vmatpush2.xpose.msra.mxu0 0.0
        %1623 = vmatprep.subr.mxu0 0.0
        %1624 = vmatpush2.xpose.msra.mxu0 0.0
        %1625 = vmatprep.subr.mxu0 0.0
        %1626 = vmatpush2.xpose.msra.mxu0 0.0
        %1627 = vmatprep.subr.mxu0 0.0
        %1628 = vmatpush2.xpose.msra.mxu0 0.0
        %1629 = vmatprep.subr.mxu0 0.0
        %1630 = vmatpush2.xpose.msra.mxu0 0.0
        %1631 = vmatprep.subr.mxu0 0.0
        %1632 = vmatpush2.xpose.msra.mxu0 0.0
        %1633 = vmatprep.subr.mxu0 0.0
        %1634 = vmatpush2.xpose.msra.mxu0 0.0
        %1635 = vmatprep.subr.mxu0 0.0
        %1636 = vmatpush2.xpose.msra.mxu0 0.0
        %1637 = vmatprep.subr.mxu0 0.0
        %1638 = vmatpush2.xpose.msra.mxu0 0.0
        %1639 = vmatprep.subr.mxu0 0.0
        %1640 = vmatpush2.xpose.msra.mxu0 0.0
        %1641 = vmatprep.subr.mxu0 0.0
        %1642 = vmatpush2.xpose.msra.mxu0 0.0
        %1643 = vmatprep.subr.mxu0 0.0
        %1644 = vmatpush2.xpose.msra.mxu0 0.0
        %1645 = vmatprep.mubr.f32.mxu0 0.0
        %1646 = vmatmul.mubr.f32.gmra.mxu0 %v1577
        %v1647 = vpop.f32.mrf.mxu0
        %v1648 = vadd.f32 0.0, %v1647
        %v1649 = vpop.f32.mrf.mxu0
        %1650 = vdwg.mxu0
        %v1651 = vmul.f32 %v1648, 0.35355338
        %v1652 = vadd.f32 %v1651, %v929
        %v1653 = vsel %vm849, %v1652, -inf
        %1654 = vmax.xlane.f32.xlu0 %v1653
        %v1655 = vpop.xlane.xlu0 %1654
        %v1656 = vsub.f32 %v1652, %v1655
        %v1657 = vmul.f32 %v1656, 1.442695
        %v1658 = vpow.pop %v1657
        %v1659 = vsel %vm849, %v1658, 0.0
        %1660 = vadd.xlane.f32.xlu0 %v1659
        %v1661 = vpop.xlane.xlu0 %1660
        %v1662 = vrcp.pop %v1661
        %v1663 = vmul.f32 %v1658, %v1662
        %1664 = vrot.lane.b32.xlu0 %v839, 40
        %v1665 = vpop.permute.xlu0 %1664
        %v1668 = vsel %vm849, %v1663, 0
        %1670 = vmatprep.subr.mxu0 0.0
        %1671 = vmatpush1.msra.mxu0 0.0
        %1672 = vmatprep.subr.mxu0 0.0
        %1673 = vmatpush1.msra.mxu0 0.0
        %1674 = vmatprep.subr.mxu0 0.0
        %1675 = vmatpush1.msra.mxu0 0.0
        %1676 = vmatprep.subr.mxu0 0.0
        %1677 = vmatpush1.msra.mxu0 0.0
        %1678 = vmatprep.subr.mxu0 0.0
        %1679 = vmatpush1.msra.mxu0 0.0
        %1680 = vmatprep.subr.mxu0 0.0
        %1681 = vmatpush1.msra.mxu0 0.0
        %1682 = vmatprep.subr.mxu0 0.0
        %1683 = vmatpush1.msra.mxu0 0.0
        %1684 = vmatprep.subr.mxu0 0.0
        %1685 = vmatpush1.msra.mxu0 0.0
        %1686 = vmatprep.subr.mxu0 0.0
        %1687 = vmatpush1.msra.mxu0 0.0
        %1688 = vmatprep.subr.mxu0 0.0
        %1689 = vmatpush1.msra.mxu0 0.0
        %1690 = vmatprep.subr.mxu0 0.0
        %1691 = vmatpush1.msra.mxu0 0.0
        %1692 = vmatprep.subr.mxu0 0.0
        %1693 = vmatpush1.msra.mxu0 0.0
        %1694 = vmatprep.subr.mxu0 0.0
        %1695 = vmatpush1.msra.mxu0 0.0
        %1696 = vmatprep.subr.mxu0 0.0
        %1697 = vmatpush1.msra.mxu0 0.0
        %1698 = vmatprep.subr.mxu0 0.0
        %1699 = vmatpush1.msra.mxu0 0.0
        %1700 = vmatprep.subr.mxu0 0.0
        %1701 = vmatpush1.msra.mxu0 %v1665
        %1702 = vmatprep.subr.mxu0 0.0
        %1703 = vmatpush2.msra.mxu0 0.0
        %1704 = vmatprep.subr.mxu0 0.0
        %1705 = vmatpush2.msra.mxu0 0.0
        %1706 = vmatprep.subr.mxu0 0.0
        %1707 = vmatpush2.msra.mxu0 0.0
        %1708 = vmatprep.subr.mxu0 0.0
        %1709 = vmatpush2.msra.mxu0 0.0
        %1710 = vmatprep.subr.mxu0 0.0
        %1711 = vmatpush2.msra.mxu0 0.0
        %1712 = vmatprep.subr.mxu0 0.0
        %1713 = vmatpush2.msra.mxu0 0.0
        %1714 = vmatprep.subr.mxu0 0.0
        %1715 = vmatpush2.msra.mxu0 0.0
        %1716 = vmatprep.subr.mxu0 0.0
        %1717 = vmatpush2.msra.mxu0 0.0
        %1718 = vmatprep.subr.mxu0 0.0
        %1719 = vmatpush2.msra.mxu0 0.0
        %1720 = vmatprep.subr.mxu0 0.0
        %1721 = vmatpush2.msra.mxu0 0.0
        %1722 = vmatprep.subr.mxu0 0.0
        %1723 = vmatpush2.msra.mxu0 0.0
        %1724 = vmatprep.subr.mxu0 0.0
        %1725 = vmatpush2.msra.mxu0 0.0
        %1726 = vmatprep.subr.mxu0 0.0
        %1727 = vmatpush2.msra.mxu0 0.0
        %1728 = vmatprep.subr.mxu0 0.0
        %1729 = vmatpush2.msra.mxu0 0.0
        %1730 = vmatprep.subr.mxu0 0.0
        %1731 = vmatpush2.msra.mxu0 0.0
        %1732 = vmatprep.subr.mxu0 0.0
        %1733 = vmatpush2.msra.mxu0 0.0
        %1734 = vmatprep.mubr.f32.mxu0 0.0
        %1735 = vmatmul.mubr.f32.gmra.mxu0 %v1668
        %v1736 = vpop.f32.mrf.mxu0
        %v1737 = vadd.f32 0.0, %v1736
        %v1738 = vpop.f32.mrf.mxu0
        %1739 = vdwg.mxu0
        %v1741 = vsel %vm849, %v1737, 0
        %1743 = vmatprep.subr.mxu0 0.0
        %1744 = vmatpush1.msra.mxu0 0.0
        %1745 = vmatprep.subr.mxu0 0.0
        %1746 = vmatpush1.msra.mxu0 0.0
        %1747 = vmatprep.subr.mxu0 0.0
        %1748 = vmatpush1.msra.mxu0 0.0
        %1749 = vmatprep.subr.mxu0 0.0
        %1750 = vmatpush1.msra.mxu0 0.0
        %1751 = vmatprep.subr.mxu0 0.0
        %1752 = vmatpush1.msra.mxu0 0.0
        %1753 = vmatprep.subr.mxu0 0.0
        %1754 = vmatpush1.msra.mxu0 0.0
        %1755 = vmatprep.subr.mxu0 0.0
        %1756 = vmatpush1.msra.mxu0 0.0
        %1757 = vmatprep.subr.mxu0 0.0
        %1758 = vmatpush1.msra.mxu0 0.0
        %1759 = vmatprep.subr.mxu0 0.0
        %1760 = vmatpush1.msra.mxu0 0.0
        %1761 = vmatprep.subr.mxu0 0.0
        %1762 = vmatpush1.msra.mxu0 0.0
        %1763 = vmatprep.subr.mxu0 0.0
        %1764 = vmatpush1.msra.mxu0 0.0
        %1765 = vmatprep.subr.mxu0 0.0
        %1766 = vmatpush1.msra.mxu0 0.0
        %1767 = vmatprep.subr.mxu0 0.0
        %1768 = vmatpush1.msra.mxu0 0.0
        %1769 = vmatprep.subr.mxu0 0.0
        %1770 = vmatpush1.msra.mxu0 0.0
        %1771 = vmatprep.subr.mxu0 0.0
        %1772 = vmatpush1.msra.mxu0 0.0
        %1773 = vmatprep.subr.mxu0 0.0
        %1774 = vmatpush1.msra.mxu0 %v845
        %1775 = vmatprep.subr.mxu0 0.0
        %1776 = vmatpush2.msra.mxu0 0.0
        %1777 = vmatprep.subr.mxu0 0.0
        %1778 = vmatpush2.msra.mxu0 0.0
        %1779 = vmatprep.subr.mxu0 0.0
        %1780 = vmatpush2.msra.mxu0 0.0
        %1781 = vmatprep.subr.mxu0 0.0
        %1782 = vmatpush2.msra.mxu0 0.0
        %1783 = vmatprep.subr.mxu0 0.0
        %1784 = vmatpush2.msra.mxu0 0.0
        %1785 = vmatprep.subr.mxu0 0.0
        %1786 = vmatpush2.msra.mxu0 0.0
        %1787 = vmatprep.subr.mxu0 0.0
        %1788 = vmatpush2.msra.mxu0 0.0
        %1789 = vmatprep.subr.mxu0 0.0
        %1790 = vmatpush2.msra.mxu0 0.0
        %1791 = vmatprep.subr.mxu0 0.0
        %1792 = vmatpush2.msra.mxu0 0.0
        %1793 = vmatprep.subr.mxu0 0.0
        %1794 = vmatpush2.msra.mxu0 0.0
        %1795 = vmatprep.subr.mxu0 0.0
        %1796 = vmatpush2.msra.mxu0 0.0
        %1797 = vmatprep.subr.mxu0 0.0
        %1798 = vmatpush2.msra.mxu0 0.0
        %1799 = vmatprep.subr.mxu0 0.0
        %1800 = vmatpush2.msra.mxu0 0.0
        %1801 = vmatprep.subr.mxu0 0.0
        %1802 = vmatpush2.msra.mxu0 0.0
        %1803 = vmatprep.subr.mxu0 0.0
        %1804 = vmatpush2.msra.mxu0 0.0
        %1805 = vmatprep.subr.mxu0 0.0
        %1806 = vmatpush2.msra.mxu0 0.0
        %1807 = vmatprep.mubr.f32.mxu0 0.0
        %1808 = vmatmul.mubr.f32.gmra.mxu0 %v1741
        %v1809 = vpop.f32.mrf.mxu0
        %v1810 = vadd.f32 0.0, %v1809
        %v1811 = vpop.f32.mrf.mxu0
        %1812 = vdwg.mxu0
        %v1813 = vadd.f32 %v1572, %v1810
        %v1814 = vld [vmem:[%s8] sm:$0x1]
        %v1816 = vlaneseq
        %v1817 = vshrl.u32 %v1816, 7
        %v1818 = vsub.s32 0, %v1817
        %v1819 = vrot.slane %v1814, %v1818
        %v1821 = vadd.f32 %v1813, %v1819
        %v1822 = vadd.f32 %v1821, %v756
        %v1823 = vld [vmem:[%s9] sm:$0x1]
        %v1824 = vld [vmem:[%s10] sm:$0x1]
        %v1825 = vsel %vm721, %v1822, 0.0
        %1826 = vadd.xlane.f32.xlu0 %v1825
        %v1827 = vpop.xlane.xlu0 %1826
        %v1828 = vmul.f32 %v1827, %v725
        %v1829 = vsub.f32 %v1822, %v1828
        %v1830 = vmul.f32 %v1829, %v1829
        %v1831 = vsel %vm721, %v1830, 0.0
        %1832 = vadd.xlane.f32.xlu0 %v1831
        %v1833 = vpop.xlane.xlu0 %1832
        %v1834 = vmul.f32 %v1833, %v725
        %v1835 = vadd.f32 %v1834, 1e-07
        %v1836 = vrsqrt.pop %v1835
        %v1837 = vmul.f32 %v1829, %v1836
        %v1839 = vlaneseq
        %v1840 = vshrl.u32 %v1839, 7
        %v1841 = vsub.s32 0, %v1840
        %v1842 = vrot.slane %v1823, %v1841
        %v1844 = vmul.f32 %v1837, %v1842
        %v1846 = vlaneseq
        %v1847 = vshrl.u32 %v1846, 7
        %v1848 = vsub.s32 0, %v1847
        %v1849 = vrot.slane %v1824, %v1848
        %v1851 = vadd.f32 %v1844, %v1849
        %v1852 = vld [vmem:[%s11] sm:$0xff]
        %v1853 = vld [vmem:[%s11 + $0x8] sm:$0xff]
        %v1854 = vld [vmem:[%s11 + $0x10] sm:$0xff]
        %v1855 = vld [vmem:[%s11 + $0x18] sm:$0xff]
        %v1856 = vld [vmem:[%s12] sm:$0x1]
        %v1858 = vlaneseq
        %v1859 = vshrl.u32 %v1858, 7
        %v1860 = vsub.s32 0, %v1859
        %v1861 = vrot.slane %v1856, %v1860
        %v1864 = vsel %vm721, %v1851, 0
        %1866 = vmatprep.subr.mxu0 0.0
        %1867 = vmatpush1.msra.mxu0 0.0
        %1868 = vmatprep.subr.mxu0 0.0
        %1869 = vmatpush1.msra.mxu0 0.0
        %1870 = vmatprep.subr.mxu0 0.0
        %1871 = vmatpush1.msra.mxu0 0.0
        %1872 = vmatprep.subr.mxu0 0.0
        %1873 = vmatpush1.msra.mxu0 0.0
        %1874 = vmatprep.subr.mxu0 0.0
        %1875 = vmatpush1.msra.mxu0 0.0
        %1876 = vmatprep.subr.mxu0 0.0
        %1877 = vmatpush1.msra.mxu0 0.0
        %1878 = vmatprep.subr.mxu0 0.0
        %1879 = vmatpush1.msra.mxu0 0.0
        %1880 = vmatprep.subr.mxu0 0.0
        %1881 = vmatpush1.msra.mxu0 0.0
        %1882 = vmatprep.subr.mxu0 0.0
        %1883 = vmatpush1.msra.mxu0 0.0
        %1884 = vmatprep.subr.mxu0 0.0
        %1885 = vmatpush1.msra.mxu0 0.0
        %1886 = vmatprep.subr.mxu0 0.0
        %1887 = vmatpush1.msra.mxu0 0.0
        %1888 = vmatprep.subr.mxu0 0.0
        %1889 = vmatpush1.msra.mxu0 0.0
        %1890 = vmatprep.subr.mxu0 0.0
        %1891 = vmatpush1.msra.mxu0 %v1855
        %1892 = vmatprep.subr.mxu0 0.0
        %1893 = vmatpush1.msra.mxu0 %v1854
        %1894 = vmatprep.subr.mxu0 0.0
        %1895 = vmatpush1.msra.mxu0 %v1853
        %1896 = vmatprep.subr.mxu0 0.0
        %1897 = vmatpush1.msra.mxu0 %v1852
        %1898 = vmatprep.subr.mxu0 0.0
        %1899 = vmatpush2.msra.mxu0 0.0
        %1900 = vmatprep.subr.mxu0 0.0
        %1901 = vmatpush2.msra.mxu0 0.0
        %1902 = vmatprep.subr.mxu0 0.0
        %1903 = vmatpush2.msra.mxu0 0.0
        %1904 = vmatprep.subr.mxu0 0.0
        %1905 = vmatpush2.msra.mxu0 0.0
        %1906 = vmatprep.subr.mxu0 0.0
        %1907 = vmatpush2.msra.mxu0 0.0
        %1908 = vmatprep.subr.mxu0 0.0
        %1909 = vmatpush2.msra.mxu0 0.0
        %1910 = vmatprep.subr.mxu0 0.0
        %1911 = vmatpush2.msra.mxu0 0.0
        %1912 = vmatprep.subr.mxu0 0.0
        %1913 = vmatpush2.msra.mxu0 0.0
        %1914 = vmatprep.subr.mxu0 0.0
        %1915 = vmatpush2.msra.mxu0 0.0
        %1916 = vmatprep.subr.mxu0 0.0
        %1917 = vmatpush2.msra.mxu0 0.0
        %1918 = vmatprep.subr.mxu0 0.0
        %1919 = vmatpush2.msra.mxu0 0.0
        %1920 = vmatprep.subr.mxu0 0.0
        %1921 = vmatpush2.msra.mxu0 0.0
        %1922 = vmatprep.subr.mxu0 0.0
        %1923 = vmatpush2.msra.mxu0 0.0
        %1924 = vmatprep.subr.mxu0 0.0
        %1925 = vmatpush2.msra.mxu0 0.0
        %1926 = vmatprep.subr.mxu0 0.0
        %1927 = vmatpush2.msra.mxu0 0.0
        %1928 = vmatprep.subr.mxu0 0.0
        %1929 = vmatpush2.msra.mxu0 0.0
        %1930 = vmatprep.mubr.f32.mxu0 0.0
        %1931 = vmatmul.mubr.f32.gmra.mxu0 %v1864
        %v1932 = vpop.f32.mrf.mxu0
        %v1933 = vadd.f32 %v1861, %v1932
        %v1934 = vpop.f32.mrf.mxu0
        %1935 = vdwg.mxu0
        %v1936 = vmul.f32 %v1933, 0.5
        %v1937 = vmul.f32 %v1933, 0.044715
        %v1938 = vmul.f32 %v1937, %v1933
        %v1939 = vmul.f32 %v1938, %v1933
        %v1940 = vadd.f32 %v1933, %v1939
        %v1941 = vmul.f32 %v1940, 0.7978846
        %v1942 = vtanh.pop %v1941
        %v1943 = vadd.f32 %v1942, 1.0
        %v1944 = vmul.f32 %v1936, %v1943
        %v1945 = vld [vmem:[%s13] sm:$0xff]
        %v1946 = vld [vmem:[%s13 + $0x8] sm:$0xff]
        %v1947 = vld [vmem:[%s13 + $0x10] sm:$0xff]
        %v1948 = vld [vmem:[%s13 + $0x18] sm:$0xff]
        %v1949 = vld [vmem:[%s13 + $0x20] sm:$0xff]
        %v1950 = vld [vmem:[%s13 + $0x28] sm:$0xff]
        %v1951 = vld [vmem:[%s13 + $0x30] sm:$0xff]
        %v1952 = vld [vmem:[%s13 + $0x38] sm:$0xff]
        %v1953 = vld [vmem:[%s14] sm:$0x1]
        %v1955 = vlaneseq
        %v1956 = vshrl.u32 %v1955, 7
        %v1957 = vsub.s32 0, %v1956
        %v1958 = vrot.slane %v1953, %v1957
        %vm1960 = vcmask 523264
        %v1962 = vsel %vm1960, %v1944, 0
        %1964 = vmatprep.subr.mxu0 0.0
        %1965 = vmatpush1.msra.mxu0 0.0
        %1966 = vmatprep.subr.mxu0 0.0
        %1967 = vmatpush1.msra.mxu0 0.0
        %1968 = vmatprep.subr.mxu0 0.0
        %1969 = vmatpush1.msra.mxu0 0.0
        %1970 = vmatprep.subr.mxu0 0.0
        %1971 = vmatpush1.msra.mxu0 0.0
        %1972 = vmatprep.subr.mxu0 0.0
        %1973 = vmatpush1.msra.mxu0 0.0
        %1974 = vmatprep.subr.mxu0 0.0
        %1975 = vmatpush1.msra.mxu0 0.0
        %1976 = vmatprep.subr.mxu0 0.0
        %1977 = vmatpush1.msra.mxu0 0.0
        %1978 = vmatprep.subr.mxu0 0.0
        %1979 = vmatpush1.msra.mxu0 0.0
        %1980 = vmatprep.subr.mxu0 0.0
        %1981 = vmatpush1.msra.mxu0 %v1952
        %1982 = vmatprep.subr.mxu0 0.0
        %1983 = vmatpush1.msra.mxu0 %v1951
        %1984 = vmatprep.subr.mxu0 0.0
        %1985 = vmatpush1.msra.mxu0 %v1950
        %1986 = vmatprep.subr.mxu0 0.0
        %1987 = vmatpush1.msra.mxu0 %v1949
        %1988 = vmatprep.subr.mxu0 0.0
        %1989 = vmatpush1.msra.mxu0 %v1948
        %1990 = vmatprep.subr.mxu0 0.0
        %1991 = vmatpush1.msra.mxu0 %v1947
        %1992 = vmatprep.subr.mxu0 0.0
        %1993 = vmatpush1.msra.mxu0 %v1946
        %1994 = vmatprep.subr.mxu0 0.0
        %1995 = vmatpush1.msra.mxu0 %v1945
        %1996 = vmatprep.subr.mxu0 0.0
        %1997 = vmatpush2.msra.mxu0 0.0
        %1998 = vmatprep.subr.mxu0 0.0
        %1999 = vmatpush2.msra.mxu0 0.0
        %2000 = vmatprep.subr.mxu0 0.0
        %2001 = vmatpush2.msra.mxu0 0.0
        %2002 = vmatprep.subr.mxu0 0.0
        %2003 = vmatpush2.msra.mxu0 0.0
        %2004 = vmatprep.subr.mxu0 0.0
        %2005 = vmatpush2.msra.mxu0 0.0
        %2006 = vmatprep.subr.mxu0 0.0
        %2007 = vmatpush2.msra.mxu0 0.0
        %2008 = vmatprep.subr.mxu0 0.0
        %2009 = vmatpush2.msra.mxu0 0.0
        %2010 = vmatprep.subr.mxu0 0.0
        %2011 = vmatpush2.msra.mxu0 0.0
        %2012 = vmatprep.subr.mxu0 0.0
        %2013 = vmatpush2.msra.mxu0 0.0
        %2014 = vmatprep.subr.mxu0 0.0
        %2015 = vmatpush2.msra.mxu0 0.0
        %2016 = vmatprep.subr.mxu0 0.0
        %2017 = vmatpush2.msra.mxu0 0.0
        %2018 = vmatprep.subr.mxu0 0.0
        %2019 = vmatpush2.msra.mxu0 0.0
        %2020 = vmatprep.subr.mxu0 0.0
        %2021 = vmatpush2.msra.mxu0 0.0
        %2022 = vmatprep.subr.mxu0 0.0
        %2023 = vmatpush2.msra.mxu0 0.0
        %2024 = vmatprep.subr.mxu0 0.0
        %2025 = vmatpush2.msra.mxu0 0.0
        %2026 = vmatprep.subr.mxu0 0.0
        %2027 = vmatpush2.msra.mxu0 0.0
        %2028 = vmatprep.mubr.f32.mxu0 0.0
        %2029 = vmatmul.mubr.f32.gmra.mxu0 %v1962
        %v2030 = vpop.f32.mrf.mxu0
        %v2031 = vadd.f32 %v1958, %v2030
        %v2032 = vpop.f32.mrf.mxu0
        %2033 = vdwg.mxu0
        %v2034 = vadd.f32 %v2031, %v1851
        %v2035 = vld [vmem:[%s15] sm:$0x1]
        %v2036 = vld [vmem:[%s16] sm:$0x1]
        %v2037 = vsel %vm721, %v2034, 0.0
        %2038 = vadd.xlane.f32.xlu0 %v2037
        %v2039 = vpop.xlane.xlu0 %2038
        %v2040 = vmul.f32 %v2039, %v725
        %v2041 = vsub.f32 %v2034, %v2040
        %v2042 = vmul.f32 %v2041, %v2041
        %v2043 = vsel %vm721, %v2042, 0.0
        %2044 = vadd.xlane.f32.xlu0 %v2043
        %v2045 = vpop.xlane.xlu0 %2044
        %v2046 = vmul.f32 %v2045, %v725
        %v2047 = vadd.f32 %v2046, 1e-07
        %v2048 = vrsqrt.pop %v2047
        %v2049 = vmul.f32 %v2041, %v2048
        %v2051 = vlaneseq
        %v2052 = vshrl.u32 %v2051, 7
        %v2053 = vsub.s32 0, %v2052
        %v2054 = vrot.slane %v2035, %v2053
        %v2056 = vmul.f32 %v2049, %v2054
        %v2058 = vlaneseq
        %v2059 = vshrl.u32 %v2058, 7
        %v2060 = vsub.s32 0, %v2059
        %v2061 = vrot.slane %v2036, %v2060
        %v2063 = vadd.f32 %v2056, %v2061
        %s2064 = scalar_lea.vmem %s5, 32
        %v2065 = vld [vmem:[%s2064] sm:$0xff]
        %v2066 = vld [vmem:[%s2064 + $0x8] sm:$0xff]
        %v2067 = vld [vmem:[%s2064 + $0x10] sm:$0xff]
        %v2068 = vld [vmem:[%s2064 + $0x18] sm:$0xff]
        %s2069 = scalar_lea.vmem %s6, 1
        %v2070 = vld [vmem:[%s2069] sm:$0x1]
        %v2072 = vlaneseq
        %v2073 = vshrl.u32 %v2072, 7
        %v2074 = vsub.s32 0, %v2073
        %v2075 = vrot.slane %v2070, %v2074
        %v2078 = vsel %vm721, %v2063, 0
        %2080 = vmatprep.subr.mxu0 0.0
        %2081 = vmatpush1.msra.mxu0 0.0
        %2082 = vmatprep.subr.mxu0 0.0
        %2083 = vmatpush1.msra.mxu0 0.0
        %2084 = vmatprep.subr.mxu0 0.0
        %2085 = vmatpush1.msra.mxu0 0.0
        %2086 = vmatprep.subr.mxu0 0.0
        %2087 = vmatpush1.msra.mxu0 0.0
        %2088 = vmatprep.subr.mxu0 0.0
        %2089 = vmatpush1.msra.mxu0 0.0
        %2090 = vmatprep.subr.mxu0 0.0
        %2091 = vmatpush1.msra.mxu0 0.0
        %2092 = vmatprep.subr.mxu0 0.0
        %2093 = vmatpush1.msra.mxu0 0.0
        %2094 = vmatprep.subr.mxu0 0.0
        %2095 = vmatpush1.msra.mxu0 0.0
        %2096 = vmatprep.subr.mxu0 0.0
        %2097 = vmatpush1.msra.mxu0 0.0
        %2098 = vmatprep.subr.mxu0 0.0
        %2099 = vmatpush1.msra.mxu0 0.0
        %2100 = vmatprep.subr.mxu0 0.0
        %2101 = vmatpush1.msra.mxu0 0.0
        %2102 = vmatprep.subr.mxu0 0.0
        %2103 = vmatpush1.msra.mxu0 0.0
        %2104 = vmatprep.subr.mxu0 0.0
        %2105 = vmatpush1.msra.mxu0 %v2068
        %2106 = vmatprep.subr.mxu0 0.0
        %2107 = vmatpush1.msra.mxu0 %v2067
        %2108 = vmatprep.subr.mxu0 0.0
        %2109 = vmatpush1.msra.mxu0 %v2066
        %2110 = vmatprep.subr.mxu0 0.0
        %2111 = vmatpush1.msra.mxu0 %v2065
        %2112 = vmatprep.subr.mxu0 0.0
        %2113 = vmatpush2.msra.mxu0 0.0
        %2114 = vmatprep.subr.mxu0 0.0
        %2115 = vmatpush2.msra.mxu0 0.0
        %2116 = vmatprep.subr.mxu0 0.0
        %2117 = vmatpush2.msra.mxu0 0.0
        %2118 = vmatprep.subr.mxu0 0.0
        %2119 = vmatpush2.msra.mxu0 0.0
        %2120 = vmatprep.subr.mxu0 0.0
        %2121 = vmatpush2.msra.mxu0 0.0
        %2122 = vmatprep.subr.mxu0 0.0
        %2123 = vmatpush2.msra.mxu0 0.0
        %2124 = vmatprep.subr.mxu0 0.0
        %2125 = vmatpush2.msra.mxu0 0.0
        %2126 = vmatprep.subr.mxu0 0.0
        %2127 = vmatpush2.msra.mxu0 0.0
        %2128 = vmatprep.subr.mxu0 0.0
        %2129 = vmatpush2.msra.mxu0 0.0
        %2130 = vmatprep.subr.mxu0 0.0
        %2131 = vmatpush2.msra.mxu0 0.0
        %2132 = vmatprep.subr.mxu0 0.0
        %2133 = vmatpush2.msra.mxu0 0.0
        %2134 = vmatprep.subr.mxu0 0.0
        %2135 = vmatpush2.msra.mxu0 0.0
        %2136 = vmatprep.subr.mxu0 0.0
        %2137 = vmatpush2.msra.mxu0 0.0
        %2138 = vmatprep.subr.mxu0 0.0
        %2139 = vmatpush2.msra.mxu0 0.0
        %2140 = vmatprep.subr.mxu0 0.0
        %2141 = vmatpush2.msra.mxu0 0.0
        %2142 = vmatprep.subr.mxu0 0.0
        %2143 = vmatpush2.msra.mxu0 0.0
        %2144 = vmatprep.mubr.f32.mxu0 0.0
        %2145 = vmatmul.mubr.f32.gmra.mxu0 %v2078
        %v2146 = vpop.f32.mrf.mxu0
        %v2147 = vadd.f32 %v2075, %v2146
        %v2148 = vpop.f32.mrf.mxu0
        %2149 = vdwg.mxu0
        %s2150 = scalar_lea.vmem %s7, 32
        %v2151 = vld [vmem:[%s2150] sm:$0xff]
        %v2152 = vld [vmem:[%s2150 + $0x8] sm:$0xff]
        %v2153 = vld [vmem:[%s2150 + $0x10] sm:$0xff]
        %v2154 = vld [vmem:[%s2150 + $0x18] sm:$0xff]
        %2156 = vrot.lane.b32.xlu0 %v2147, 96
        %v2157 = vpop.permute.xlu0 %2156
        %v2158 = vsel %vm849, %v2147, 0
        %v2160 = vsel %vm849, %v2157, 0
        %2162 = vmatprep.subr.mxu0 0.0
        %2163 = vmatpush1.xpose.msra.mxu0 0.0
        %2164 = vmatprep.subr.mxu0 0.0
        %2165 = vmatpush1.xpose.msra.mxu0 0.0
        %2166 = vmatprep.subr.mxu0 0.0
        %2167 = vmatpush1.xpose.msra.mxu0 0.0
        %2168 = vmatprep.subr.mxu0 0.0
        %2169 = vmatpush1.xpose.msra.mxu0 0.0
        %2170 = vmatprep.subr.mxu0 0.0
        %2171 = vmatpush1.xpose.msra.mxu0 0.0
        %2172 = vmatprep.subr.mxu0 0.0
        %2173 = vmatpush1.xpose.msra.mxu0 0.0
        %2174 = vmatprep.subr.mxu0 0.0
        %2175 = vmatpush1.xpose.msra.mxu0 0.0
        %2176 = vmatprep.subr.mxu0 0.0
        %2177 = vmatpush1.xpose.msra.mxu0 0.0
        %2178 = vmatprep.subr.mxu0 0.0
        %2179 = vmatpush1.xpose.msra.mxu0 0.0
        %2180 = vmatprep.subr.mxu0 0.0
        %2181 = vmatpush1.xpose.msra.mxu0 0.0
        %2182 = vmatprep.subr.mxu0 0.0
        %2183 = vmatpush1.xpose.msra.mxu0 0.0
        %2184 = vmatprep.subr.mxu0 0.0
        %2185 = vmatpush1.xpose.msra.mxu0 0.0
        %2186 = vmatprep.subr.mxu0 0.0
        %2187 = vmatpush1.xpose.msra.mxu0 0.0
        %2188 = vmatprep.subr.mxu0 0.0
        %2189 = vmatpush1.xpose.msra.mxu0 0.0
        %2190 = vmatprep.subr.mxu0 0.0
        %2191 = vmatpush1.xpose.msra.mxu0 0.0
        %2192 = vmatprep.subr.mxu0 0.0
        %2193 = vmatpush1.xpose.msra.mxu0 %v2160
        %2194 = vmatprep.subr.mxu0 0.0
        %2195 = vmatpush2.xpose.msra.mxu0 0.0
        %2196 = vmatprep.subr.mxu0 0.0
        %2197 = vmatpush2.xpose.msra.mxu0 0.0
        %2198 = vmatprep.subr.mxu0 0.0
        %2199 = vmatpush2.xpose.msra.mxu0 0.0
        %2200 = vmatprep.subr.mxu0 0.0
        %2201 = vmatpush2.xpose.msra.mxu0 0.0
        %2202 = vmatprep.subr.mxu0 0.0
        %2203 = vmatpush2.xpose.msra.mxu0 0.0
        %2204 = vmatprep.subr.mxu0 0.0
        %2205 = vmatpush2.xpose.msra.mxu0 0.0
        %2206 = vmatprep.subr.mxu0 0.0
        %2207 = vmatpush2.xpose.msra.mxu0 0.0
        %2208 = vmatprep.subr.mxu0 0.0
        %2209 = vmatpush2.xpose.msra.mxu0 0.0
        %2210 = vmatprep.subr.mxu0 0.0
        %2211 = vmatpush2.xpose.msra.mxu0 0.0
        %2212 = vmatprep.subr.mxu0 0.0
        %2213 = vmatpush2.xpose.msra.mxu0 0.0
        %2214 = vmatprep.subr.mxu0 0.0
        %2215 = vmatpush2.xpose.msra.mxu0 0.0
        %2216 = vmatprep.subr.mxu0 0.0
        %2217 = vmatpush2.xpose.msra.mxu0 0.0
        %2218 = vmatprep.subr.mxu0 0.0
        %2219 = vmatpush2.xpose.msra.mxu0 0.0
        %2220 = vmatprep.subr.mxu0 0.0
        %2221 = vmatpush2.xpose.msra.mxu0 0.0
        %2222 = vmatprep.subr.mxu0 0.0
        %2223 = vmatpush2.xpose.msra.mxu0 0.0
        %2224 = vmatprep.subr.mxu0 0.0
        %2225 = vmatpush2.xpose.msra.mxu0 0.0
        %2226 = vmatprep.mubr.f32.mxu0 0.0
        %2227 = vmatmul.mubr.f32.gmra.mxu0 %v2158
        %v2228 = vpop.f32.mrf.mxu0
        %v2229 = vadd.f32 0.0, %v2228
        %v2230 = vpop.f32.mrf.mxu0
        %2231 = vdwg.mxu0
        %v2232 = vmul.f32 %v2229, 0.35355338
        %v2233 = vadd.f32 %v2232, %v929
        %v2234 = vsel %vm849, %v2233, -inf
        %2235 = vmax.xlane.f32.xlu0 %v2234
        %v2236 = vpop.xlane.xlu0 %2235
        %v2237 = vsub.f32 %v2233, %v2236
        %v2238 = vmul.f32 %v2237, 1.442695
        %v2239 = vpow.pop %v2238
        %v2240 = vsel %vm849, %v2239, 0.0
        %2241 = vadd.xlane.f32.xlu0 %v2240
        %v2242 = vpop.xlane.xlu0 %2241
        %v2243 = vrcp.pop %v2242
        %v2244 = vmul.f32 %v2239, %v2243
        %2245 = vrot.lane.b32.xlu0 %v2147, 64
        %v2246 = vpop.permute.xlu0 %2245
        %v2249 = vsel %vm849, %v2244, 0
        %2251 = vmatprep.subr.mxu0 0.0
        %2252 = vmatpush1.msra.mxu0 0.0
        %2253 = vmatprep.subr.mxu0 0.0
        %2254 = vmatpush1.msra.mxu0 0.0
        %2255 = vmatprep.subr.mxu0 0.0
        %2256 = vmatpush1.msra.mxu0 0.0
        %2257 = vmatprep.subr.mxu0 0.0
        %2258 = vmatpush1.msra.mxu0 0.0
        %2259 = vmatprep.subr.mxu0 0.0
        %2260 = vmatpush1.msra.mxu0 0.0
        %2261 = vmatprep.subr.mxu0 0.0
        %2262 = vmatpush1.msra.mxu0 0.0
        %2263 = vmatprep.subr.mxu0 0.0
        %2264 = vmatpush1.msra.mxu0 0.0
        %2265 = vmatprep.subr.mxu0 0.0
        %2266 = vmatpush1.msra.mxu0 0.0
        %2267 = vmatprep.subr.mxu0 0.0
        %2268 = vmatpush1.msra.mxu0 0.0
        %2269 = vmatprep.subr.mxu0 0.0
        %2270 = vmatpush1.msra.mxu0 0.0
        %2271 = vmatprep.subr.mxu0 0.0
        %2272 = vmatpush1.msra.mxu0 0.0
        %2273 = vmatprep.subr.mxu0 0.0
        %2274 = vmatpush1.msra.mxu0 0.0
        %2275 = vmatprep.subr.mxu0 0.0
        %2276 = vmatpush1.msra.mxu0 0.0
        %2277 = vmatprep.subr.mxu0 0.0
        %2278 = vmatpush1.msra.mxu0 0.0
        %2279 = vmatprep.subr.mxu0 0.0
        %2280 = vmatpush1.msra.mxu0 0.0
        %2281 = vmatprep.subr.mxu0 0.0
        %2282 = vmatpush1.msra.mxu0 %v2246
        %2283 = vmatprep.subr.mxu0 0.0
        %2284 = vmatpush2.msra.mxu0 0.0
        %2285 = vmatprep.subr.mxu0 0.0
        %2286 = vmatpush2.msra.mxu0 0.0
        %2287 = vmatprep.subr.mxu0 0.0
        %2288 = vmatpush2.msra.mxu0 0.0
        %2289 = vmatprep.subr.mxu0 0.0
        %2290 = vmatpush2.msra.mxu0 0.0
        %2291 = vmatprep.subr.mxu0 0.0
        %2292 = vmatpush2.msra.mxu0 0.0
        %2293 = vmatprep.subr.mxu0 0.0
        %2294 = vmatpush2.msra.mxu0 0.0
        %2295 = vmatprep.subr.mxu0 0.0
        %2296 = vmatpush2.msra.mxu0 0.0
        %2297 = vmatprep.subr.mxu0 0.0
        %2298 = vmatpush2.msra.mxu0 0.0
        %2299 = vmatprep.subr.mxu0 0.0
        %2300 = vmatpush2.msra.mxu0 0.0
        %2301 = vmatprep.subr.mxu0 0.0
        %2302 = vmatpush2.msra.mxu0 0.0
        %2303 = vmatprep.subr.mxu0 0.0
        %2304 = vmatpush2.msra.mxu0 0.0
        %2305 = vmatprep.subr.mxu0 0.0
        %2306 = vmatpush2.msra.mxu0 0.0
        %2307 = vmatprep.subr.mxu0 0.0
        %2308 = vmatpush2.msra.mxu0 0.0
        %2309 = vmatprep.subr.mxu0 0.0
        %2310 = vmatpush2.msra.mxu0 0.0
        %2311 = vmatprep.subr.mxu0 0.0
        %2312 = vmatpush2.msra.mxu0 0.0
        %2313 = vmatprep.subr.mxu0 0.0
        %2314 = vmatpush2.msra.mxu0 0.0
        %2315 = vmatprep.mubr.f32.mxu0 0.0
        %2316 = vmatmul.mubr.f32.gmra.mxu0 %v2249
        %v2317 = vpop.f32.mrf.mxu0
        %v2318 = vadd.f32 0.0, %v2317
        %v2319 = vpop.f32.mrf.mxu0
        %2320 = vdwg.mxu0
        %2321 = vrot.lane.b32.xlu0 %v2147, 120
        %v2322 = vpop.permute.xlu0 %2321
        %2323 = vrot.lane.b32.xlu0 %v2147, 88
        %v2324 = vpop.permute.xlu0 %2323
        %v2325 = vsel %vm849, %v2322, 0
        %v2327 = vsel %vm849, %v2324, 0
        %2329 = vmatprep.subr.mxu0 0.0
        %2330 = vmatpush1.xpose.msra.mxu0 0.0
        %2331 = vmatprep.subr.mxu0 0.0
        %2332 = vmatpush1.xpose.msra.mxu0 0.0
        %2333 = vmatprep.subr.mxu0 0.0
        %2334 = vmatpush1.xpose.msra.mxu0 0.0
        %2335 = vmatprep.subr.mxu0 0.0
        %2336 = vmatpush1.xpose.msra.mxu0 0.0
        %2337 = vmatprep.subr.mxu0 0.0
        %2338 = vmatpush1.xpose.msra.mxu0 0.0
        %2339 = vmatprep.subr.mxu0 0.0
        %2340 = vmatpush1.xpose.msra.mxu0 0.0
        %2341 = vmatprep.subr.mxu0 0.0
        %2342 = vmatpush1.xpose.msra.mxu0 0.0
        %2343 = vmatprep.subr.mxu0 0.0
        %2344 = vmatpush1.xpose.msra.mxu0 0.0
        %2345 = vmatprep.subr.mxu0 0.0
        %2346 = vmatpush1.xpose.msra.mxu0 0.0
        %2347 = vmatprep.subr.mxu0 0.0
        %2348 = vmatpush1.xpose.msra.mxu0 0.0
        %2349 = vmatprep.subr.mxu0 0.0
        %2350 = vmatpush1.xpose.msra.mxu0 0.0
        %2351 = vmatprep.subr.mxu0 0.0
        %2352 = vmatpush1.xpose.msra.mxu0 0.0
        %2353 = vmatprep.subr.mxu0 0.0
        %2354 = vmatpush1.xpose.msra.mxu0 0.0
        %2355 = vmatprep.subr.mxu0 0.0
        %2356 = vmatpush1.xpose.msra.mxu0 0.0
        %2357 = vmatprep.subr.mxu0 0.0
        %2358 = vmatpush1.xpose.msra.mxu0 0.0
        %2359 = vmatprep.subr.mxu0 0.0
        %2360 = vmatpush1.xpose.msra.mxu0 %v2327
        %2361 = vmatprep.subr.mxu0 0.0
        %2362 = vmatpush2.xpose.msra.mxu0 0.0
        %2363 = vmatprep.subr.mxu0 0.0
        %2364 = vmatpush2.xpose.msra.mxu0 0.0
        %2365 = vmatprep.subr.mxu0 0.0
        %2366 = vmatpush2.xpose.msra.mxu0 0.0
        %2367 = vmatprep.subr.mxu0 0.0
        %2368 = vmatpush2.xpose.msra.mxu0 0.0
        %2369 = vmatprep.subr.mxu0 0.0
        %2370 = vmatpush2.xpose.msra.mxu0 0.0
        %2371 = vmatprep.subr.mxu0 0.0
        %2372 = vmatpush2.xpose.msra.mxu0 0.0
        %2373 = vmatprep.subr.mxu0 0.0
        %2374 = vmatpush2.xpose.msra.mxu0 0.0
        %2375 = vmatprep.subr.mxu0 0.0
        %2376 = vmatpush2.xpose.msra.mxu0 0.0
        %2377 = vmatprep.subr.mxu0 0.0
        %2378 = vmatpush2.xpose.msra.mxu0 0.0
        %2379 = vmatprep.subr.mxu0 0.0
        %2380 = vmatpush2.xpose.msra.mxu0 0.0
        %2381 = vmatprep.subr.mxu0 0.0
        %2382 = vmatpush2.xpose.msra.mxu0 0.0
        %2383 = vmatprep.subr.mxu0 0.0
        %2384 = vmatpush2.xpose.msra.mxu0 0.0
        %2385 = vmatprep.subr.mxu0 0.0
        %2386 = vmatpush2.xpose.msra.mxu0 0.0
        %2387 = vmatprep.subr.mxu0 0.0
        %2388 = vmatpush2.xpose.msra.mxu0 0.0
        %2389 = vmatprep.subr.mxu0 0.0
        %2390 = vmatpush2.xpose.msra.mxu0 0.0
        %2391 = vmatprep.subr.mxu0 0.0
        %2392 = vmatpush2.xpose.msra.mxu0 0.0
        %2393 = vmatprep.mubr.f32.mxu0 0.0
        %2394 = vmatmul.mubr.f32.gmra.mxu0 %v2325
        %v2395 = vpop.f32.mrf.mxu0
        %v2396 = vadd.f32 0.0, %v2395
        %v2397 = vpop.f32.mrf.mxu0
        %2398 = vdwg.mxu0
        %v2399 = vmul.f32 %v2396, 0.35355338
        %v2400 = vadd.f32 %v2399, %v929
        %v2401 = vsel %vm849, %v2400, -inf
        %2402 = vmax.xlane.f32.xlu0 %v2401
        %v2403 = vpop.xlane.xlu0 %2402
        %v2404 = vsub.f32 %v2400, %v2403
        %v2405 = vmul.f32 %v2404, 1.442695
        %v2406 = vpow.pop %v2405
        %v2407 = vsel %vm849, %v2406, 0.0
        %2408 = vadd.xlane.f32.xlu0 %v2407
        %v2409 = vpop.xlane.xlu0 %2408
        %v2410 = vrcp.pop %v2409
        %v2411 = vmul.f32 %v2406, %v2410
        %2412 = vrot.lane.b32.xlu0 %v2147, 56
        %v2413 = vpop.permute.xlu0 %2412
        %v2416 = vsel %vm849, %v2411, 0
        %2418 = vmatprep.subr.mxu0 0.0
        %2419 = vmatpush1.msra.mxu0 0.0
        %2420 = vmatprep.subr.mxu0 0.0
        %2421 = vmatpush1.msra.mxu0 0.0
        %2422 = vmatprep.subr.mxu0 0.0
        %2423 = vmatpush1.msra.mxu0 0.0
        %2424 = vmatprep.subr.mxu0 0.0
        %2425 = vmatpush1.msra.mxu0 0.0
        %2426 = vmatprep.subr.mxu0 0.0
        %2427 = vmatpush1.msra.mxu0 0.0
        %2428 = vmatprep.subr.mxu0 0.0
        %2429 = vmatpush1.msra.mxu0 0.0
        %2430 = vmatprep.subr.mxu0 0.0
        %2431 = vmatpush1.msra.mxu0 0.0
        %2432 = vmatprep.subr.mxu0 0.0
        %2433 = vmatpush1.msra.mxu0 0.0
        %2434 = vmatprep.subr.mxu0 0.0
        %2435 = vmatpush1.msra.mxu0 0.0
        %2436 = vmatprep.subr.mxu0 0.0
        %2437 = vmatpush1.msra.mxu0 0.0
        %2438 = vmatprep.subr.mxu0 0.0
        %2439 = vmatpush1.msra.mxu0 0.0
        %2440 = vmatprep.subr.mxu0 0.0
        %2441 = vmatpush1.msra.mxu0 0.0
        %2442 = vmatprep.subr.mxu0 0.0
        %2443 = vmatpush1.msra.mxu0 0.0
        %2444 = vmatprep.subr.mxu0 0.0
        %2445 = vmatpush1.msra.mxu0 0.0
        %2446 = vmatprep.subr.mxu0 0.0
        %2447 = vmatpush1.msra.mxu0 0.0
        %2448 = vmatprep.subr.mxu0 0.0
        %2449 = vmatpush1.msra.mxu0 %v2413
        %2450 = vmatprep.subr.mxu0 0.0
        %2451 = vmatpush2.msra.mxu0 0.0
        %2452 = vmatprep.subr.mxu0 0.0
        %2453 = vmatpush2.msra.mxu0 0.0
        %2454 = vmatprep.subr.mxu0 0.0
        %2455 = vmatpush2.msra.mxu0 0.0
        %2456 = vmatprep.subr.mxu0 0.0
        %2457 = vmatpush2.msra.mxu0 0.0
        %2458 = vmatprep.subr.mxu0 0.0
        %2459 = vmatpush2.msra.mxu0 0.0
        %2460 = vmatprep.subr.mxu0 0.0
        %2461 = vmatpush2.msra.mxu0 0.0
        %2462 = vmatprep.subr.mxu0 0.0
        %2463 = vmatpush2.msra.mxu0 0.0
        %2464 = vmatprep.subr.mxu0 0.0
        %2465 = vmatpush2.msra.mxu0 0.0
        %2466 = vmatprep.subr.mxu0 0.0
        %2467 = vmatpush2.msra.mxu0 0.0
        %2468 = vmatprep.subr.mxu0 0.0
        %2469 = vmatpush2.msra.mxu0 0.0
        %2470 = vmatprep.subr.mxu0 0.0
        %2471 = vmatpush2.msra.mxu0 0.0
        %2472 = vmatprep.subr.mxu0 0.0
        %2473 = vmatpush2.msra.mxu0 0.0
        %2474 = vmatprep.subr.mxu0 0.0
        %2475 = vmatpush2.msra.mxu0 0.0
        %2476 = vmatprep.subr.mxu0 0.0
        %2477 = vmatpush2.msra.mxu0 0.0
        %2478 = vmatprep.subr.mxu0 0.0
        %2479 = vmatpush2.msra.mxu0 0.0
        %2480 = vmatprep.subr.mxu0 0.0
        %2481 = vmatpush2.msra.mxu0 0.0
        %2482 = vmatprep.mubr.f32.mxu0 0.0
        %2483 = vmatmul.mubr.f32.gmra.mxu0 %v2416
        %v2484 = vpop.f32.mrf.mxu0
        %v2485 = vadd.f32 0.0, %v2484
        %v2486 = vpop.f32.mrf.mxu0
        %2487 = vdwg.mxu0
        %v2489 = vsel %vm849, %v2485, 0
        %2491 = vmatprep.subr.mxu0 0.0
        %2492 = vmatpush1.msra.mxu0 0.0
        %2493 = vmatprep.subr.mxu0 0.0
        %2494 = vmatpush1.msra.mxu0 0.0
        %2495 = vmatprep.subr.mxu0 0.0
        %2496 = vmatpush1.msra.mxu0 0.0
        %2497 = vmatprep.subr.mxu0 0.0
        %2498 = vmatpush1.msra.mxu0 0.0
        %2499 = vmatprep.subr.mxu0 0.0
        %2500 = vmatpush1.msra.mxu0 0.0
        %2501 = vmatprep.subr.mxu0 0.0
        %2502 = vmatpush1.msra.mxu0 0.0
        %2503 = vmatprep.subr.mxu0 0.0
        %2504 = vmatpush1.msra.mxu0 0.0
        %2505 = vmatprep.subr.mxu0 0.0
        %2506 = vmatpush1.msra.mxu0 0.0
        %2507 = vmatprep.subr.mxu0 0.0
        %2508 = vmatpush1.msra.mxu0 0.0
        %2509 = vmatprep.subr.mxu0 0.0
        %2510 = vmatpush1.msra.mxu0 0.0
        %2511 = vmatprep.subr.mxu0 0.0
        %2512 = vmatpush1.msra.mxu0 0.0
        %2513 = vmatprep.subr.mxu0 0.0
        %2514 = vmatpush1.msra.mxu0 0.0
        %2515 = vmatprep.subr.mxu0 0.0
        %2516 = vmatpush1.msra.mxu0 0.0
        %2517 = vmatprep.subr.mxu0 0.0
        %2518 = vmatpush1.msra.mxu0 0.0
        %2519 = vmatprep.subr.mxu0 0.0
        %2520 = vmatpush1.msra.mxu0 0.0
        %2521 = vmatprep.subr.mxu0 0.0
        %2522 = vmatpush1.msra.mxu0 %v2152
        %2523 = vmatprep.subr.mxu0 0.0
        %2524 = vmatpush2.msra.mxu0 0.0
        %2525 = vmatprep.subr.mxu0 0.0
        %2526 = vmatpush2.msra.mxu0 0.0
        %2527 = vmatprep.subr.mxu0 0.0
        %2528 = vmatpush2.msra.mxu0 0.0
        %2529 = vmatprep.subr.mxu0 0.0
        %2530 = vmatpush2.msra.mxu0 0.0
        %2531 = vmatprep.subr.mxu0 0.0
        %2532 = vmatpush2.msra.mxu0 0.0
        %2533 = vmatprep.subr.mxu0 0.0
        %2534 = vmatpush2.msra.mxu0 0.0
        %2535 = vmatprep.subr.mxu0 0.0
        %2536 = vmatpush2.msra.mxu0 0.0
        %2537 = vmatprep.subr.mxu0 0.0
        %2538 = vmatpush2.msra.mxu0 0.0
        %2539 = vmatprep.subr.mxu0 0.0
        %2540 = vmatpush2.msra.mxu0 0.0
        %2541 = vmatprep.subr.mxu0 0.0
        %2542 = vmatpush2.msra.mxu0 0.0
        %2543 = vmatprep.subr.mxu0 0.0
        %2544 = vmatpush2.msra.mxu0 0.0
        %2545 = vmatprep.subr.mxu0 0.0
        %2546 = vmatpush2.msra.mxu0 0.0
        %2547 = vmatprep.subr.mxu0 0.0
        %2548 = vmatpush2.msra.mxu0 0.0
        %2549 = vmatprep.subr.mxu0 0.0
        %2550 = vmatpush2.msra.mxu0 0.0
        %2551 = vmatprep.subr.mxu0 0.0
        %2552 = vmatpush2.msra.mxu0 0.0
        %2553 = vmatprep.subr.mxu0 0.0
        %2554 = vmatpush2.msra.mxu0 0.0
        %2555 = vmatprep.mubr.f32.mxu0 0.0
        %2556 = vmatmul.mubr.f32.gmra.mxu0 %v2489
        %v2557 = vpop.f32.mrf.mxu0
        %v2558 = vadd.f32 0.0, %v2557
        %v2559 = vpop.f32.mrf.mxu0
        %2560 = vdwg.mxu0
        %v2562 = vsel %vm849, %v2318, 0
        %2564 = vmatprep.subr.mxu0 0.0
        %2565 = vmatpush1.msra.mxu0 0.0
        %2566 = vmatprep.subr.mxu0 0.0
        %2567 = vmatpush1.msra.mxu0 0.0
        %2568 = vmatprep.subr.mxu0 0.0
        %2569 = vmatpush1.msra.mxu0 0.0
        %2570 = vmatprep.subr.mxu0 0.0
        %2571 = vmatpush1.msra.mxu0 0.0
        %2572 = vmatprep.subr.mxu0 0.0
        %2573 = vmatpush1.msra.mxu0 0.0
        %2574 = vmatprep.subr.mxu0 0.0
        %2575 = vmatpush1.msra.mxu0 0.0
        %2576 = vmatprep.subr.mxu0 0.0
        %2577 = vmatpush1.msra.mxu0 0.0
        %2578 = vmatprep.subr.mxu0 0.0
        %2579 = vmatpush1.msra.mxu0 0.0
        %2580 = vmatprep.subr.mxu0 0.0
        %2581 = vmatpush1.msra.mxu0 0.0
        %2582 = vmatprep.subr.mxu0 0.0
        %2583 = vmatpush1.msra.mxu0 0.0
        %2584 = vmatprep.subr.mxu0 0.0
        %2585 = vmatpush1.msra.mxu0 0.0
        %2586 = vmatprep.subr.mxu0 0.0
        %2587 = vmatpush1.msra.mxu0 0.0
        %2588 = vmatprep.subr.mxu0 0.0
        %2589 = vmatpush1.msra.mxu0 0.0
        %2590 = vmatprep.subr.mxu0 0.0
        %2591 = vmatpush1.msra.mxu0 0.0
        %2592 = vmatprep.subr.mxu0 0.0
        %2593 = vmatpush1.msra.mxu0 0.0
        %2594 = vmatprep.subr.mxu0 0.0
        %2595 = vmatpush1.msra.mxu0 %v2151
        %2596 = vmatprep.subr.mxu0 0.0
        %2597 = vmatpush2.msra.mxu0 0.0
        %2598 = vmatprep.subr.mxu0 0.0
        %2599 = vmatpush2.msra.mxu0 0.0
        %2600 = vmatprep.subr.mxu0 0.0
        %2601 = vmatpush2.msra.mxu0 0.0
        %2602 = vmatprep.subr.mxu0 0.0
        %2603 = vmatpush2.msra.mxu0 0.0
        %2604 = vmatprep.subr.mxu0 0.0
        %2605 = vmatpush2.msra.mxu0 0.0
        %2606 = vmatprep.subr.mxu0 0.0
        %2607 = vmatpush2.msra.mxu0 0.0
        %2608 = vmatprep.subr.mxu0 0.0
        %2609 = vmatpush2.msra.mxu0 0.0
        %2610 = vmatprep.subr.mxu0 0.0
        %2611 = vmatpush2.msra.mxu0 0.0
        %2612 = vmatprep.subr.mxu0 0.0
        %2613 = vmatpush2.msra.mxu0 0.0
        %2614 = vmatprep.subr.mxu0 0.0
        %2615 = vmatpush2.msra.mxu0 0.0
        %2616 = vmatprep.subr.mxu0 0.0
        %2617 = vmatpush2.msra.mxu0 0.0
        %2618 = vmatprep.subr.mxu0 0.0
        %2619 = vmatpush2.msra.mxu0 0.0
        %2620 = vmatprep.subr.mxu0 0.0
        %2621 = vmatpush2.msra.mxu0 0.0
        %2622 = vmatprep.subr.mxu0 0.0
        %2623 = vmatpush2.msra.mxu0 0.0
        %2624 = vmatprep.subr.mxu0 0.0
        %2625 = vmatpush2.msra.mxu0 0.0
        %2626 = vmatprep.subr.mxu0 0.0
        %2627 = vmatpush2.msra.mxu0 0.0
        %2628 = vmatprep.mubr.f32.mxu0 0.0
        %2629 = vmatmul.mubr.f32.gmra.mxu0 %v2562
        %v2630 = vpop.f32.mrf.mxu0
        %v2631 = vadd.f32 %v2558, %v2630
        %v2632 = vpop.f32.mrf.mxu0
        %2633 = vdwg.mxu0
        %2634 = vrot.lane.b32.xlu0 %v2147, 112
        %v2635 = vpop.permute.xlu0 %2634
        %2636 = vrot.lane.b32.xlu0 %v2147, 80
        %v2637 = vpop.permute.xlu0 %2636
        %v2638 = vsel %vm849, %v2635, 0
        %v2640 = vsel %vm849, %v2637, 0
        %2642 = vmatprep.subr.mxu0 0.0
        %2643 = vmatpush1.xpose.msra.mxu0 0.0
        %2644 = vmatprep.subr.mxu0 0.0
        %2645 = vmatpush1.xpose.msra.mxu0 0.0
        %2646 = vmatprep.subr.mxu0 0.0
        %2647 = vmatpush1.xpose.msra.mxu0 0.0
        %2648 = vmatprep.subr.mxu0 0.0
        %2649 = vmatpush1.xpose.msra.mxu0 0.0
        %2650 = vmatprep.subr.mxu0 0.0
        %2651 = vmatpush1.xpose.msra.mxu0 0.0
        %2652 = vmatprep.subr.mxu0 0.0
        %2653 = vmatpush1.xpose.msra.mxu0 0.0
        %2654 = vmatprep.subr.mxu0 0.0
        %2655 = vmatpush1.xpose.msra.mxu0 0.0
        %2656 = vmatprep.subr.mxu0 0.0
        %2657 = vmatpush1.xpose.msra.mxu0 0.0
        %2658 = vmatprep.subr.mxu0 0.0
        %2659 = vmatpush1.xpose.msra.mxu0 0.0
        %2660 = vmatprep.subr.mxu0 0.0
        %2661 = vmatpush1.xpose.msra.mxu0 0.0
        %2662 = vmatprep.subr.mxu0 0.0
        %2663 = vmatpush1.xpose.msra.mxu0 0.0
        %2664 = vmatprep.subr.mxu0 0.0
        %2665 = vmatpush1.xpose.msra.mxu0 0.0
        %2666 = vmatprep.subr.mxu0 0.0
        %2667 = vmatpush1.xpose.msra.mxu0 0.0
        %2668 = vmatprep.subr.mxu0 0.0
        %2669 = vmatpush1.xpose.msra.mxu0 0.0
        %2670 = vmatprep.subr.mxu0 0.0
        %2671 = vmatpush1.xpose.msra.mxu0 0.0
        %2672 = vmatprep.subr.mxu0 0.0
        %2673 = vmatpush1.xpose.msra.mxu0 %v2640
        %2674 = vmatprep.subr.mxu0 0.0
        %2675 = vmatpush2.xpose.msra.mxu0 0.0
        %2676 = vmatprep.subr.mxu0 0.0
        %2677 = vmatpush2.xpose.msra.mxu0 0.0
        %2678 = vmatprep.subr.mxu0 0.0
        %2679 = vmatpush2.xpose.msra.mxu0 0.0
        %2680 = vmatprep.subr.mxu0 0.0
        %2681 = vmatpush2.xpose.msra.mxu0 0.0
        %2682 = vmatprep.subr.mxu0 0.0
        %2683 = vmatpush2.xpose.msra.mxu0 0.0
        %2684 = vmatprep.subr.mxu0 0.0
        %2685 = vmatpush2.xpose.msra.mxu0 0.0
        %2686 = vmatprep.subr.mxu0 0.0
        %2687 = vmatpush2.xpose.msra.mxu0 0.0
        %2688 = vmatprep.subr.mxu0 0.0
        %2689 = vmatpush2.xpose.msra.mxu0 0.0
        %2690 = vmatprep.subr.mxu0 0.0
        %2691 = vmatpush2.xpose.msra.mxu0 0.0
        %2692 = vmatprep.subr.mxu0 0.0
        %2693 = vmatpush2.xpose.msra.mxu0 0.0
        %2694 = vmatprep.subr.mxu0 0.0
        %2695 = vmatpush2.xpose.msra.mxu0 0.0
        %2696 = vmatprep.subr.mxu0 0.0
        %2697 = vmatpush2.xpose.msra.mxu0 0.0
        %2698 = vmatprep.subr.mxu0 0.0
        %2699 = vmatpush2.xpose.msra.mxu0 0.0
        %2700 = vmatprep.subr.mxu0 0.0
        %2701 = vmatpush2.xpose.msra.mxu0 0.0
        %2702 = vmatprep.subr.mxu0 0.0
        %2703 = vmatpush2.xpose.msra.mxu0 0.0
        %2704 = vmatprep.subr.mxu0 0.0
        %2705 = vmatpush2.xpose.msra.mxu0 0.0
        %2706 = vmatprep.mubr.f32.mxu0 0.0
        %2707 = vmatmul.mubr.f32.gmra.mxu0 %v2638
        %v2708 = vpop.f32.mrf.mxu0
        %v2709 = vadd.f32 0.0, %v2708
        %v2710 = vpop.f32.mrf.mxu0
        %2711 = vdwg.mxu0
        %v2712 = vmul.f32 %v2709, 0.35355338
        %v2713 = vadd.f32 %v2712, %v929
        %v2714 = vsel %vm849, %v2713, -inf
        %2715 = vmax.xlane.f32.xlu0 %v2714
        %v2716 = vpop.xlane.xlu0 %2715
        %v2717 = vsub.f32 %v2713, %v2716
        %v2718 = vmul.f32 %v2717, 1.442695
        %v2719 = vpow.pop %v2718
        %v2720 = vsel %vm849, %v2719, 0.0
        %2721 = vadd.xlane.f32.xlu0 %v2720
        %v2722 = vpop.xlane.xlu0 %2721
        %v2723 = vrcp.pop %v2722
        %v2724 = vmul.f32 %v2719, %v2723
        %2725 = vrot.lane.b32.xlu0 %v2147, 48
        %v2726 = vpop.permute.xlu0 %2725
        %v2729 = vsel %vm849, %v2724, 0
        %2731 = vmatprep.subr.mxu0 0.0
        %2732 = vmatpush1.msra.mxu0 0.0
        %2733 = vmatprep.subr.mxu0 0.0
        %2734 = vmatpush1.msra.mxu0 0.0
        %2735 = vmatprep.subr.mxu0 0.0
        %2736 = vmatpush1.msra.mxu0 0.0
        %2737 = vmatprep.subr.mxu0 0.0
        %2738 = vmatpush1.msra.mxu0 0.0
        %2739 = vmatprep.subr.mxu0 0.0
        %2740 = vmatpush1.msra.mxu0 0.0
        %2741 = vmatprep.subr.mxu0 0.0
        %2742 = vmatpush1.msra.mxu0 0.0
        %2743 = vmatprep.subr.mxu0 0.0
        %2744 = vmatpush1.msra.mxu0 0.0
        %2745 = vmatprep.subr.mxu0 0.0
        %2746 = vmatpush1.msra.mxu0 0.0
        %2747 = vmatprep.subr.mxu0 0.0
        %2748 = vmatpush1.msra.mxu0 0.0
        %2749 = vmatprep.subr.mxu0 0.0
        %2750 = vmatpush1.msra.mxu0 0.0
        %2751 = vmatprep.subr.mxu0 0.0
        %2752 = vmatpush1.msra.mxu0 0.0
        %2753 = vmatprep.subr.mxu0 0.0
        %2754 = vmatpush1.msra.mxu0 0.0
        %2755 = vmatprep.subr.mxu0 0.0
        %2756 = vmatpush1.msra.mxu0 0.0
        %2757 = vmatprep.subr.mxu0 0.0
        %2758 = vmatpush1.msra.mxu0 0.0
        %2759 = vmatprep.subr.mxu0 0.0
        %2760 = vmatpush1.msra.mxu0 0.0
        %2761 = vmatprep.subr.mxu0 0.0
        %2762 = vmatpush1.msra.mxu0 %v2726
        %2763 = vmatprep.subr.mxu0 0.0
        %2764 = vmatpush2.msra.mxu0 0.0
        %2765 = vmatprep.subr.mxu0 0.0
        %2766 = vmatpush2.msra.mxu0 0.0
        %2767 = vmatprep.subr.mxu0 0.0
        %2768 = vmatpush2.msra.mxu0 0.0
        %2769 = vmatprep.subr.mxu0 0.0
        %2770 = vmatpush2.msra.mxu0 0.0
        %2771 = vmatprep.subr.mxu0 0.0
        %2772 = vmatpush2.msra.mxu0 0.0
        %2773 = vmatprep.subr.mxu0 0.0
        %2774 = vmatpush2.msra.mxu0 0.0
        %2775 = vmatprep.subr.mxu0 0.0
        %2776 = vmatpush2.msra.mxu0 0.0
        %2777 = vmatprep.subr.mxu0 0.0
        %2778 = vmatpush2.msra.mxu0 0.0
        %2779 = vmatprep.subr.mxu0 0.0
        %2780 = vmatpush2.msra.mxu0 0.0
        %2781 = vmatprep.subr.mxu0 0.0
        %2782 = vmatpush2.msra.mxu0 0.0
        %2783 = vmatprep.subr.mxu0 0.0
        %2784 = vmatpush2.msra.mxu0 0.0
        %2785 = vmatprep.subr.mxu0 0.0
        %2786 = vmatpush2.msra.mxu0 0.0
        %2787 = vmatprep.subr.mxu0 0.0
        %2788 = vmatpush2.msra.mxu0 0.0
        %2789 = vmatprep.subr.mxu0 0.0
        %2790 = vmatpush2.msra.mxu0 0.0
        %2791 = vmatprep.subr.mxu0 0.0
        %2792 = vmatpush2.msra.mxu0 0.0
        %2793 = vmatprep.subr.mxu0 0.0
        %2794 = vmatpush2.msra.mxu0 0.0
        %2795 = vmatprep.mubr.f32.mxu0 0.0
        %2796 = vmatmul.mubr.f32.gmra.mxu0 %v2729
        %v2797 = vpop.f32.mrf.mxu0
        %v2798 = vadd.f32 0.0, %v2797
        %v2799 = vpop.f32.mrf.mxu0
        %2800 = vdwg.mxu0
        %v2802 = vsel %vm849, %v2798, 0
        %2804 = vmatprep.subr.mxu0 0.0
        %2805 = vmatpush1.msra.mxu0 0.0
        %2806 = vmatprep.subr.mxu0 0.0
        %2807 = vmatpush1.msra.mxu0 0.0
        %2808 = vmatprep.subr.mxu0 0.0
        %2809 = vmatpush1.msra.mxu0 0.0
        %2810 = vmatprep.subr.mxu0 0.0
        %2811 = vmatpush1.msra.mxu0 0.0
        %2812 = vmatprep.subr.mxu0 0.0
        %2813 = vmatpush1.msra.mxu0 0.0
        %2814 = vmatprep.subr.mxu0 0.0
        %2815 = vmatpush1.msra.mxu0 0.0
        %2816 = vmatprep.subr.mxu0 0.0
        %2817 = vmatpush1.msra.mxu0 0.0
        %2818 = vmatprep.subr.mxu0 0.0
        %2819 = vmatpush1.msra.mxu0 0.0
        %2820 = vmatprep.subr.mxu0 0.0
        %2821 = vmatpush1.msra.mxu0 0.0
        %2822 = vmatprep.subr.mxu0 0.0
        %2823 = vmatpush1.msra.mxu0 0.0
        %2824 = vmatprep.subr.mxu0 0.0
        %2825 = vmatpush1.msra.mxu0 0.0
        %2826 = vmatprep.subr.mxu0 0.0
        %2827 = vmatpush1.msra.mxu0 0.0
        %2828 = vmatprep.subr.mxu0 0.0
        %2829 = vmatpush1.msra.mxu0 0.0
        %2830 = vmatprep.subr.mxu0 0.0
        %2831 = vmatpush1.msra.mxu0 0.0
        %2832 = vmatprep.subr.mxu0 0.0
        %2833 = vmatpush1.msra.mxu0 0.0
        %2834 = vmatprep.subr.mxu0 0.0
        %2835 = vmatpush1.msra.mxu0 %v2153
        %2836 = vmatprep.subr.mxu0 0.0
        %2837 = vmatpush2.msra.mxu0 0.0
        %2838 = vmatprep.subr.mxu0 0.0
        %2839 = vmatpush2.msra.mxu0 0.0
        %2840 = vmatprep.subr.mxu0 0.0
        %2841 = vmatpush2.msra.mxu0 0.0
        %2842 = vmatprep.subr.mxu0 0.0
        %2843 = vmatpush2.msra.mxu0 0.0
        %2844 = vmatprep.subr.mxu0 0.0
        %2845 = vmatpush2.msra.mxu0 0.0
        %2846 = vmatprep.subr.mxu0 0.0
        %2847 = vmatpush2.msra.mxu0 0.0
        %2848 = vmatprep.subr.mxu0 0.0
        %2849 = vmatpush2.msra.mxu0 0.0
        %2850 = vmatprep.subr.mxu0 0.0
        %2851 = vmatpush2.msra.mxu0 0.0
        %2852 = vmatprep.subr.mxu0 0.0
        %2853 = vmatpush2.msra.mxu0 0.0
        %2854 = vmatprep.subr.mxu0 0.0
        %2855 = vmatpush2.msra.mxu0 0.0
        %2856 = vmatprep.subr.mxu0 0.0
        %2857 = vmatpush2.msra.mxu0 0.0
        %2858 = vmatprep.subr.mxu0 0.0
        %2859 = vmatpush2.msra.mxu0 0.0
        %2860 = vmatprep.subr.mxu0 0.0
        %2861 = vmatpush2.msra.mxu0 0.0
        %2862 = vmatprep.subr.mxu0 0.0
        %2863 = vmatpush2.msra.mxu0 0.0
        %2864 = vmatprep.subr.mxu0 0.0
        %2865 = vmatpush2.msra.mxu0 0.0
        %2866 = vmatprep.subr.mxu0 0.0
        %2867 = vmatpush2.msra.mxu0 0.0
        %2868 = vmatprep.mubr.f32.mxu0 0.0
        %2869 = vmatmul.mubr.f32.gmra.mxu0 %v2802
        %v2870 = vpop.f32.mrf.mxu0
        %v2871 = vadd.f32 0.0, %v2870
        %v2872 = vpop.f32.mrf.mxu0
        %2873 = vdwg.mxu0
        %v2874 = vadd.f32 %v2631, %v2871
        %2875 = vrot.lane.b32.xlu0 %v2147, 104
        %v2876 = vpop.permute.xlu0 %2875
        %2877 = vrot.lane.b32.xlu0 %v2147, 72
        %v2878 = vpop.permute.xlu0 %2877
        %v2879 = vsel %vm849, %v2876, 0
        %v2881 = vsel %vm849, %v2878, 0
        %2883 = vmatprep.subr.mxu0 0.0
        %2884 = vmatpush1.xpose.msra.mxu0 0.0
        %2885 = vmatprep.subr.mxu0 0.0
        %2886 = vmatpush1.xpose.msra.mxu0 0.0
        %2887 = vmatprep.subr.mxu0 0.0
        %2888 = vmatpush1.xpose.msra.mxu0 0.0
        %2889 = vmatprep.subr.mxu0 0.0
        %2890 = vmatpush1.xpose.msra.mxu0 0.0
        %2891 = vmatprep.subr.mxu0 0.0
        %2892 = vmatpush1.xpose.msra.mxu0 0.0
        %2893 = vmatprep.subr.mxu0 0.0
        %2894 = vmatpush1.xpose.msra.mxu0 0.0
        %2895 = vmatprep.subr.mxu0 0.0
        %2896 = vmatpush1.xpose.msra.mxu0 0.0
        %2897 = vmatprep.subr.mxu0 0.0
        %2898 = vmatpush1.xpose.msra.mxu0 0.0
        %2899 = vmatprep.subr.mxu0 0.0
        %2900 = vmatpush1.xpose.msra.mxu0 0.0
        %2901 = vmatprep.subr.mxu0 0.0
        %2902 = vmatpush1.xpose.msra.mxu0 0.0
        %2903 = vmatprep.subr.mxu0 0.0
        %2904 = vmatpush1.xpose.msra.mxu0 0.0
        %2905 = vmatprep.subr.mxu0 0.0
        %2906 = vmatpush1.xpose.msra.mxu0 0.0
        %2907 = vmatprep.subr.mxu0 0.0
        %2908 = vmatpush1.xpose.msra.mxu0 0.0
        %2909 = vmatprep.subr.mxu0 0.0
        %2910 = vmatpush1.xpose.msra.mxu0 0.0
        %2911 = vmatprep.subr.mxu0 0.0
        %2912 = vmatpush1.xpose.msra.mxu0 0.0
        %2913 = vmatprep.subr.mxu0 0.0
        %2914 = vmatpush1.xpose.msra.mxu0 %v2881
        %2915 = vmatprep.subr.mxu0 0.0
        %2916 = vmatpush2.xpose.msra.mxu0 0.0
        %2917 = vmatprep.subr.mxu0 0.0
        %2918 = vmatpush2.xpose.msra.mxu0 0.0
        %2919 = vmatprep.subr.mxu0 0.0
        %2920 = vmatpush2.xpose.msra.mxu0 0.0
        %2921 = vmatprep.subr.mxu0 0.0
        %2922 = vmatpush2.xpose.msra.mxu0 0.0
        %2923 = vmatprep.subr.mxu0 0.0
        %2924 = vmatpush2.xpose.msra.mxu0 0.0
        %2925 = vmatprep.subr.mxu0 0.0
        %2926 = vmatpush2.xpose.msra.mxu0 0.0
        %2927 = vmatprep.subr.mxu0 0.0
        %2928 = vmatpush2.xpose.msra.mxu0 0.0
        %2929 = vmatprep.subr.mxu0 0.0
        %2930 = vmatpush2.xpose.msra.mxu0 0.0
        %2931 = vmatprep.subr.mxu0 0.0
        %2932 = vmatpush2.xpose.msra.mxu0 0.0
        %2933 = vmatprep.subr.mxu0 0.0
        %2934 = vmatpush2.xpose.msra.mxu0 0.0
        %2935 = vmatprep.subr.mxu0 0.0
        %2936 = vmatpush2.xpose.msra.mxu0 0.0
        %2937 = vmatprep.subr.mxu0 0.0
        %2938 = vmatpush2.xpose.msra.mxu0 0.0
        %2939 = vmatprep.subr.mxu0 0.0
        %2940 = vmatpush2.xpose.msra.mxu0 0.0
        %2941 = vmatprep.subr.mxu0 0.0
        %2942 = vmatpush2.xpose.msra.mxu0 0.0
        %2943 = vmatprep.subr.mxu0 0.0
        %2944 = vmatpush2.xpose.msra.mxu0 0.0
        %2945 = vmatprep.subr.mxu0 0.0
        %2946 = vmatpush2.xpose.msra.mxu0 0.0
        %2947 = vmatprep.mubr.f32.mxu0 0.0
        %2948 = vmatmul.mubr.f32.gmra.mxu0 %v2879
        %v2949 = vpop.f32.mrf.mxu0
        %v2950 = vadd.f32 0.0, %v2949
        %v2951 = vpop.f32.mrf.mxu0
        %2952 = vdwg.mxu0
        %v2953 = vmul.f32 %v2950, 0.35355338
        %v2954 = vadd.f32 %v2953, %v929
        %v2955 = vsel %vm849, %v2954, -inf
        %2956 = vmax.xlane.f32.xlu0 %v2955
        %v2957 = vpop.xlane.xlu0 %2956
        %v2958 = vsub.f32 %v2954, %v2957
        %v2959 = vmul.f32 %v2958, 1.442695
        %v2960 = vpow.pop %v2959
        %v2961 = vsel %vm849, %v2960, 0.0
        %2962 = vadd.xlane.f32.xlu0 %v2961
        %v2963 = vpop.xlane.xlu0 %2962
        %v2964 = vrcp.pop %v2963
        %v2965 = vmul.f32 %v2960, %v2964
        %2966 = vrot.lane.b32.xlu0 %v2147, 40
        %v2967 = vpop.permute.xlu0 %2966
        %v2970 = vsel %vm849, %v2965, 0
        %2972 = vmatprep.subr.mxu0 0.0
        %2973 = vmatpush1.msra.mxu0 0.0
        %2974 = vmatprep.subr.mxu0 0.0
        %2975 = vmatpush1.msra.mxu0 0.0
        %2976 = vmatprep.subr.mxu0 0.0
        %2977 = vmatpush1.msra.mxu0 0.0
        %2978 = vmatprep.subr.mxu0 0.0
        %2979 = vmatpush1.msra.mxu0 0.0
        %2980 = vmatprep.subr.mxu0 0.0
        %2981 = vmatpush1.msra.mxu0 0.0
        %2982 = vmatprep.subr.mxu0 0.0
        %2983 = vmatpush1.msra.mxu0 0.0
        %2984 = vmatprep.subr.mxu0 0.0
        %2985 = vmatpush1.msra.mxu0 0.0
        %2986 = vmatprep.subr.mxu0 0.0
        %2987 = vmatpush1.msra.mxu0 0.0
        %2988 = vmatprep.subr.mxu0 0.0
        %2989 = vmatpush1.msra.mxu0 0.0
        %2990 = vmatprep.subr.mxu0 0.0
        %2991 = vmatpush1.msra.mxu0 0.0
        %2992 = vmatprep.subr.mxu0 0.0
        %2993 = vmatpush1.msra.mxu0 0.0
        %2994 = vmatprep.subr.mxu0 0.0
        %2995 = vmatpush1.msra.mxu0 0.0
        %2996 = vmatprep.subr.mxu0 0.0
        %2997 = vmatpush1.msra.mxu0 0.0
        %2998 = vmatprep.subr.mxu0 0.0
        %2999 = vmatpush1.msra.mxu0 0.0
        %3000 = vmatprep.subr.mxu0 0.0
        %3001 = vmatpush1.msra.mxu0 0.0
        %3002 = vmatprep.subr.mxu0 0.0
        %3003 = vmatpush1.msra.mxu0 %v2967
        %3004 = vmatprep.subr.mxu0 0.0
        %3005 = vmatpush2.msra.mxu0 0.0
        %3006 = vmatprep.subr.mxu0 0.0
        %3007 = vmatpush2.msra.mxu0 0.0
        %3008 = vmatprep.subr.mxu0 0.0
        %3009 = vmatpush2.msra.mxu0 0.0
        %3010 = vmatprep.subr.mxu0 0.0
        %3011 = vmatpush2.msra.mxu0 0.0
        %3012 = vmatprep.subr.mxu0 0.0
        %3013 = vmatpush2.msra.mxu0 0.0
        %3014 = vmatprep.subr.mxu0 0.0
        %3015 = vmatpush2.msra.mxu0 0.0
        %3016 = vmatprep.subr.mxu0 0.0
        %3017 = vmatpush2.msra.mxu0 0.0
        %3018 = vmatprep.subr.mxu0 0.0
        %3019 = vmatpush2.msra.mxu0 0.0
        %3020 = vmatprep.subr.mxu0 0.0
        %3021 = vmatpush2.msra.mxu0 0.0
        %3022 = vmatprep.subr.mxu0 0.0
        %3023 = vmatpush2.msra.mxu0 0.0
        %3024 = vmatprep.subr.mxu0 0.0
        %3025 = vmatpush2.msra.mxu0 0.0
        %3026 = vmatprep.subr.mxu0 0.0
        %3027 = vmatpush2.msra.mxu0 0.0
        %3028 = vmatprep.subr.mxu0 0.0
        %3029 = vmatpush2.msra.mxu0 0.0
        %3030 = vmatprep.subr.mxu0 0.0
        %3031 = vmatpush2.msra.mxu0 0.0
        %3032 = vmatprep.subr.mxu0 0.0
        %3033 = vmatpush2.msra.mxu0 0.0
        %3034 = vmatprep.subr.mxu0 0.0
        %3035 = vmatpush2.msra.mxu0 0.0
        %3036 = vmatprep.mubr.f32.mxu0 0.0
        %3037 = vmatmul.mubr.f32.gmra.mxu0 %v2970
        %v3038 = vpop.f32.mrf.mxu0
        %v3039 = vadd.f32 0.0, %v3038
        %v3040 = vpop.f32.mrf.mxu0
        %3041 = vdwg.mxu0
        %v3043 = vsel %vm849, %v3039, 0
        %3045 = vmatprep.subr.mxu0 0.0
        %3046 = vmatpush1.msra.mxu0 0.0
        %3047 = vmatprep.subr.mxu0 0.0
        %3048 = vmatpush1.msra.mxu0 0.0
        %3049 = vmatprep.subr.mxu0 0.0
        %3050 = vmatpush1.msra.mxu0 0.0
        %3051 = vmatprep.subr.mxu0 0.0
        %3052 = vmatpush1.msra.mxu0 0.0
        %3053 = vmatprep.subr.mxu0 0.0
        %3054 = vmatpush1.msra.mxu0 0.0
        %3055 = vmatprep.subr.mxu0 0.0
        %3056 = vmatpush1.msra.mxu0 0.0
        %3057 = vmatprep.subr.mxu0 0.0
        %3058 = vmatpush1.msra.mxu0 0.0
        %3059 = vmatprep.subr.mxu0 0.0
        %3060 = vmatpush1.msra.mxu0 0.0
        %3061 = vmatprep.subr.mxu0 0.0
        %3062 = vmatpush1.msra.mxu0 0.0
        %3063 = vmatprep.subr.mxu0 0.0
        %3064 = vmatpush1.msra.mxu0 0.0
        %3065 = vmatprep.subr.mxu0 0.0
        %3066 = vmatpush1.msra.mxu0 0.0
        %3067 = vmatprep.subr.mxu0 0.0
        %3068 = vmatpush1.msra.mxu0 0.0
        %3069 = vmatprep.subr.mxu0 0.0
        %3070 = vmatpush1.msra.mxu0 0.0
        %3071 = vmatprep.subr.mxu0 0.0
        %3072 = vmatpush1.msra.mxu0 0.0
        %3073 = vmatprep.subr.mxu0 0.0
        %3074 = vmatpush1.msra.mxu0 0.0
        %3075 = vmatprep.subr.mxu0 0.0
        %3076 = vmatpush1.msra.mxu0 %v2154
        %3077 = vmatprep.subr.mxu0 0.0
        %3078 = vmatpush2.msra.mxu0 0.0
        %3079 = vmatprep.subr.mxu0 0.0
        %3080 = vmatpush2.msra.mxu0 0.0
        %3081 = vmatprep.subr.mxu0 0.0
        %3082 = vmatpush2.msra.mxu0 0.0
        %3083 = vmatprep.subr.mxu0 0.0
        %3084 = vmatpush2.msra.mxu0 0.0
        %3085 = vmatprep.subr.mxu0 0.0
        %3086 = vmatpush2.msra.mxu0 0.0
        %3087 = vmatprep.subr.mxu0 0.0
        %3088 = vmatpush2.msra.mxu0 0.0
        %3089 = vmatprep.subr.mxu0 0.0
        %3090 = vmatpush2.msra.mxu0 0.0
        %3091 = vmatprep.subr.mxu0 0.0
        %3092 = vmatpush2.msra.mxu0 0.0
        %3093 = vmatprep.subr.mxu0 0.0
        %3094 = vmatpush2.msra.mxu0 0.0
        %3095 = vmatprep.subr.mxu0 0.0
        %3096 = vmatpush2.msra.mxu0 0.0
        %3097 = vmatprep.subr.mxu0 0.0
        %3098 = vmatpush2.msra.mxu0 0.0
        %3099 = vmatprep.subr.mxu0 0.0
        %3100 = vmatpush2.msra.mxu0 0.0
        %3101 = vmatprep.subr.mxu0 0.0
        %3102 = vmatpush2.msra.mxu0 0.0
        %3103 = vmatprep.subr.mxu0 0.0
        %3104 = vmatpush2.msra.mxu0 0.0
        %3105 = vmatprep.subr.mxu0 0.0
        %3106 = vmatpush2.msra.mxu0 0.0
        %3107 = vmatprep.subr.mxu0 0.0
        %3108 = vmatpush2.msra.mxu0 0.0
        %3109 = vmatprep.mubr.f32.mxu0 0.0
        %3110 = vmatmul.mubr.f32.gmra.mxu0 %v3043
        %v3111 = vpop.f32.mrf.mxu0
        %v3112 = vadd.f32 0.0, %v3111
        %v3113 = vpop.f32.mrf.mxu0
        %3114 = vdwg.mxu0
        %v3115 = vadd.f32 %v2874, %v3112
        %s3116 = scalar_lea.vmem %s8, 1
        %v3117 = vld [vmem:[%s3116] sm:$0x1]
        %v3119 = vlaneseq
        %v3120 = vshrl.u32 %v3119, 7
        %v3121 = vsub.s32 0, %v3120
        %v3122 = vrot.slane %v3117, %v3121
        %v3124 = vadd.f32 %v3115, %v3122
        %v3125 = vadd.f32 %v3124, %v2063
        %s3126 = scalar_lea.vmem %s9, 1
        %v3127 = vld [vmem:[%s3126] sm:$0x1]
        %s3128 = scalar_lea.vmem %s10, 1
        %v3129 = vld [vmem:[%s3128] sm:$0x1]
        %v3130 = vsel %vm721, %v3125, 0.0
        %3131 = vadd.xlane.f32.xlu0 %v3130
        %v3132 = vpop.xlane.xlu0 %3131
        %v3133 = vmul.f32 %v3132, %v725
        %v3134 = vsub.f32 %v3125, %v3133
        %v3135 = vmul.f32 %v3134, %v3134
        %v3136 = vsel %vm721, %v3135, 0.0
        %3137 = vadd.xlane.f32.xlu0 %v3136
        %v3138 = vpop.xlane.xlu0 %3137
        %v3139 = vmul.f32 %v3138, %v725
        %v3140 = vadd.f32 %v3139, 1e-07
        %v3141 = vrsqrt.pop %v3140
        %v3142 = vmul.f32 %v3134, %v3141
        %v3144 = vlaneseq
        %v3145 = vshrl.u32 %v3144, 7
        %v3146 = vsub.s32 0, %v3145
        %v3147 = vrot.slane %v3127, %v3146
        %v3149 = vmul.f32 %v3142, %v3147
        %v3151 = vlaneseq
        %v3152 = vshrl.u32 %v3151, 7
        %v3153 = vsub.s32 0, %v3152
        %v3154 = vrot.slane %v3129, %v3153
        %v3156 = vadd.f32 %v3149, %v3154
        %s3157 = scalar_lea.vmem %s11, 32
        %v3158 = vld [vmem:[%s3157] sm:$0xff]
        %v3159 = vld [vmem:[%s3157 + $0x8] sm:$0xff]
        %v3160 = vld [vmem:[%s3157 + $0x10] sm:$0xff]
        %v3161 = vld [vmem:[%s3157 + $0x18] sm:$0xff]
        %s3162 = scalar_lea.vmem %s12, 1
        %v3163 = vld [vmem:[%s3162] sm:$0x1]
        %v3165 = vlaneseq
        %v3166 = vshrl.u32 %v3165, 7
        %v3167 = vsub.s32 0, %v3166
        %v3168 = vrot.slane %v3163, %v3167
        %v3171 = vsel %vm721, %v3156, 0
        %3173 = vmatprep.subr.mxu0 0.0
        %3174 = vmatpush1.msra.mxu0 0.0
        %3175 = vmatprep.subr.mxu0 0.0
        %3176 = vmatpush1.msra.mxu0 0.0
        %3177 = vmatprep.subr.mxu0 0.0
        %3178 = vmatpush1.msra.mxu0 0.0
        %3179 = vmatprep.subr.mxu0 0.0
        %3180 = vmatpush1.msra.mxu0 0.0
        %3181 = vmatprep.subr.mxu0 0.0
        %3182 = vmatpush1.msra.mxu0 0.0
        %3183 = vmatprep.subr.mxu0 0.0
        %3184 = vmatpush1.msra.mxu0 0.0
        %3185 = vmatprep.subr.mxu0 0.0
        %3186 = vmatpush1.msra.mxu0 0.0
        %3187 = vmatprep.subr.mxu0 0.0
        %3188 = vmatpush1.msra.mxu0 0.0
        %3189 = vmatprep.subr.mxu0 0.0
        %3190 = vmatpush1.msra.mxu0 0.0
        %3191 = vmatprep.subr.mxu0 0.0
        %3192 = vmatpush1.msra.mxu0 0.0
        %3193 = vmatprep.subr.mxu0 0.0
        %3194 = vmatpush1.msra.mxu0 0.0
        %3195 = vmatprep.subr.mxu0 0.0
        %3196 = vmatpush1.msra.mxu0 0.0
        %3197 = vmatprep.subr.mxu0 0.0
        %3198 = vmatpush1.msra.mxu0 %v3161
        %3199 = vmatprep.subr.mxu0 0.0
        %3200 = vmatpush1.msra.mxu0 %v3160
        %3201 = vmatprep.subr.mxu0 0.0
        %3202 = vmatpush1.msra.mxu0 %v3159
        %3203 = vmatprep.subr.mxu0 0.0
        %3204 = vmatpush1.msra.mxu0 %v3158
        %3205 = vmatprep.subr.mxu0 0.0
        %3206 = vmatpush2.msra.mxu0 0.0
        %3207 = vmatprep.subr.mxu0 0.0
        %3208 = vmatpush2.msra.mxu0 0.0
        %3209 = vmatprep.subr.mxu0 0.0
        %3210 = vmatpush2.msra.mxu0 0.0
        %3211 = vmatprep.subr.mxu0 0.0
        %3212 = vmatpush2.msra.mxu0 0.0
        %3213 = vmatprep.subr.mxu0 0.0
        %3214 = vmatpush2.msra.mxu0 0.0
        %3215 = vmatprep.subr.mxu0 0.0
        %3216 = vmatpush2.msra.mxu0 0.0
        %3217 = vmatprep.subr.mxu0 0.0
        %3218 = vmatpush2.msra.mxu0 0.0
        %3219 = vmatprep.subr.mxu0 0.0
        %3220 = vmatpush2.msra.mxu0 0.0
        %3221 = vmatprep.subr.mxu0 0.0
        %3222 = vmatpush2.msra.mxu0 0.0
        %3223 = vmatprep.subr.mxu0 0.0
        %3224 = vmatpush2.msra.mxu0 0.0
        %3225 = vmatprep.subr.mxu0 0.0
        %3226 = vmatpush2.msra.mxu0 0.0
        %3227 = vmatprep.subr.mxu0 0.0
        %3228 = vmatpush2.msra.mxu0 0.0
        %3229 = vmatprep.subr.mxu0 0.0
        %3230 = vmatpush2.msra.mxu0 0.0
        %3231 = vmatprep.subr.mxu0 0.0
        %3232 = vmatpush2.msra.mxu0 0.0
        %3233 = vmatprep.subr.mxu0 0.0
        %3234 = vmatpush2.msra.mxu0 0.0
        %3235 = vmatprep.subr.mxu0 0.0
        %3236 = vmatpush2.msra.mxu0 0.0
        %3237 = vmatprep.mubr.f32.mxu0 0.0
        %3238 = vmatmul.mubr.f32.gmra.mxu0 %v3171
        %v3239 = vpop.f32.mrf.mxu0
        %v3240 = vadd.f32 %v3168, %v3239
        %v3241 = vpop.f32.mrf.mxu0
        %3242 = vdwg.mxu0
        %v3243 = vmul.f32 %v3240, 0.5
        %v3244 = vmul.f32 %v3240, 0.044715
        %v3245 = vmul.f32 %v3244, %v3240
        %v3246 = vmul.f32 %v3245, %v3240
        %v3247 = vadd.f32 %v3240, %v3246
        %v3248 = vmul.f32 %v3247, 0.7978846
        %v3249 = vtanh.pop %v3248
        %v3250 = vadd.f32 %v3249, 1.0
        %v3251 = vmul.f32 %v3243, %v3250
        %s3252 = scalar_lea.vmem %s13, 64
        %v3253 = vld [vmem:[%s3252] sm:$0xff]
        %v3254 = vld [vmem:[%s3252 + $0x8] sm:$0xff]
        %v3255 = vld [vmem:[%s3252 + $0x10] sm:$0xff]
        %v3256 = vld [vmem:[%s3252 + $0x18] sm:$0xff]
        %v3257 = vld [vmem:[%s3252 + $0x20] sm:$0xff]
        %v3258 = vld [vmem:[%s3252 + $0x28] sm:$0xff]
        %v3259 = vld [vmem:[%s3252 + $0x30] sm:$0xff]
        %v3260 = vld [vmem:[%s3252 + $0x38] sm:$0xff]
        %s3261 = scalar_lea.vmem %s14, 1
        %v3262 = vld [vmem:[%s3261] sm:$0x1]
        %v3264 = vlaneseq
        %v3265 = vshrl.u32 %v3264, 7
        %v3266 = vsub.s32 0, %v3265
        %v3267 = vrot.slane %v3262, %v3266
        %v3270 = vsel %vm1960, %v3251, 0
        %3272 = vmatprep.subr.mxu0 0.0
        %3273 = vmatpush1.msra.mxu0 0.0
        %3274 = vmatprep.subr.mxu0 0.0
        %3275 = vmatpush1.msra.mxu0 0.0
        %3276 = vmatprep.subr.mxu0 0.0
        %3277 = vmatpush1.msra.mxu0 0.0
        %3278 = vmatprep.subr.mxu0 0.0
        %3279 = vmatpush1.msra.mxu0 0.0
        %3280 = vmatprep.subr.mxu0 0.0
        %3281 = vmatpush1.msra.mxu0 0.0
        %3282 = vmatprep.subr.mxu0 0.0
        %3283 = vmatpush1.msra.mxu0 0.0
        %3284 = vmatprep.subr.mxu0 0.0
        %3285 = vmatpush1.msra.mxu0 0.0
        %3286 = vmatprep.subr.mxu0 0.0
        %3287 = vmatpush1.msra.mxu0 0.0
        %3288 = vmatprep.subr.mxu0 0.0
        %3289 = vmatpush1.msra.mxu0 %v3260
        %3290 = vmatprep.subr.mxu0 0.0
        %3291 = vmatpush1.msra.mxu0 %v3259
        %3292 = vmatprep.subr.mxu0 0.0
        %3293 = vmatpush1.msra.mxu0 %v3258
        %3294 = vmatprep.subr.mxu0 0.0
        %3295 = vmatpush1.msra.mxu0 %v3257
        %3296 = vmatprep.subr.mxu0 0.0
        %3297 = vmatpush1.msra.mxu0 %v3256
        %3298 = vmatprep.subr.mxu0 0.0
        %3299 = vmatpush1.msra.mxu0 %v3255
        %3300 = vmatprep.subr.mxu0 0.0
        %3301 = vmatpush1.msra.mxu0 %v3254
        %3302 = vmatprep.subr.mxu0 0.0
        %3303 = vmatpush1.msra.mxu0 %v3253
        %3304 = vmatprep.subr.mxu0 0.0
        %3305 = vmatpush2.msra.mxu0 0.0
        %3306 = vmatprep.subr.mxu0 0.0
        %3307 = vmatpush2.msra.mxu0 0.0
        %3308 = vmatprep.subr.mxu0 0.0
        %3309 = vmatpush2.msra.mxu0 0.0
        %3310 = vmatprep.subr.mxu0 0.0
        %3311 = vmatpush2.msra.mxu0 0.0
        %3312 = vmatprep.subr.mxu0 0.0
        %3313 = vmatpush2.msra.mxu0 0.0
        %3314 = vmatprep.subr.mxu0 0.0
        %3315 = vmatpush2.msra.mxu0 0.0
        %3316 = vmatprep.subr.mxu0 0.0
        %3317 = vmatpush2.msra.mxu0 0.0
        %3318 = vmatprep.subr.mxu0 0.0
        %3319 = vmatpush2.msra.mxu0 0.0
        %3320 = vmatprep.subr.mxu0 0.0
        %3321 = vmatpush2.msra.mxu0 0.0
        %3322 = vmatprep.subr.mxu0 0.0
        %3323 = vmatpush2.msra.mxu0 0.0
        %3324 = vmatprep.subr.mxu0 0.0
        %3325 = vmatpush2.msra.mxu0 0.0
        %3326 = vmatprep.subr.mxu0 0.0
        %3327 = vmatpush2.msra.mxu0 0.0
        %3328 = vmatprep.subr.mxu0 0.0
        %3329 = vmatpush2.msra.mxu0 0.0
        %3330 = vmatprep.subr.mxu0 0.0
        %3331 = vmatpush2.msra.mxu0 0.0
        %3332 = vmatprep.subr.mxu0 0.0
        %3333 = vmatpush2.msra.mxu0 0.0
        %3334 = vmatprep.subr.mxu0 0.0
        %3335 = vmatpush2.msra.mxu0 0.0
        %3336 = vmatprep.mubr.f32.mxu0 0.0
        %3337 = vmatmul.mubr.f32.gmra.mxu0 %v3270
        %v3338 = vpop.f32.mrf.mxu0
        %v3339 = vadd.f32 %v3267, %v3338
        %v3340 = vpop.f32.mrf.mxu0
        %3341 = vdwg.mxu0
        %v3342 = vadd.f32 %v3339, %v3156
        %s3343 = scalar_lea.vmem %s15, 1
        %v3344 = vld [vmem:[%s3343] sm:$0x1]
        %s3345 = scalar_lea.vmem %s16, 1
        %v3346 = vld [vmem:[%s3345] sm:$0x1]
        %v3347 = vsel %vm721, %v3342, 0.0
        %3348 = vadd.xlane.f32.xlu0 %v3347
        %v3349 = vpop.xlane.xlu0 %3348
        %v3350 = vmul.f32 %v3349, %v725
        %v3351 = vsub.f32 %v3342, %v3350
        %v3352 = vmul.f32 %v3351, %v3351
        %v3353 = vsel %vm721, %v3352, 0.0
        %3354 = vadd.xlane.f32.xlu0 %v3353
        %v3355 = vpop.xlane.xlu0 %3354
        %v3356 = vmul.f32 %v3355, %v725
        %v3357 = vadd.f32 %v3356, 1e-07
        %v3358 = vrsqrt.pop %v3357
        %v3359 = vmul.f32 %v3351, %v3358
        %v3361 = vlaneseq
        %v3362 = vshrl.u32 %v3361, 7
        %v3363 = vsub.s32 0, %v3362
        %v3364 = vrot.slane %v3344, %v3363
        %v3366 = vmul.f32 %v3359, %v3364
        %v3368 = vlaneseq
        %v3369 = vshrl.u32 %v3368, 7
        %v3370 = vsub.s32 0, %v3369
        %v3371 = vrot.slane %v3346, %v3370
        %v3373 = vadd.f32 %v3366, %v3371
        %v3374 = vld [vmem:[%s17] sm:$0xff]
        %v3375 = vld [vmem:[%s17 + $0x8] sm:$0xff]
        %v3376 = vld [vmem:[%s17 + $0x10] sm:$0xff]
        %v3377 = vld [vmem:[%s17 + $0x18] sm:$0xff]
        %v3378 = vld [vmem:[%s18] sm:$0x1]
        %v3380 = vsel %vm721, %v3373, 0
        %3382 = vmatprep.subr.mxu0 0.0
        %3383 = vmatpush1.msra.mxu0 0.0
        %3384 = vmatprep.subr.mxu0 0.0
        %3385 = vmatpush1.msra.mxu0 0.0
        %3386 = vmatprep.subr.mxu0 0.0
        %3387 = vmatpush1.msra.mxu0 0.0
        %3388 = vmatprep.subr.mxu0 0.0
        %3389 = vmatpush1.msra.mxu0 0.0
        %3390 = vmatprep.subr.mxu0 0.0
        %3391 = vmatpush1.msra.mxu0 0.0
        %3392 = vmatprep.subr.mxu0 0.0
        %3393 = vmatpush1.msra.mxu0 0.0
        %3394 = vmatprep.subr.mxu0 0.0
        %3395 = vmatpush1.msra.mxu0 0.0
        %3396 = vmatprep.subr.mxu0 0.0
        %3397 = vmatpush1.msra.mxu0 0.0
        %3398 = vmatprep.subr.mxu0 0.0
        %3399 = vmatpush1.msra.mxu0 0.0
        %3400 = vmatprep.subr.mxu0 0.0
        %3401 = vmatpush1.msra.mxu0 0.0
        %3402 = vmatprep.subr.mxu0 0.0
        %3403 = vmatpush1.msra.mxu0 0.0
        %3404 = vmatprep.subr.mxu0 0.0
        %3405 = vmatpush1.msra.mxu0 0.0
        %3406 = vmatprep.subr.mxu0 0.0
        %3407 = vmatpush1.msra.mxu0 %v3377
        %3408 = vmatprep.subr.mxu0 0.0
        %3409 = vmatpush1.msra.mxu0 %v3376
        %3410 = vmatprep.subr.mxu0 0.0
        %3411 = vmatpush1.msra.mxu0 %v3375
        %3412 = vmatprep.subr.mxu0 0.0
        %3413 = vmatpush1.msra.mxu0 %v3374
        %3414 = vmatprep.subr.mxu0 0.0
        %3415 = vmatpush2.msra.mxu0 0.0
        %3416 = vmatprep.subr.mxu0 0.0
        %3417 = vmatpush2.msra.mxu0 0.0
        %3418 = vmatprep.subr.mxu0 0.0
        %3419 = vmatpush2.msra.mxu0 0.0
        %3420 = vmatprep.subr.mxu0 0.0
        %3421 = vmatpush2.msra.mxu0 0.0
        %3422 = vmatprep.subr.mxu0 0.0
        %3423 = vmatpush2.msra.mxu0 0.0
        %3424 = vmatprep.subr.mxu0 0.0
        %3425 = vmatpush2.msra.mxu0 0.0
        %3426 = vmatprep.subr.mxu0 0.0
        %3427 = vmatpush2.msra.mxu0 0.0
        %3428 = vmatprep.subr.mxu0 0.0
        %3429 = vmatpush2.msra.mxu0 0.0
        %3430 = vmatprep.subr.mxu0 0.0
        %3431 = vmatpush2.msra.mxu0 0.0
        %3432 = vmatprep.subr.mxu0 0.0
        %3433 = vmatpush2.msra.mxu0 0.0
        %3434 = vmatprep.subr.mxu0 0.0
        %3435 = vmatpush2.msra.mxu0 0.0
        %3436 = vmatprep.subr.mxu0 0.0
        %3437 = vmatpush2.msra.mxu0 0.0
        %3438 = vmatprep.subr.mxu0 0.0
        %3439 = vmatpush2.msra.mxu0 0.0
        %3440 = vmatprep.subr.mxu0 0.0
        %3441 = vmatpush2.msra.mxu0 0.0
        %3442 = vmatprep.subr.mxu0 0.0
        %3443 = vmatpush2.msra.mxu0 0.0
        %3444 = vmatprep.subr.mxu0 0.0
        %3445 = vmatpush2.msra.mxu0 0.0
        %3446 = vmatprep.mubr.f32.mxu0 0.0
        %3447 = vmatmul.mubr.f32.gmra.mxu0 %v3380
        %v3448 = vpop.f32.mrf.mxu0
        %v3449 = vadd.f32 %v3378, %v3448
        %v3450 = vpop.f32.mrf.mxu0
        %3451 = vdwg.mxu0
        %v3452 = vmul.f32 %v3449, 0.5
        %v3453 = vmul.f32 %v3449, 0.044715
        %v3454 = vmul.f32 %v3453, %v3449
        %v3455 = vmul.f32 %v3454, %v3449
        %v3456 = vadd.f32 %v3449, %v3455
        %v3457 = vmul.f32 %v3456, 0.7978846
        %v3458 = vtanh.pop %v3457
        %v3459 = vadd.f32 %v3458, 1.0
        %v3460 = vmul.f32 %v3452, %v3459
        %v3461 = vld [vmem:[%s19] sm:$0xff]
        %v3462 = vld [vmem:[%s19 + $0x8] sm:$0xff]
        %v3463 = vld [vmem:[%s19 + $0x10] sm:$0xff]
        %v3464 = vld [vmem:[%s19 + $0x18] sm:$0xff]
        %v3465 = vld [vmem:[%s20] sm:$0x1]
        %v3467 = vsel %vm721, %v3460, 0
        %3469 = vmatprep.subr.mxu0 0.0
        %3470 = vmatpush1.msra.mxu0 0.0
        %3471 = vmatprep.subr.mxu0 0.0
        %3472 = vmatpush1.msra.mxu0 0.0
        %3473 = vmatprep.subr.mxu0 0.0
        %3474 = vmatpush1.msra.mxu0 0.0
        %3475 = vmatprep.subr.mxu0 0.0
        %3476 = vmatpush1.msra.mxu0 0.0
        %3477 = vmatprep.subr.mxu0 0.0
        %3478 = vmatpush1.msra.mxu0 0.0
        %3479 = vmatprep.subr.mxu0 0.0
        %3480 = vmatpush1.msra.mxu0 0.0
        %3481 = vmatprep.subr.mxu0 0.0
        %3482 = vmatpush1.msra.mxu0 0.0
        %3483 = vmatprep.subr.mxu0 0.0
        %3484 = vmatpush1.msra.mxu0 0.0
        %3485 = vmatprep.subr.mxu0 0.0
        %3486 = vmatpush1.msra.mxu0 0.0
        %3487 = vmatprep.subr.mxu0 0.0
        %3488 = vmatpush1.msra.mxu0 0.0
        %3489 = vmatprep.subr.mxu0 0.0
        %3490 = vmatpush1.msra.mxu0 0.0
        %3491 = vmatprep.subr.mxu0 0.0
        %3492 = vmatpush1.msra.mxu0 0.0
        %3493 = vmatprep.subr.mxu0 0.0
        %3494 = vmatpush1.msra.mxu0 %v3464
        %3495 = vmatprep.subr.mxu0 0.0
        %3496 = vmatpush1.msra.mxu0 %v3463
        %3497 = vmatprep.subr.mxu0 0.0
        %3498 = vmatpush1.msra.mxu0 %v3462
        %3499 = vmatprep.subr.mxu0 0.0
        %3500 = vmatpush1.msra.mxu0 %v3461
        %3501 = vmatprep.subr.mxu0 0.0
        %3502 = vmatpush2.msra.mxu0 0.0
        %3503 = vmatprep.subr.mxu0 0.0
        %3504 = vmatpush2.msra.mxu0 0.0
        %3505 = vmatprep.subr.mxu0 0.0
        %3506 = vmatpush2.msra.mxu0 0.0
        %3507 = vmatprep.subr.mxu0 0.0
        %3508 = vmatpush2.msra.mxu0 0.0
        %3509 = vmatprep.subr.mxu0 0.0
        %3510 = vmatpush2.msra.mxu0 0.0
        %3511 = vmatprep.subr.mxu0 0.0
        %3512 = vmatpush2.msra.mxu0 0.0
        %3513 = vmatprep.subr.mxu0 0.0
        %3514 = vmatpush2.msra.mxu0 0.0
        %3515 = vmatprep.subr.mxu0 0.0
        %3516 = vmatpush2.msra.mxu0 0.0
        %3517 = vmatprep.subr.mxu0 0.0
        %3518 = vmatpush2.msra.mxu0 0.0
        %3519 = vmatprep.subr.mxu0 0.0
        %3520 = vmatpush2.msra.mxu0 0.0
        %3521 = vmatprep.subr.mxu0 0.0
        %3522 = vmatpush2.msra.mxu0 0.0
        %3523 = vmatprep.subr.mxu0 0.0
        %3524 = vmatpush2.msra.mxu0 0.0
        %3525 = vmatprep.subr.mxu0 0.0
        %3526 = vmatpush2.msra.mxu0 0.0
        %3527 = vmatprep.subr.mxu0 0.0
        %3528 = vmatpush2.msra.mxu0 0.0
        %3529 = vmatprep.subr.mxu0 0.0
        %3530 = vmatpush2.msra.mxu0 0.0
        %3531 = vmatprep.subr.mxu0 0.0
        %3532 = vmatpush2.msra.mxu0 0.0
        %3533 = vmatprep.mubr.f32.mxu0 0.0
        %3534 = vmatmul.mubr.f32.gmra.mxu0 %v3467
        %v3535 = vpop.f32.mrf.mxu0
        %v3536 = vadd.f32 %v3465, %v3535
        %v3537 = vpop.f32.mrf.mxu0
        %3538 = vdwg.mxu0
        %vm3539 = vcmask 16384
        %3540 = vst.msk [vmem:[%s717] sm:$0x1] %vm3539, %v3536
        %v3541 = vsub.f32 0.0, %v3536
        %v3542 = vmul.f32 %v3541, 1.442695
        %v3543 = vpow.pop %v3542
        %v3544 = vadd.f32 %v3543, 1.0
        %v3545 = vrcp.pop %v3544
        %v3546 = vmul.f32 1.0, %v3545
        %3547 = vst.msk [vmem:[%s703] sm:$0x1] %vm3539, %v3546
        %p3548 = scmp.lt.s32.totalorder %s37, 1
        %s3549 = scalar_select %p3548, %s37, 1
        %s3550 = scalar_lea.vmem %s21, %s3549
        %s3551 = sand.u32 %s527, 1
        %s3552 = scalar_lea.sflag [#allocation3], %s3551
        %s3553 = sand.u32 %s527, 1
        %s3554 = scalar_lea.vmem [#allocation2], %s3553
        // Predicated region
        $region105: #{forward.1} parent=103 // pred_check
          %p3555 = pneg %p511
        $region106: #{forward.1} parent=103 // pred_check_branch
          %3557 = sbr.rel (%p3555) target = $region108
        $region107: #{forward.1} parent=103 // pred_region
          _
        $region108: #{forward.1} parent=103 // pred_fallthru
          _
        // Predicated region
        $region109: #{forward.1} parent=103 // pred_check
          %p3558 = pneg %p537
        $region110: #{forward.1} parent=103 // pred_check_branch
          %3560 = sbr.rel (%p3558) target = $region112
        $region111: #{forward.1} parent=103 // pred_region
          %s3562 = ssub.s32 16, 16
          %3563 = vsyncadd %s3552, %s3562
          %s3564 = smul.addr %s37, 16
          %s3565 = scalar_lea.hbm %s22, %s3564
          %s3567 = sshll.u32 %s3554, 4
          %s3568 = int_to_ptr.vmem [resolvable:$true] %s3567
          %3570 = dma.vmem_to_hbm [thread:$0]  %s3568, 16, %s3565, %s3552
        $region112: #{forward.1} parent=103 // pred_fallthru
          _
      $region104: #{forward.1} parent=5 // pred_fallthru
        _
      %p3571 = scmp.le.s32.totalorder 2, %s32
      // Predicated region
      $region113: #{forward.1} parent=5 // pred_check
        %p3572 = pneg %p3571
      $region114: #{forward.1} parent=5 // pred_check_branch
        %3574 = sbr.rel (%p3572) target = $region116
      $region115: #{forward.1} parent=5 // pred_region
        %s3575 = ssub.s32 %s32, 2
        // Predicated region
        $region117: #{forward.1} parent=115 // pred_check
          %p3576 = pneg %p517
        $region118: #{forward.1} parent=115 // pred_check_branch
          %3578 = sbr.rel (%p3576) target = $region120
        $region119: #{forward.1} parent=115 // pred_region
          %p3579 = scmp.lt.s32.totalorder %s38, 1
          %s3580 = scalar_select %p3579, %s38, 1
          %s3581 = scalar_lea.vmem %s21, %s3580
        $region120: #{forward.1} parent=115 // pred_fallthru
          _
        // Predicated region
        $region121: #{forward.1} parent=115 // pred_check
          %p3582 = pneg %p543
        $region122: #{forward.1} parent=115 // pred_check_branch
          %3584 = sbr.rel (%p3582) target = $region124
        $region123: #{forward.1} parent=115 // pred_region
          %s3585 = sand.u32 %s528, 1
          %s3586 = scalar_lea.sflag [#allocation3], %s3585
          %s3587 = sand.u32 %s528, 1
          %s3588 = scalar_lea.vmem [#allocation2], %s3587
          %3589 = dma.done %s3586, 16
        $region124: #{forward.1} parent=115 // pred_fallthru
          _
      $region116: #{forward.1} parent=5 // pred_fallthru
        _
    $region6: #{forward.1} parent=1 // loop_footer
      %s36 = sadd.s32 1, %s32
    $region7: #{forward.1} parent=1 // loop_footer_branch
      %31 = sbr.rel target = $region3
    $region8: #{forward.1} parent=1 // loop_exit
      _
    %3590 = vsyncpa [#allocation3], 1
    %s3591 = scalar_lea.sflag [#allocation3], 1
    %3592 = vsyncpa %s3591, 1

</llo_original>
